<compile_context>
chip_gen: v7x
topology: tpu7x:2x2x1
jax: 0.10.0
libtpu: 0.0.40
codegen_flags: <defaults>
</compile_context>

<pallas_src>
import jax
import jax.numpy as jnp
from jax.experimental import pallas as pl
from jax.experimental.pallas import tpu as pltpu

# ----------------------------- config (small) --------------------------------
B, S, H = 2, 8, 32          # batch, seq, hidden
BS = B * S
L, NH = 2, 2                # transformer layers, attention heads
HD = H // NH                # head dim
FF = 64                     # intermediate (FFN) size
VOCAB, TYPE_VOCAB, MAX_POS = 50, 2, 16
TYPE_OFFSET = 64            # row offset of the token-type table inside the fused embedding table
EMB_ROWS = 128              # fused (tok|typ) embedding table rows (lane-dense one-hot contraction)
QKV_PAD = 128               # fused q|k|v projection output lanes (3*H = 96 padded to 128)
NUM_INTENT, NUM_SLOT = 5, 7
CLS_PAD = 128               # lane-dense classifier output width
INTENT_ROWS = 8             # intent-logits output padded to a full (8,128) sublane tile
LN_EPS = 1e-12
NEG_INF = -1e9
SCALE = 1.0 / (HD ** 0.5)


# ----------------------------- in-kernel helpers ------------------------------
def _layer_norm(x, g, b):
    mu = jnp.mean(x, axis=-1, keepdims=True)
    var = jnp.mean((x - mu) ** 2, axis=-1, keepdims=True)
    return (x - mu) * jax.lax.rsqrt(var + LN_EPS) * g + b


def _gelu(x):
    c = 0.7978845608028654  # sqrt(2/pi)
    return 0.5 * x * (1.0 + jnp.tanh(c * (x + 0.044715 * x * x * x)))


def _softmax_lastdim(x):
    m = jnp.max(x, axis=-1, keepdims=True)
    e = jnp.exp(x - m)
    return e * pl.reciprocal(jnp.sum(e, axis=-1, keepdims=True), approx=True)


# ----------------------------- fused kernel ----------------------------------
def parser_model_kernel(
    ids_ref, typ_ref, mask2d_ref, maskflat_ref, intent_lbl_ref, slot_lbl_ref,
    emb_tab_ref, pos_emb_ref, emb_g_ref, emb_b_ref,
    wqkv_ref, bqkv_ref, wo_ref, bo_ref,
    ln1_g_ref, ln1_b_ref, w1_ref, b1_ref, w2_ref, b2_ref, ln2_g_ref, ln2_b_ref,
    pool_w_ref, pool_b_ref, iw_ref, ib_ref, sw_ref, sb_ref,
    intent_logits_ref, slot_logits_ref, intent_loss_ref, slot_loss_ref,
):
    # ---- fused (token | token-type) embedding lookup: ONE bf16 one-hot MXU matmul ----
    ids = ids_ref[...]                                             # (BS,1) int32
    typ = typ_ref[...]                                             # (BS,1) int32
    lane_emb = jax.lax.broadcasted_iota(jnp.int32, (BS, EMB_ROWS), 1)
    onehot = jnp.where((lane_emb == ids) | (lane_emb == typ + TYPE_OFFSET),
                       1.0, 0.0).astype(jnp.bfloat16)              # (BS,128), two ones per row
    emb = jnp.dot(onehot, emb_tab_ref[...],
                  preferred_element_type=jnp.float32)              # (BS,H) = tok[id] + typ[t]
    # position embeddings: broadcast add on the (B,S,H) view (no concatenate copy)
    emb = emb.reshape(B, S, H) + pos_emb_ref[0:S, :][None, :, :]
    x2 = _layer_norm(emb.reshape(BS, H), emb_g_ref[...], emb_b_ref[...])

    # ---- additive attention bias, hoisted out of the layer loop, head-batched (NH*B,S,S) ----
    neg = (1.0 - mask2d_ref[...]) * NEG_INF                        # (B,S)
    attn_bias = jnp.broadcast_to(neg[:, None, :], (B, S, S))       # (B,S,S)
    attn_bias = jnp.concatenate([attn_bias] * NH, axis=0)          # (NH*B,S,S), batch = h*B+b

    for l in range(L):  # L is small & static
        xb = x2.astype(jnp.bfloat16)

        # ---- fused Q|K|V projection: one lane-dense (H,128) bf16 dot per layer ----
        qkv = jnp.dot(xb, wqkv_ref[l], preferred_element_type=jnp.float32) + bqkv_ref[l]

        def heads(base):
            # (NH*B, S, HD) head-batched layout; batch index = h*B + b
            return jnp.concatenate(
                [qkv[:, base + h * HD: base + (h + 1) * HD].reshape(B, S, HD)
                 for h in range(NH)], axis=0)

        q_hb = heads(0).astype(jnp.bfloat16)
        k_hb = heads(H).astype(jnp.bfloat16)
        v_hb = heads(2 * H).astype(jnp.bfloat16)

        # ---- all heads at once: one batched score matmul, one softmax, one batched ctx matmul ----
        scores = jnp.einsum('bqd,bkd->bqk', q_hb, k_hb,
                            preferred_element_type=jnp.float32) * SCALE
        probs = _softmax_lastdim(scores + attn_bias)               # f32, (NH*B,S,S)
        ctx = jnp.einsum('bqk,bkd->bqd', probs.astype(jnp.bfloat16), v_hb,
                         preferred_element_type=jnp.float32)       # (NH*B,S,HD)

        # lane-concat heads -> (BS,H), then a single output-projection dot
        ctx_cat = jnp.concatenate([ctx[h * B:(h + 1) * B] for h in range(NH)],
                                  axis=-1)                         # (B,S,H)
        attn = jnp.dot(ctx_cat.reshape(BS, H).astype(jnp.bfloat16), wo_ref[l],
                       preferred_element_type=jnp.float32) + bo_ref[l]
        x2 = _layer_norm(x2 + attn, ln1_g_ref[l], ln1_b_ref[l])

        # ---- feed-forward ----
        h1 = _gelu(jnp.dot(x2.astype(jnp.bfloat16), w1_ref[l],
                           preferred_element_type=jnp.float32) + b1_ref[l])
        h2 = jnp.dot(h1.astype(jnp.bfloat16), w2_ref[l],
                     preferred_element_type=jnp.float32) + b2_ref[l]
        x2 = _layer_norm(x2 + h2, ln2_g_ref[l], ln2_b_ref[l])

    # ---- pooler: tanh(W * hidden[:, 0] + b) ----
    cls = x2.reshape(B, S, H)[:, 0, :]                             # (B,H)
    pooled = jnp.tanh(jnp.dot(cls.astype(jnp.bfloat16), pool_w_ref[...],
                              preferred_element_type=jnp.float32) + pool_b_ref[...])

    # ---- classifiers (dropout == identity); lane-dense padded to CLS_PAD ----
    intent_logits = jnp.dot(pooled.astype(jnp.bfloat16), iw_ref[...],
                            preferred_element_type=jnp.float32) + ib_ref[...]   # (B,128)
    slot_logits = jnp.dot(x2.astype(jnp.bfloat16), sw_ref[...],
                          preferred_element_type=jnp.float32) + sb_ref[...]     # (BS,128)
    # full (8,128) unmasked-tile store for intent logits (rows >= B are padding)
    intent_logits_ref[...] = jnp.concatenate(
        [intent_logits, jnp.zeros((INTENT_ROWS - B, CLS_PAD), jnp.float32)], axis=0)
    slot_logits_ref[...] = slot_logits

    # ---- cross-entropy losses; single shared lane iota for both blocks ----
    lane = jax.lax.broadcasted_iota(jnp.int32, (BS, CLS_PAD), 1)
    lane_b = lane[0:B]                                             # (B,128)

    # intent CrossEntropyLoss (mean over batch)
    logit_i = jnp.where(lane_b < NUM_INTENT, intent_logits, NEG_INF)
    m_i = jnp.max(logit_i, axis=-1, keepdims=True)
    lse_i = jnp.log(jnp.sum(jnp.exp(logit_i - m_i), axis=-1, keepdims=True)) + m_i
    picked_i = jnp.sum(jnp.where(lane_b == intent_lbl_ref[...], intent_logits, 0.0),
                       axis=-1, keepdims=True)                                  # (B,1)
    intent_loss_ref[0] = jnp.sum(lse_i - picked_i) * (1.0 / B)

    # slot CrossEntropyLoss over active tokens (attention_mask == 1)
    logit_s = jnp.where(lane < NUM_SLOT, slot_logits, NEG_INF)
    m_s = jnp.max(logit_s, axis=-1, keepdims=True)
    lse_s = jnp.log(jnp.sum(jnp.exp(logit_s - m_s), axis=-1, keepdims=True)) + m_s
    picked_s = jnp.sum(jnp.where(lane == slot_lbl_ref[...], slot_logits, 0.0),
                       axis=-1, keepdims=True)                                  # (BS,1)
    mflat = maskflat_ref[...]                                                   # (BS,1)
    # matches PyTorch: an all-masked batch would produce inf/NaN (not hit here)
    slot_loss_ref[0] = jnp.sum((lse_s - picked_s) * mflat) / jnp.sum(mflat)


# ----------------------------- wrapper -----------------------------------------
@jax.jit
def parser_model_forward(params, input_ids, attention_mask, token_type_ids,
                         intent_label, slot_labels):
    p = params
    maskf = attention_mask.astype(jnp.float32)                     # (B,S)
    args = (
        input_ids.reshape(BS, 1).astype(jnp.int32),
        token_type_ids.reshape(BS, 1).astype(jnp.int32),
        maskf,
        maskf.reshape(BS, 1),
        intent_label.reshape(B, 1).astype(jnp.int32),
        slot_labels.reshape(BS, 1).astype(jnp.int32),
        p["emb_tab"], p["pos_emb"], p["emb_g"], p["emb_b"],
        p["w_qkv"], p["b_qkv"], p["wo"], p["bo"],
        p["ln1_g"], p["ln1_b"], p["w1"], p["b1"], p["w2"], p["b2"],
        p["ln2_g"], p["ln2_b"], p["pool_w"], p["pool_b"],
        p["intent_w"], p["intent_b"], p["slot_w"], p["slot_b"],
    )

    flops = 2 * (BS * EMB_ROWS * H
                 + L * (BS * H * QKV_PAD + 2 * NH * B * S * S * HD
                        + BS * H * H + 2 * BS * H * FF)
                 + B * H * H + B * H * CLS_PAD + BS * H * CLS_PAD)
    transcendentals = L * (NH * B * S * S + BS * FF) + B * H + (B + BS) * CLS_PAD
    bytes_accessed = (sum(a.size * a.dtype.itemsize for a in args)
                      + (INTENT_ROWS + BS) * CLS_PAD * 4 + 8)

    intent_pad, slot_pad, intent_loss, slot_loss = pl.pallas_call(
        parser_model_kernel,
        out_shape=(
            jax.ShapeDtypeStruct((INTENT_ROWS, CLS_PAD), jnp.float32),  # full-tile intent logits
            jax.ShapeDtypeStruct((BS, CLS_PAD), jnp.float32),           # lane-dense slot logits
            jax.ShapeDtypeStruct((1,), jnp.float32),                    # intent loss (SMEM)
            jax.ShapeDtypeStruct((1,), jnp.float32),                    # slot loss (SMEM)
        ),
        out_specs=(
            pl.BlockSpec(memory_space=pltpu.MemorySpace.VMEM),
            pl.BlockSpec(memory_space=pltpu.MemorySpace.VMEM),
            pl.BlockSpec(memory_space=pltpu.MemorySpace.SMEM),
            pl.BlockSpec(memory_space=pltpu.MemorySpace.SMEM),
        ),
        cost_estimate=pl.CostEstimate(flops=flops, transcendentals=transcendentals,
                                      bytes_accessed=bytes_accessed),
        # NOTE(v7x): physical VMEM there is 64 MiB (32 MiB default scoped) vs 128 MiB on v5e/v6e;
        # this 4 MiB budget is ample at the current sizes but must be re-derived before scaling
        # B / S / H / vocab.
        compiler_params=pltpu.CompilerParams(vmem_limit_bytes=4 * 1024 * 1024),
    )(*args)

    intent_logits = intent_pad[:B, :NUM_INTENT]
    slot_logits = slot_pad[:, :NUM_SLOT].reshape(B, S, NUM_SLOT)
    # same return convention as the PyTorch module:
    # (intent_logits, slot_logits, slot_loss, intent_loss)
    return intent_logits, slot_logits, slot_loss[0], intent_loss[0]


# ----------------------------- deterministic params ---------------------------
def init_params(key):
    def nrm(k, shape, scale=0.02):
        return (scale * jax.random.normal(k, shape)).astype(jnp.float32)

    ks = jax.random.split(key, 12)
    return {
        "tok_emb": nrm(ks[0], (VOCAB, H)),
        "pos_emb": nrm(ks[1], (MAX_POS, H)),
        "typ_emb": nrm(ks[2], (TYPE_VOCAB, H)),
        "emb_g": jnp.ones((1, H), jnp.float32),
        "emb_b": jnp.zeros((1, H), jnp.float32),
        "wq": nrm(ks[3], (L, H, H)), "bq": jnp.zeros((L, 1, H), jnp.float32),
        "wk": nrm(ks[4], (L, H, H)), "bk": jnp.zeros((L, 1, H), jnp.float32),
        "wv": nrm(ks[5], (L, H, H)), "bv": jnp.zeros((L, 1, H), jnp.float32),
        "wo": nrm(ks[6], (L, H, H)), "bo": jnp.zeros((L, 1, H), jnp.float32),
        "ln1_g": jnp.ones((L, 1, H), jnp.float32),
        "ln1_b": jnp.zeros((L, 1, H), jnp.float32),
        "w1": nrm(ks[7], (L, H, FF)), "b1": jnp.zeros((L, 1, FF), jnp.float32),
        "w2": nrm(ks[8], (L, FF, H)), "b2": jnp.zeros((L, 1, H), jnp.float32),
        "ln2_g": jnp.ones((L, 1, H), jnp.float32),
        "ln2_b": jnp.zeros((L, 1, H), jnp.float32),
        "pool_w": nrm(ks[9], (H, H)),
        "pool_b": jnp.zeros((1, H), jnp.float32),
        "intent_w": nrm(ks[10], (H, NUM_INTENT)),
        "intent_b": jnp.zeros((1, NUM_INTENT), jnp.float32),
        "slot_w": nrm(ks[11], (H, NUM_SLOT)),
        "slot_b": jnp.zeros((1, NUM_SLOT), jnp.float32),
    }


def prepare_params(p):
    """Fuse/pad tables + weights into the kernel layout and cast MXU operands to bf16."""
    def pad_cols(a, n):
        return jnp.zeros(a.shape[:-1] + (n,), a.dtype).at[..., :a.shape[-1]].set(a)

    q = {}
    # fused (token | token-type) embedding table: tok rows [0,VOCAB), typ rows at TYPE_OFFSET
    tab = jnp.zeros((EMB_ROWS, H), jnp.float32)
    tab = tab.at[:VOCAB, :].set(p["tok_emb"])
    tab = tab.at[TYPE_OFFSET:TYPE_OFFSET + TYPE_VOCAB, :].set(p["typ_emb"])
    q["emb_tab"] = tab.astype(jnp.bfloat16)
    q["pos_emb"] = p["pos_emb"]
    q["emb_g"], q["emb_b"] = p["emb_g"], p["emb_b"]

    # fused Q|K|V projection, padded to 128 output lanes: columns [q(0:32) | k(32:64) | v(64:96)]
    wqkv = jnp.concatenate([p["wq"], p["wk"], p["wv"]], axis=-1)     # (L,H,3H)
    bqkv = jnp.concatenate([p["bq"], p["bk"], p["bv"]], axis=-1)     # (L,1,3H)
    q["w_qkv"] = pad_cols(wqkv, QKV_PAD).astype(jnp.bfloat16)
    q["b_qkv"] = pad_cols(bqkv, QKV_PAD)

    q["wo"] = p["wo"].astype(jnp.bfloat16); q["bo"] = p["bo"]
    q["ln1_g"], q["ln1_b"] = p["ln1_g"], p["ln1_b"]
    q["w1"] = p["w1"].astype(jnp.bfloat16); q["b1"] = p["b1"]
    q["w2"] = p["w2"].astype(jnp.bfloat16); q["b2"] = p["b2"]
    q["ln2_g"], q["ln2_b"] = p["ln2_g"], p["ln2_b"]
    q["pool_w"] = p["pool_w"].astype(jnp.bfloat16); q["pool_b"] = p["pool_b"]
    q["intent_w"] = pad_cols(p["intent_w"], CLS_PAD).astype(jnp.bfloat16)
    q["intent_b"] = pad_cols(p["intent_b"], CLS_PAD)
    q["slot_w"] = pad_cols(p["slot_w"], CLS_PAD).astype(jnp.bfloat16)
    q["slot_b"] = pad_cols(p["slot_b"], CLS_PAD)
    return q


# ----------------------------- main --------------------------------------------
if __name__ == "__main__":
    key = jax.random.PRNGKey(0)
    kp, k1, k2, k3 = jax.random.split(key, 4)

    params = prepare_params(init_params(kp))

    input_ids = jax.random.randint(k1, (B, S), 0, VOCAB, dtype=jnp.int32)
    token_type_ids = jnp.zeros((B, S), jnp.int32)
    # mask out the last two tokens of the second example to exercise active_loss
    attention_mask = jnp.ones((B, S), jnp.int32).at[1, -2:].set(0)
    intent_label = jax.random.randint(k2, (B,), 0, NUM_INTENT, dtype=jnp.int32)
    slot_labels = jax.random.randint(k3, (B, S), 0, NUM_SLOT, dtype=jnp.int32)

    intent_logits, slot_logits, slot_loss, intent_loss = parser_model_forward(
        params, input_ids, attention_mask, token_type_ids, intent_label, slot_labels)

    jax.block_until_ready((intent_logits, slot_logits, slot_loss, intent_loss))

    assert intent_logits.shape == (B, NUM_INTENT)
    assert slot_logits.shape == (B, S, NUM_SLOT)
    assert slot_loss.shape == () and intent_loss.shape == ()
    assert bool(jnp.isfinite(slot_loss)) and bool(jnp.isfinite(intent_loss))

    print("KERNEL_OK")
</pallas_src>

<mosaic_0001>
module attributes {stable_mosaic.version = 11 : i64} {
  func.func @parser_model_kernel(%arg0: memref<16x1xi32, #tpu.memory_space<vmem>>, %arg1: memref<16x1xi32, #tpu.memory_space<vmem>>, %arg2: memref<2x8xf32, #tpu.memory_space<vmem>>, %arg3: memref<16x1xf32, #tpu.memory_space<vmem>>, %arg4: memref<2x1xi32, #tpu.memory_space<vmem>>, %arg5: memref<16x1xi32, #tpu.memory_space<vmem>>, %arg6: memref<128x32xbf16, #tpu.memory_space<vmem>>, %arg7: memref<16x32xf32, #tpu.memory_space<vmem>>, %arg8: memref<1x32xf32, #tpu.memory_space<vmem>>, %arg9: memref<1x32xf32, #tpu.memory_space<vmem>>, %arg10: memref<2x32x128xbf16, #tpu.memory_space<vmem>>, %arg11: memref<2x1x128xf32, #tpu.memory_space<vmem>>, %arg12: memref<2x32x32xbf16, #tpu.memory_space<vmem>>, %arg13: memref<2x1x32xf32, #tpu.memory_space<vmem>>, %arg14: memref<2x1x32xf32, #tpu.memory_space<vmem>>, %arg15: memref<2x1x32xf32, #tpu.memory_space<vmem>>, %arg16: memref<2x32x64xbf16, #tpu.memory_space<vmem>>, %arg17: memref<2x1x64xf32, #tpu.memory_space<vmem>>, %arg18: memref<2x64x32xbf16, #tpu.memory_space<vmem>>, %arg19: memref<2x1x32xf32, #tpu.memory_space<vmem>>, %arg20: memref<2x1x32xf32, #tpu.memory_space<vmem>>, %arg21: memref<2x1x32xf32, #tpu.memory_space<vmem>>, %arg22: memref<32x32xbf16, #tpu.memory_space<vmem>>, %arg23: memref<1x32xf32, #tpu.memory_space<vmem>>, %arg24: memref<32x128xbf16, #tpu.memory_space<vmem>>, %arg25: memref<1x128xf32, #tpu.memory_space<vmem>>, %arg26: memref<32x128xbf16, #tpu.memory_space<vmem>>, %arg27: memref<1x128xf32, #tpu.memory_space<vmem>>, %arg28: memref<8x128xf32, #tpu.memory_space<vmem>>, %arg29: memref<16x128xf32, #tpu.memory_space<vmem>>, %arg30: memref<1xf32, #tpu.memory_space<smem>>, %arg31: memref<1xf32, #tpu.memory_space<smem>>) attributes {dimension_semantics = [], scalar_prefetch = 0 : i64, scratch_operands = 0 : i64, tpu.core_type = #tpu.core_type<tc>} {
    %c0 = arith.constant 0 : index
    %c0_0 = arith.constant 0 : index
    %0 = vector.load %arg0[%c0, %c0_0] : memref<16x1xi32, #tpu.memory_space<vmem>>, vector<16x1xi32>
    %c0_1 = arith.constant 0 : index
    %c0_2 = arith.constant 0 : index
    %1 = vector.load %arg1[%c0_1, %c0_2] : memref<16x1xi32, #tpu.memory_space<vmem>>, vector<16x1xi32>
    %2 = tpu.iota {dimensions = array<i32: 1>} : vector<16x128xi32>
    %3 = vector.broadcast %0 : vector<16x1xi32> to vector<16x128xi32>
    %4 = arith.cmpi eq, %2, %3 : vector<16x128xi32>
    %c64_i32 = arith.constant 64 : i32
    %5 = vector.broadcast %c64_i32 : i32 to vector<16x1xi32>
    %6 = arith.addi %1, %5 : vector<16x1xi32>
    %7 = vector.broadcast %6 : vector<16x1xi32> to vector<16x128xi32>
    %8 = arith.cmpi eq, %2, %7 : vector<16x128xi32>
    %9 = arith.ori %4, %8 : vector<16x128xi1>
    %cst = arith.constant 1.000000e+00 : f32
    %cst_3 = arith.constant 0.000000e+00 : f32
    %10 = vector.broadcast %cst : f32 to vector<16x128xf32>
    %11 = vector.broadcast %cst_3 : f32 to vector<16x128xf32>
    %12 = arith.select %9, %10, %11 : vector<16x128xi1>, vector<16x128xf32>
    %13 = arith.truncf %12 : vector<16x128xf32> to vector<16x128xbf16>
    %c0_4 = arith.constant 0 : index
    %c0_5 = arith.constant 0 : index
    %14 = vector.load %arg6[%c0_4, %c0_5] : memref<128x32xbf16, #tpu.memory_space<vmem>>, vector<128x32xbf16>
    %cst_6 = arith.constant dense<0.000000e+00> : vector<16x32xf32>
    %15 = tpu.matmul %13, %14, %cst_6 {dimension_numbers = #tpu.dot_dimension_numbers<[1], [0], [0], [1], [0, 0, 1, 1], [], []>} : vector<16x128xbf16>, vector<128x32xbf16>, vector<16x32xf32> -> vector<16x32xf32>
    %16 = vector.shape_cast %15 : vector<16x32xf32> to vector<2x8x32xf32>
    %c0_7 = arith.constant 0 : index
    %c0_8 = arith.constant 0 : index
    %17 = vector.load %arg7[%c0_7, %c0_8] : memref<16x32xf32, #tpu.memory_space<vmem>>, vector<8x32xf32>
    %18 = vector.shape_cast %17 : vector<8x32xf32> to vector<1x8x32xf32>
    %19 = vector.broadcast %18 : vector<1x8x32xf32> to vector<2x8x32xf32>
    %20 = arith.addf %16, %19 : vector<2x8x32xf32>
    %21 = vector.shape_cast %20 : vector<2x8x32xf32> to vector<16x32xf32>
    %c0_9 = arith.constant 0 : index
    %c0_10 = arith.constant 0 : index
    %22 = vector.load %arg8[%c0_9, %c0_10] : memref<1x32xf32, #tpu.memory_space<vmem>>, vector<1x32xf32>
    %c0_11 = arith.constant 0 : index
    %c0_12 = arith.constant 0 : index
    %23 = vector.load %arg9[%c0_11, %c0_12] : memref<1x32xf32, #tpu.memory_space<vmem>>, vector<1x32xf32>
    %cst_13 = arith.constant dense<0.000000e+00> : vector<16xf32>
    %24 = vector.multi_reduction <add>, %21, %cst_13 [1] : vector<16x32xf32> to vector<16xf32>
    %25 = vector.shape_cast %24 : vector<16xf32> to vector<16x1xf32>
    %cst_14 = arith.constant 3.200000e+01 : f32
    %26 = vector.broadcast %cst_14 : f32 to vector<16x1xf32>
    %27 = arith.divf %25, %26 : vector<16x1xf32>
    %28 = vector.broadcast %27 : vector<16x1xf32> to vector<16x32xf32>
    %29 = arith.subf %21, %28 : vector<16x32xf32>
    %30 = arith.mulf %29, %29 : vector<16x32xf32>
    %cst_15 = arith.constant dense<0.000000e+00> : vector<16xf32>
    %31 = vector.multi_reduction <add>, %30, %cst_15 [1] : vector<16x32xf32> to vector<16xf32>
    %32 = vector.shape_cast %31 : vector<16xf32> to vector<16x1xf32>
    %cst_16 = arith.constant 3.200000e+01 : f32
    %33 = vector.broadcast %cst_16 : f32 to vector<16x1xf32>
    %34 = arith.divf %32, %33 : vector<16x1xf32>
    %35 = vector.broadcast %27 : vector<16x1xf32> to vector<16x32xf32>
    %36 = arith.subf %21, %35 : vector<16x32xf32>
    %cst_17 = arith.constant 9.99999996E-13 : f32
    %37 = vector.broadcast %cst_17 : f32 to vector<16x1xf32>
    %38 = arith.addf %34, %37 : vector<16x1xf32>
    %39 = math.rsqrt %38 : vector<16x1xf32>
    %40 = vector.broadcast %39 : vector<16x1xf32> to vector<16x32xf32>
    %41 = arith.mulf %36, %40 : vector<16x32xf32>
    %42 = vector.broadcast %22 : vector<1x32xf32> to vector<16x32xf32>
    %43 = arith.mulf %41, %42 : vector<16x32xf32>
    %44 = vector.broadcast %23 : vector<1x32xf32> to vector<16x32xf32>
    %45 = arith.addf %43, %44 : vector<16x32xf32>
    %c0_18 = arith.constant 0 : index
    %c0_19 = arith.constant 0 : index
    %46 = vector.load %arg2[%c0_18, %c0_19] : memref<2x8xf32, #tpu.memory_space<vmem>>, vector<2x8xf32>
    %cst_20 = arith.constant 1.000000e+00 : f32
    %47 = vector.broadcast %cst_20 : f32 to vector<2x8xf32>
    %48 = arith.subf %47, %46 : vector<2x8xf32>
    %cst_21 = arith.constant -1.000000e+09 : f32
    %49 = vector.broadcast %cst_21 : f32 to vector<2x8xf32>
    %50 = arith.mulf %48, %49 : vector<2x8xf32>
    %51 = vector.shape_cast %50 : vector<2x8xf32> to vector<2x1x8xf32>
    %52 = vector.shape_cast %51 : vector<2x1x8xf32> to vector<2x1x8xf32>
    %53 = vector.broadcast %52 : vector<2x1x8xf32> to vector<2x8x8xf32>
    %54 = tpu.concatenate %53, %53 in 0 : vector<2x8x8xf32>, vector<2x8x8xf32> -> vector<4x8x8xf32>
    %55 = arith.truncf %45 : vector<16x32xf32> to vector<16x32xbf16>
    %c0_22 = arith.constant 0 : index
    %c0_23 = arith.constant 0 : index
    %c0_24 = arith.constant 0 : index
    %56 = vector.load %arg10[%c0_22, %c0_23, %c0_24] : memref<2x32x128xbf16, #tpu.memory_space<vmem>>, vector<1x32x128xbf16>
    %57 = vector.shape_cast %56 : vector<1x32x128xbf16> to vector<32x128xbf16>
    %cst_25 = arith.constant dense<0.000000e+00> : vector<16x128xf32>
    %58 = tpu.matmul %55, %57, %cst_25 {dimension_numbers = #tpu.dot_dimension_numbers<[1], [0], [0], [1], [0, 0, 1, 1], [], []>} : vector<16x32xbf16>, vector<32x128xbf16>, vector<16x128xf32> -> vector<16x128xf32>
    %c0_26 = arith.constant 0 : index
    %c0_27 = arith.constant 0 : index
    %c0_28 = arith.constant 0 : index
    %59 = vector.load %arg11[%c0_26, %c0_27, %c0_28] : memref<2x1x128xf32, #tpu.memory_space<vmem>>, vector<1x1x128xf32>
    %60 = vector.shape_cast %59 : vector<1x1x128xf32> to vector<1x128xf32>
    %61 = vector.broadcast %60 : vector<1x128xf32> to vector<16x128xf32>
    %62 = arith.addf %58, %61 : vector<16x128xf32>
    %63 = vector.extract_strided_slice %62 {offsets = [0, 0], sizes = [16, 16], strides = [1, 1]} : vector<16x128xf32> to vector<16x16xf32>
    %64 = vector.shape_cast %63 : vector<16x16xf32> to vector<2x8x16xf32>
    %65 = vector.extract_strided_slice %62 {offsets = [0, 16], sizes = [16, 16], strides = [1, 1]} : vector<16x128xf32> to vector<16x16xf32>
    %66 = vector.shape_cast %65 : vector<16x16xf32> to vector<2x8x16xf32>
    %67 = tpu.concatenate %64, %66 in 0 : vector<2x8x16xf32>, vector<2x8x16xf32> -> vector<4x8x16xf32>
    %68 = arith.truncf %67 : vector<4x8x16xf32> to vector<4x8x16xbf16>
    %69 = vector.extract_strided_slice %62 {offsets = [0, 32], sizes = [16, 16], strides = [1, 1]} : vector<16x128xf32> to vector<16x16xf32>
    %70 = vector.shape_cast %69 : vector<16x16xf32> to vector<2x8x16xf32>
    %71 = vector.extract_strided_slice %62 {offsets = [0, 48], sizes = [16, 16], strides = [1, 1]} : vector<16x128xf32> to vector<16x16xf32>
    %72 = vector.shape_cast %71 : vector<16x16xf32> to vector<2x8x16xf32>
    %73 = tpu.concatenate %70, %72 in 0 : vector<2x8x16xf32>, vector<2x8x16xf32> -> vector<4x8x16xf32>
    %74 = arith.truncf %73 : vector<4x8x16xf32> to vector<4x8x16xbf16>
    %75 = vector.extract_strided_slice %62 {offsets = [0, 64], sizes = [16, 16], strides = [1, 1]} : vector<16x128xf32> to vector<16x16xf32>
    %76 = vector.shape_cast %75 : vector<16x16xf32> to vector<2x8x16xf32>
    %77 = vector.extract_strided_slice %62 {offsets = [0, 80], sizes = [16, 16], strides = [1, 1]} : vector<16x128xf32> to vector<16x16xf32>
    %78 = vector.shape_cast %77 : vector<16x16xf32> to vector<2x8x16xf32>
    %79 = tpu.concatenate %76, %78 in 0 : vector<2x8x16xf32>, vector<2x8x16xf32> -> vector<4x8x16xf32>
    %80 = arith.truncf %79 : vector<4x8x16xf32> to vector<4x8x16xbf16>
    "tpu.trace_start"() <{level = 10 : i32, message = "bqd,bkd->bqk"}> : () -> ()
    %cst_29 = arith.constant dense<0.000000e+00> : vector<4x8x8xf32>
    %81 = tpu.matmul %68, %74, %cst_29 {dimension_numbers = #tpu.dot_dimension_numbers<[2], [2], [1], [1], [0, 0, 0, 1, 1, 1], [0], [0]>} : vector<4x8x16xbf16>, vector<4x8x16xbf16>, vector<4x8x8xf32> -> vector<4x8x8xf32>
    "tpu.trace_stop"() : () -> ()
    %cst_30 = arith.constant 2.500000e-01 : f32
    %82 = vector.broadcast %cst_30 : f32 to vector<4x8x8xf32>
    %83 = arith.mulf %81, %82 : vector<4x8x8xf32>
    %84 = arith.addf %83, %54 : vector<4x8x8xf32>
    %cst_31 = arith.constant dense<0xFF800000> : vector<4x8xf32>
    %85 = vector.multi_reduction <maximumf>, %84, %cst_31 [2] : vector<4x8x8xf32> to vector<4x8xf32>
    %86 = vector.shape_cast %85 : vector<4x8xf32> to vector<4x8x1xf32>
    %87 = vector.broadcast %86 : vector<4x8x1xf32> to vector<4x8x8xf32>
    %88 = arith.subf %84, %87 : vector<4x8x8xf32>
    %89 = math.exp %88 : vector<4x8x8xf32>
    %cst_32 = arith.constant dense<0.000000e+00> : vector<4x8xf32>
    %90 = vector.multi_reduction <add>, %89, %cst_32 [2] : vector<4x8x8xf32> to vector<4x8xf32>
    %91 = vector.shape_cast %90 : vector<4x8xf32> to vector<4x8x1xf32>
    %92 = tpu.reciprocal %91 {approx = true} : vector<4x8x1xf32> -> vector<4x8x1xf32>
    %93 = vector.broadcast %92 : vector<4x8x1xf32> to vector<4x8x8xf32>
    %94 = arith.mulf %89, %93 : vector<4x8x8xf32>
    %95 = arith.truncf %94 : vector<4x8x8xf32> to vector<4x8x8xbf16>
    "tpu.trace_start"() <{level = 10 : i32, message = "bqk,bkd->bqd"}> : () -> ()
    %cst_33 = arith.constant dense<0.000000e+00> : vector<4x8x16xf32>
    %96 = tpu.matmul %95, %80, %cst_33 {dimension_numbers = #tpu.dot_dimension_numbers<[2], [1], [1], [2], [0, 0, 0, 1, 1, 2], [0], [0]>} : vector<4x8x8xbf16>, vector<4x8x16xbf16>, vector<4x8x16xf32> -> vector<4x8x16xf32>
    "tpu.trace_stop"() : () -> ()
    %97 = vector.extract_strided_slice %96 {offsets = [0, 0, 0], sizes = [2, 8, 16], strides = [1, 1, 1]} : vector<4x8x16xf32> to vector<2x8x16xf32>
    %98 = vector.extract_strided_slice %96 {offsets = [2, 0, 0], sizes = [2, 8, 16], strides = [1, 1, 1]} : vector<4x8x16xf32> to vector<2x8x16xf32>
    %99 = tpu.concatenate %97, %98 in 2 : vector<2x8x16xf32>, vector<2x8x16xf32> -> vector<2x8x32xf32>
    %100 = vector.shape_cast %99 : vector<2x8x32xf32> to vector<16x32xf32>
    %101 = arith.truncf %100 : vector<16x32xf32> to vector<16x32xbf16>
    %c0_34 = arith.constant 0 : index
    %c0_35 = arith.constant 0 : index
    %c0_36 = arith.constant 0 : index
    %102 = vector.load %arg12[%c0_34, %c0_35, %c0_36] : memref<2x32x32xbf16, #tpu.memory_space<vmem>>, vector<1x32x32xbf16>
    %103 = vector.shape_cast %102 : vector<1x32x32xbf16> to vector<32x32xbf16>
    %cst_37 = arith.constant dense<0.000000e+00> : vector<16x32xf32>
    %104 = tpu.matmul %101, %103, %cst_37 {dimension_numbers = #tpu.dot_dimension_numbers<[1], [0], [0], [1], [0, 0, 1, 1], [], []>} : vector<16x32xbf16>, vector<32x32xbf16>, vector<16x32xf32> -> vector<16x32xf32>
    %c0_38 = arith.constant 0 : index
    %c0_39 = arith.constant 0 : index
    %c0_40 = arith.constant 0 : index
    %105 = vector.load %arg13[%c0_38, %c0_39, %c0_40] : memref<2x1x32xf32, #tpu.memory_space<vmem>>, vector<1x1x32xf32>
    %106 = vector.shape_cast %105 : vector<1x1x32xf32> to vector<1x32xf32>
    %107 = vector.broadcast %106 : vector<1x32xf32> to vector<16x32xf32>
    %108 = arith.addf %104, %107 : vector<16x32xf32>
    %109 = arith.addf %45, %108 : vector<16x32xf32>
    %c0_41 = arith.constant 0 : index
    %c0_42 = arith.constant 0 : index
    %c0_43 = arith.constant 0 : index
    %110 = vector.load %arg14[%c0_41, %c0_42, %c0_43] : memref<2x1x32xf32, #tpu.memory_space<vmem>>, vector<1x1x32xf32>
    %111 = vector.shape_cast %110 : vector<1x1x32xf32> to vector<1x32xf32>
    %c0_44 = arith.constant 0 : index
    %c0_45 = arith.constant 0 : index
    %c0_46 = arith.constant 0 : index
    %112 = vector.load %arg15[%c0_44, %c0_45, %c0_46] : memref<2x1x32xf32, #tpu.memory_space<vmem>>, vector<1x1x32xf32>
    %113 = vector.shape_cast %112 : vector<1x1x32xf32> to vector<1x32xf32>
    %cst_47 = arith.constant dense<0.000000e+00> : vector<16xf32>
    %114 = vector.multi_reduction <add>, %109, %cst_47 [1] : vector<16x32xf32> to vector<16xf32>
    %115 = vector.shape_cast %114 : vector<16xf32> to vector<16x1xf32>
    %cst_48 = arith.constant 3.200000e+01 : f32
    %116 = vector.broadcast %cst_48 : f32 to vector<16x1xf32>
    %117 = arith.divf %115, %116 : vector<16x1xf32>
    %118 = vector.broadcast %117 : vector<16x1xf32> to vector<16x32xf32>
    %119 = arith.subf %109, %118 : vector<16x32xf32>
    %120 = arith.mulf %119, %119 : vector<16x32xf32>
    %cst_49 = arith.constant dense<0.000000e+00> : vector<16xf32>
    %121 = vector.multi_reduction <add>, %120, %cst_49 [1] : vector<16x32xf32> to vector<16xf32>
    %122 = vector.shape_cast %121 : vector<16xf32> to vector<16x1xf32>
    %cst_50 = arith.constant 3.200000e+01 : f32
    %123 = vector.broadcast %cst_50 : f32 to vector<16x1xf32>
    %124 = arith.divf %122, %123 : vector<16x1xf32>
    %125 = vector.broadcast %117 : vector<16x1xf32> to vector<16x32xf32>
    %126 = arith.subf %109, %125 : vector<16x32xf32>
    %cst_51 = arith.constant 9.99999996E-13 : f32
    %127 = vector.broadcast %cst_51 : f32 to vector<16x1xf32>
    %128 = arith.addf %124, %127 : vector<16x1xf32>
    %129 = math.rsqrt %128 : vector<16x1xf32>
    %130 = vector.broadcast %129 : vector<16x1xf32> to vector<16x32xf32>
    %131 = arith.mulf %126, %130 : vector<16x32xf32>
    %132 = vector.broadcast %111 : vector<1x32xf32> to vector<16x32xf32>
    %133 = arith.mulf %131, %132 : vector<16x32xf32>
    %134 = vector.broadcast %113 : vector<1x32xf32> to vector<16x32xf32>
    %135 = arith.addf %133, %134 : vector<16x32xf32>
    %136 = arith.truncf %135 : vector<16x32xf32> to vector<16x32xbf16>
    %c0_52 = arith.constant 0 : index
    %c0_53 = arith.constant 0 : index
    %c0_54 = arith.constant 0 : index
    %137 = vector.load %arg16[%c0_52, %c0_53, %c0_54] : memref<2x32x64xbf16, #tpu.memory_space<vmem>>, vector<1x32x64xbf16>
    %138 = vector.shape_cast %137 : vector<1x32x64xbf16> to vector<32x64xbf16>
    %cst_55 = arith.constant dense<0.000000e+00> : vector<16x64xf32>
    %139 = tpu.matmul %136, %138, %cst_55 {dimension_numbers = #tpu.dot_dimension_numbers<[1], [0], [0], [1], [0, 0, 1, 1], [], []>} : vector<16x32xbf16>, vector<32x64xbf16>, vector<16x64xf32> -> vector<16x64xf32>
    %c0_56 = arith.constant 0 : index
    %c0_57 = arith.constant 0 : index
    %c0_58 = arith.constant 0 : index
    %140 = vector.load %arg17[%c0_56, %c0_57, %c0_58] : memref<2x1x64xf32, #tpu.memory_space<vmem>>, vector<1x1x64xf32>
    %141 = vector.shape_cast %140 : vector<1x1x64xf32> to vector<1x64xf32>
    %142 = vector.broadcast %141 : vector<1x64xf32> to vector<16x64xf32>
    %143 = arith.addf %139, %142 : vector<16x64xf32>
    %cst_59 = arith.constant 5.000000e-01 : f32
    %144 = vector.broadcast %cst_59 : f32 to vector<16x64xf32>
    %145 = arith.mulf %144, %143 : vector<16x64xf32>
    %cst_60 = arith.constant 4.471500e-02 : f32
    %146 = vector.broadcast %cst_60 : f32 to vector<16x64xf32>
    %147 = arith.mulf %146, %143 : vector<16x64xf32>
    %148 = arith.mulf %147, %143 : vector<16x64xf32>
    %149 = arith.mulf %148, %143 : vector<16x64xf32>
    %150 = arith.addf %143, %149 : vector<16x64xf32>
    %cst_61 = arith.constant 0.797884583 : f32
    %151 = vector.broadcast %cst_61 : f32 to vector<16x64xf32>
    %152 = arith.mulf %151, %150 : vector<16x64xf32>
    %153 = math.tanh %152 : vector<16x64xf32>
    %cst_62 = arith.constant 1.000000e+00 : f32
    %154 = vector.broadcast %cst_62 : f32 to vector<16x64xf32>
    %155 = arith.addf %154, %153 : vector<16x64xf32>
    %156 = arith.mulf %145, %155 : vector<16x64xf32>
    %157 = arith.truncf %156 : vector<16x64xf32> to vector<16x64xbf16>
    %c0_63 = arith.constant 0 : index
    %c0_64 = arith.constant 0 : index
    %c0_65 = arith.constant 0 : index
    %158 = vector.load %arg18[%c0_63, %c0_64, %c0_65] : memref<2x64x32xbf16, #tpu.memory_space<vmem>>, vector<1x64x32xbf16>
    %159 = vector.shape_cast %158 : vector<1x64x32xbf16> to vector<64x32xbf16>
    %cst_66 = arith.constant dense<0.000000e+00> : vector<16x32xf32>
    %160 = tpu.matmul %157, %159, %cst_66 {dimension_numbers = #tpu.dot_dimension_numbers<[1], [0], [0], [1], [0, 0, 1, 1], [], []>} : vector<16x64xbf16>, vector<64x32xbf16>, vector<16x32xf32> -> vector<16x32xf32>
    %c0_67 = arith.constant 0 : index
    %c0_68 = arith.constant 0 : index
    %c0_69 = arith.constant 0 : index
    %161 = vector.load %arg19[%c0_67, %c0_68, %c0_69] : memref<2x1x32xf32, #tpu.memory_space<vmem>>, vector<1x1x32xf32>
    %162 = vector.shape_cast %161 : vector<1x1x32xf32> to vector<1x32xf32>
    %163 = vector.broadcast %162 : vector<1x32xf32> to vector<16x32xf32>
    %164 = arith.addf %160, %163 : vector<16x32xf32>
    %165 = arith.addf %135, %164 : vector<16x32xf32>
    %c0_70 = arith.constant 0 : index
    %c0_71 = arith.constant 0 : index
    %c0_72 = arith.constant 0 : index
    %166 = vector.load %arg20[%c0_70, %c0_71, %c0_72] : memref<2x1x32xf32, #tpu.memory_space<vmem>>, vector<1x1x32xf32>
    %167 = vector.shape_cast %166 : vector<1x1x32xf32> to vector<1x32xf32>
    %c0_73 = arith.constant 0 : index
    %c0_74 = arith.constant 0 : index
    %c0_75 = arith.constant 0 : index
    %168 = vector.load %arg21[%c0_73, %c0_74, %c0_75] : memref<2x1x32xf32, #tpu.memory_space<vmem>>, vector<1x1x32xf32>
    %169 = vector.shape_cast %168 : vector<1x1x32xf32> to vector<1x32xf32>
    %cst_76 = arith.constant dense<0.000000e+00> : vector<16xf32>
    %170 = vector.multi_reduction <add>, %165, %cst_76 [1] : vector<16x32xf32> to vector<16xf32>
    %171 = vector.shape_cast %170 : vector<16xf32> to vector<16x1xf32>
    %cst_77 = arith.constant 3.200000e+01 : f32
    %172 = vector.broadcast %cst_77 : f32 to vector<16x1xf32>
    %173 = arith.divf %171, %172 : vector<16x1xf32>
    %174 = vector.broadcast %173 : vector<16x1xf32> to vector<16x32xf32>
    %175 = arith.subf %165, %174 : vector<16x32xf32>
    %176 = arith.mulf %175, %175 : vector<16x32xf32>
    %cst_78 = arith.constant dense<0.000000e+00> : vector<16xf32>
    %177 = vector.multi_reduction <add>, %176, %cst_78 [1] : vector<16x32xf32> to vector<16xf32>
    %178 = vector.shape_cast %177 : vector<16xf32> to vector<16x1xf32>
    %cst_79 = arith.constant 3.200000e+01 : f32
    %179 = vector.broadcast %cst_79 : f32 to vector<16x1xf32>
    %180 = arith.divf %178, %179 : vector<16x1xf32>
    %181 = vector.broadcast %173 : vector<16x1xf32> to vector<16x32xf32>
    %182 = arith.subf %165, %181 : vector<16x32xf32>
    %cst_80 = arith.constant 9.99999996E-13 : f32
    %183 = vector.broadcast %cst_80 : f32 to vector<16x1xf32>
    %184 = arith.addf %180, %183 : vector<16x1xf32>
    %185 = math.rsqrt %184 : vector<16x1xf32>
    %186 = vector.broadcast %185 : vector<16x1xf32> to vector<16x32xf32>
    %187 = arith.mulf %182, %186 : vector<16x32xf32>
    %188 = vector.broadcast %167 : vector<1x32xf32> to vector<16x32xf32>
    %189 = arith.mulf %187, %188 : vector<16x32xf32>
    %190 = vector.broadcast %169 : vector<1x32xf32> to vector<16x32xf32>
    %191 = arith.addf %189, %190 : vector<16x32xf32>
    %192 = arith.truncf %191 : vector<16x32xf32> to vector<16x32xbf16>
    %c1 = arith.constant 1 : index
    %c0_81 = arith.constant 0 : index
    %c0_82 = arith.constant 0 : index
    %193 = vector.load %arg10[%c1, %c0_81, %c0_82] : memref<2x32x128xbf16, #tpu.memory_space<vmem>>, vector<1x32x128xbf16>
    %194 = vector.shape_cast %193 : vector<1x32x128xbf16> to vector<32x128xbf16>
    %cst_83 = arith.constant dense<0.000000e+00> : vector<16x128xf32>
    %195 = tpu.matmul %192, %194, %cst_83 {dimension_numbers = #tpu.dot_dimension_numbers<[1], [0], [0], [1], [0, 0, 1, 1], [], []>} : vector<16x32xbf16>, vector<32x128xbf16>, vector<16x128xf32> -> vector<16x128xf32>
    %c1_84 = arith.constant 1 : index
    %c0_85 = arith.constant 0 : index
    %c0_86 = arith.constant 0 : index
    %196 = vector.load %arg11[%c1_84, %c0_85, %c0_86] : memref<2x1x128xf32, #tpu.memory_space<vmem>>, vector<1x1x128xf32>
    %197 = vector.shape_cast %196 : vector<1x1x128xf32> to vector<1x128xf32>
    %198 = vector.broadcast %197 : vector<1x128xf32> to vector<16x128xf32>
    %199 = arith.addf %195, %198 : vector<16x128xf32>
    %200 = vector.extract_strided_slice %199 {offsets = [0, 0], sizes = [16, 16], strides = [1, 1]} : vector<16x128xf32> to vector<16x16xf32>
    %201 = vector.shape_cast %200 : vector<16x16xf32> to vector<2x8x16xf32>
    %202 = vector.extract_strided_slice %199 {offsets = [0, 16], sizes = [16, 16], strides = [1, 1]} : vector<16x128xf32> to vector<16x16xf32>
    %203 = vector.shape_cast %202 : vector<16x16xf32> to vector<2x8x16xf32>
    %204 = tpu.concatenate %201, %203 in 0 : vector<2x8x16xf32>, vector<2x8x16xf32> -> vector<4x8x16xf32>
    %205 = arith.truncf %204 : vector<4x8x16xf32> to vector<4x8x16xbf16>
    %206 = vector.extract_strided_slice %199 {offsets = [0, 32], sizes = [16, 16], strides = [1, 1]} : vector<16x128xf32> to vector<16x16xf32>
    %207 = vector.shape_cast %206 : vector<16x16xf32> to vector<2x8x16xf32>
    %208 = vector.extract_strided_slice %199 {offsets = [0, 48], sizes = [16, 16], strides = [1, 1]} : vector<16x128xf32> to vector<16x16xf32>
    %209 = vector.shape_cast %208 : vector<16x16xf32> to vector<2x8x16xf32>
    %210 = tpu.concatenate %207, %209 in 0 : vector<2x8x16xf32>, vector<2x8x16xf32> -> vector<4x8x16xf32>
    %211 = arith.truncf %210 : vector<4x8x16xf32> to vector<4x8x16xbf16>
    %212 = vector.extract_strided_slice %199 {offsets = [0, 64], sizes = [16, 16], strides = [1, 1]} : vector<16x128xf32> to vector<16x16xf32>
    %213 = vector.shape_cast %212 : vector<16x16xf32> to vector<2x8x16xf32>
    %214 = vector.extract_strided_slice %199 {offsets = [0, 80], sizes = [16, 16], strides = [1, 1]} : vector<16x128xf32> to vector<16x16xf32>
    %215 = vector.shape_cast %214 : vector<16x16xf32> to vector<2x8x16xf32>
    %216 = tpu.concatenate %213, %215 in 0 : vector<2x8x16xf32>, vector<2x8x16xf32> -> vector<4x8x16xf32>
    %217 = arith.truncf %216 : vector<4x8x16xf32> to vector<4x8x16xbf16>
    "tpu.trace_start"() <{level = 10 : i32, message = "bqd,bkd->bqk"}> : () -> ()
    %cst_87 = arith.constant dense<0.000000e+00> : vector<4x8x8xf32>
    %218 = tpu.matmul %205, %211, %cst_87 {dimension_numbers = #tpu.dot_dimension_numbers<[2], [2], [1], [1], [0, 0, 0, 1, 1, 1], [0], [0]>} : vector<4x8x16xbf16>, vector<4x8x16xbf16>, vector<4x8x8xf32> -> vector<4x8x8xf32>
    "tpu.trace_stop"() : () -> ()
    %cst_88 = arith.constant 2.500000e-01 : f32
    %219 = vector.broadcast %cst_88 : f32 to vector<4x8x8xf32>
    %220 = arith.mulf %218, %219 : vector<4x8x8xf32>
    %221 = arith.addf %220, %54 : vector<4x8x8xf32>
    %cst_89 = arith.constant dense<0xFF800000> : vector<4x8xf32>
    %222 = vector.multi_reduction <maximumf>, %221, %cst_89 [2] : vector<4x8x8xf32> to vector<4x8xf32>
    %223 = vector.shape_cast %222 : vector<4x8xf32> to vector<4x8x1xf32>
    %224 = vector.broadcast %223 : vector<4x8x1xf32> to vector<4x8x8xf32>
    %225 = arith.subf %221, %224 : vector<4x8x8xf32>
    %226 = math.exp %225 : vector<4x8x8xf32>
    %cst_90 = arith.constant dense<0.000000e+00> : vector<4x8xf32>
    %227 = vector.multi_reduction <add>, %226, %cst_90 [2] : vector<4x8x8xf32> to vector<4x8xf32>
    %228 = vector.shape_cast %227 : vector<4x8xf32> to vector<4x8x1xf32>
    %229 = tpu.reciprocal %228 {approx = true} : vector<4x8x1xf32> -> vector<4x8x1xf32>
    %230 = vector.broadcast %229 : vector<4x8x1xf32> to vector<4x8x8xf32>
    %231 = arith.mulf %226, %230 : vector<4x8x8xf32>
    %232 = arith.truncf %231 : vector<4x8x8xf32> to vector<4x8x8xbf16>
    "tpu.trace_start"() <{level = 10 : i32, message = "bqk,bkd->bqd"}> : () -> ()
    %cst_91 = arith.constant dense<0.000000e+00> : vector<4x8x16xf32>
    %233 = tpu.matmul %232, %217, %cst_91 {dimension_numbers = #tpu.dot_dimension_numbers<[2], [1], [1], [2], [0, 0, 0, 1, 1, 2], [0], [0]>} : vector<4x8x8xbf16>, vector<4x8x16xbf16>, vector<4x8x16xf32> -> vector<4x8x16xf32>
    "tpu.trace_stop"() : () -> ()
    %234 = vector.extract_strided_slice %233 {offsets = [0, 0, 0], sizes = [2, 8, 16], strides = [1, 1, 1]} : vector<4x8x16xf32> to vector<2x8x16xf32>
    %235 = vector.extract_strided_slice %233 {offsets = [2, 0, 0], sizes = [2, 8, 16], strides = [1, 1, 1]} : vector<4x8x16xf32> to vector<2x8x16xf32>
    %236 = tpu.concatenate %234, %235 in 2 : vector<2x8x16xf32>, vector<2x8x16xf32> -> vector<2x8x32xf32>
    %237 = vector.shape_cast %236 : vector<2x8x32xf32> to vector<16x32xf32>
    %238 = arith.truncf %237 : vector<16x32xf32> to vector<16x32xbf16>
    %c1_92 = arith.constant 1 : index
    %c0_93 = arith.constant 0 : index
    %c0_94 = arith.constant 0 : index
    %239 = vector.load %arg12[%c1_92, %c0_93, %c0_94] : memref<2x32x32xbf16, #tpu.memory_space<vmem>>, vector<1x32x32xbf16>
    %240 = vector.shape_cast %239 : vector<1x32x32xbf16> to vector<32x32xbf16>
    %cst_95 = arith.constant dense<0.000000e+00> : vector<16x32xf32>
    %241 = tpu.matmul %238, %240, %cst_95 {dimension_numbers = #tpu.dot_dimension_numbers<[1], [0], [0], [1], [0, 0, 1, 1], [], []>} : vector<16x32xbf16>, vector<32x32xbf16>, vector<16x32xf32> -> vector<16x32xf32>
    %c1_96 = arith.constant 1 : index
    %c0_97 = arith.constant 0 : index
    %c0_98 = arith.constant 0 : index
    %242 = vector.load %arg13[%c1_96, %c0_97, %c0_98] : memref<2x1x32xf32, #tpu.memory_space<vmem>>, vector<1x1x32xf32>
    %243 = vector.shape_cast %242 : vector<1x1x32xf32> to vector<1x32xf32>
    %244 = vector.broadcast %243 : vector<1x32xf32> to vector<16x32xf32>
    %245 = arith.addf %241, %244 : vector<16x32xf32>
    %246 = arith.addf %191, %245 : vector<16x32xf32>
    %c1_99 = arith.constant 1 : index
    %c0_100 = arith.constant 0 : index
    %c0_101 = arith.constant 0 : index
    %247 = vector.load %arg14[%c1_99, %c0_100, %c0_101] : memref<2x1x32xf32, #tpu.memory_space<vmem>>, vector<1x1x32xf32>
    %248 = vector.shape_cast %247 : vector<1x1x32xf32> to vector<1x32xf32>
    %c1_102 = arith.constant 1 : index
    %c0_103 = arith.constant 0 : index
    %c0_104 = arith.constant 0 : index
    %249 = vector.load %arg15[%c1_102, %c0_103, %c0_104] : memref<2x1x32xf32, #tpu.memory_space<vmem>>, vector<1x1x32xf32>
    %250 = vector.shape_cast %249 : vector<1x1x32xf32> to vector<1x32xf32>
    %cst_105 = arith.constant dense<0.000000e+00> : vector<16xf32>
    %251 = vector.multi_reduction <add>, %246, %cst_105 [1] : vector<16x32xf32> to vector<16xf32>
    %252 = vector.shape_cast %251 : vector<16xf32> to vector<16x1xf32>
    %cst_106 = arith.constant 3.200000e+01 : f32
    %253 = vector.broadcast %cst_106 : f32 to vector<16x1xf32>
    %254 = arith.divf %252, %253 : vector<16x1xf32>
    %255 = vector.broadcast %254 : vector<16x1xf32> to vector<16x32xf32>
    %256 = arith.subf %246, %255 : vector<16x32xf32>
    %257 = arith.mulf %256, %256 : vector<16x32xf32>
    %cst_107 = arith.constant dense<0.000000e+00> : vector<16xf32>
    %258 = vector.multi_reduction <add>, %257, %cst_107 [1] : vector<16x32xf32> to vector<16xf32>
    %259 = vector.shape_cast %258 : vector<16xf32> to vector<16x1xf32>
    %cst_108 = arith.constant 3.200000e+01 : f32
    %260 = vector.broadcast %cst_108 : f32 to vector<16x1xf32>
    %261 = arith.divf %259, %260 : vector<16x1xf32>
    %262 = vector.broadcast %254 : vector<16x1xf32> to vector<16x32xf32>
    %263 = arith.subf %246, %262 : vector<16x32xf32>
    %cst_109 = arith.constant 9.99999996E-13 : f32
    %264 = vector.broadcast %cst_109 : f32 to vector<16x1xf32>
    %265 = arith.addf %261, %264 : vector<16x1xf32>
    %266 = math.rsqrt %265 : vector<16x1xf32>
    %267 = vector.broadcast %266 : vector<16x1xf32> to vector<16x32xf32>
    %268 = arith.mulf %263, %267 : vector<16x32xf32>
    %269 = vector.broadcast %248 : vector<1x32xf32> to vector<16x32xf32>
    %270 = arith.mulf %268, %269 : vector<16x32xf32>
    %271 = vector.broadcast %250 : vector<1x32xf32> to vector<16x32xf32>
    %272 = arith.addf %270, %271 : vector<16x32xf32>
    %273 = arith.truncf %272 : vector<16x32xf32> to vector<16x32xbf16>
    %c1_110 = arith.constant 1 : index
    %c0_111 = arith.constant 0 : index
    %c0_112 = arith.constant 0 : index
    %274 = vector.load %arg16[%c1_110, %c0_111, %c0_112] : memref<2x32x64xbf16, #tpu.memory_space<vmem>>, vector<1x32x64xbf16>
    %275 = vector.shape_cast %274 : vector<1x32x64xbf16> to vector<32x64xbf16>
    %cst_113 = arith.constant dense<0.000000e+00> : vector<16x64xf32>
    %276 = tpu.matmul %273, %275, %cst_113 {dimension_numbers = #tpu.dot_dimension_numbers<[1], [0], [0], [1], [0, 0, 1, 1], [], []>} : vector<16x32xbf16>, vector<32x64xbf16>, vector<16x64xf32> -> vector<16x64xf32>
    %c1_114 = arith.constant 1 : index
    %c0_115 = arith.constant 0 : index
    %c0_116 = arith.constant 0 : index
    %277 = vector.load %arg17[%c1_114, %c0_115, %c0_116] : memref<2x1x64xf32, #tpu.memory_space<vmem>>, vector<1x1x64xf32>
    %278 = vector.shape_cast %277 : vector<1x1x64xf32> to vector<1x64xf32>
    %279 = vector.broadcast %278 : vector<1x64xf32> to vector<16x64xf32>
    %280 = arith.addf %276, %279 : vector<16x64xf32>
    %cst_117 = arith.constant 5.000000e-01 : f32
    %281 = vector.broadcast %cst_117 : f32 to vector<16x64xf32>
    %282 = arith.mulf %281, %280 : vector<16x64xf32>
    %cst_118 = arith.constant 4.471500e-02 : f32
    %283 = vector.broadcast %cst_118 : f32 to vector<16x64xf32>
    %284 = arith.mulf %283, %280 : vector<16x64xf32>
    %285 = arith.mulf %284, %280 : vector<16x64xf32>
    %286 = arith.mulf %285, %280 : vector<16x64xf32>
    %287 = arith.addf %280, %286 : vector<16x64xf32>
    %cst_119 = arith.constant 0.797884583 : f32
    %288 = vector.broadcast %cst_119 : f32 to vector<16x64xf32>
    %289 = arith.mulf %288, %287 : vector<16x64xf32>
    %290 = math.tanh %289 : vector<16x64xf32>
    %cst_120 = arith.constant 1.000000e+00 : f32
    %291 = vector.broadcast %cst_120 : f32 to vector<16x64xf32>
    %292 = arith.addf %291, %290 : vector<16x64xf32>
    %293 = arith.mulf %282, %292 : vector<16x64xf32>
    %294 = arith.truncf %293 : vector<16x64xf32> to vector<16x64xbf16>
    %c1_121 = arith.constant 1 : index
    %c0_122 = arith.constant 0 : index
    %c0_123 = arith.constant 0 : index
    %295 = vector.load %arg18[%c1_121, %c0_122, %c0_123] : memref<2x64x32xbf16, #tpu.memory_space<vmem>>, vector<1x64x32xbf16>
    %296 = vector.shape_cast %295 : vector<1x64x32xbf16> to vector<64x32xbf16>
    %cst_124 = arith.constant dense<0.000000e+00> : vector<16x32xf32>
    %297 = tpu.matmul %294, %296, %cst_124 {dimension_numbers = #tpu.dot_dimension_numbers<[1], [0], [0], [1], [0, 0, 1, 1], [], []>} : vector<16x64xbf16>, vector<64x32xbf16>, vector<16x32xf32> -> vector<16x32xf32>
    %c1_125 = arith.constant 1 : index
    %c0_126 = arith.constant 0 : index
    %c0_127 = arith.constant 0 : index
    %298 = vector.load %arg19[%c1_125, %c0_126, %c0_127] : memref<2x1x32xf32, #tpu.memory_space<vmem>>, vector<1x1x32xf32>
    %299 = vector.shape_cast %298 : vector<1x1x32xf32> to vector<1x32xf32>
    %300 = vector.broadcast %299 : vector<1x32xf32> to vector<16x32xf32>
    %301 = arith.addf %297, %300 : vector<16x32xf32>
    %302 = arith.addf %272, %301 : vector<16x32xf32>
    %c1_128 = arith.constant 1 : index
    %c0_129 = arith.constant 0 : index
    %c0_130 = arith.constant 0 : index
    %303 = vector.load %arg20[%c1_128, %c0_129, %c0_130] : memref<2x1x32xf32, #tpu.memory_space<vmem>>, vector<1x1x32xf32>
    %304 = vector.shape_cast %303 : vector<1x1x32xf32> to vector<1x32xf32>
    %c1_131 = arith.constant 1 : index
    %c0_132 = arith.constant 0 : index
    %c0_133 = arith.constant 0 : index
    %305 = vector.load %arg21[%c1_131, %c0_132, %c0_133] : memref<2x1x32xf32, #tpu.memory_space<vmem>>, vector<1x1x32xf32>
    %306 = vector.shape_cast %305 : vector<1x1x32xf32> to vector<1x32xf32>
    %cst_134 = arith.constant dense<0.000000e+00> : vector<16xf32>
    %307 = vector.multi_reduction <add>, %302, %cst_134 [1] : vector<16x32xf32> to vector<16xf32>
    %308 = vector.shape_cast %307 : vector<16xf32> to vector<16x1xf32>
    %cst_135 = arith.constant 3.200000e+01 : f32
    %309 = vector.broadcast %cst_135 : f32 to vector<16x1xf32>
    %310 = arith.divf %308, %309 : vector<16x1xf32>
    %311 = vector.broadcast %310 : vector<16x1xf32> to vector<16x32xf32>
    %312 = arith.subf %302, %311 : vector<16x32xf32>
    %313 = arith.mulf %312, %312 : vector<16x32xf32>
    %cst_136 = arith.constant dense<0.000000e+00> : vector<16xf32>
    %314 = vector.multi_reduction <add>, %313, %cst_136 [1] : vector<16x32xf32> to vector<16xf32>
    %315 = vector.shape_cast %314 : vector<16xf32> to vector<16x1xf32>
    %cst_137 = arith.constant 3.200000e+01 : f32
    %316 = vector.broadcast %cst_137 : f32 to vector<16x1xf32>
    %317 = arith.divf %315, %316 : vector<16x1xf32>
    %318 = vector.broadcast %310 : vector<16x1xf32> to vector<16x32xf32>
    %319 = arith.subf %302, %318 : vector<16x32xf32>
    %cst_138 = arith.constant 9.99999996E-13 : f32
    %320 = vector.broadcast %cst_138 : f32 to vector<16x1xf32>
    %321 = arith.addf %317, %320 : vector<16x1xf32>
    %322 = math.rsqrt %321 : vector<16x1xf32>
    %323 = vector.broadcast %322 : vector<16x1xf32> to vector<16x32xf32>
    %324 = arith.mulf %319, %323 : vector<16x32xf32>
    %325 = vector.broadcast %304 : vector<1x32xf32> to vector<16x32xf32>
    %326 = arith.mulf %324, %325 : vector<16x32xf32>
    %327 = vector.broadcast %306 : vector<1x32xf32> to vector<16x32xf32>
    %328 = arith.addf %326, %327 : vector<16x32xf32>
    %329 = vector.shape_cast %328 : vector<16x32xf32> to vector<2x8x32xf32>
    %330 = vector.extract_strided_slice %329 {offsets = [0, 0, 0], sizes = [2, 1, 32], strides = [1, 1, 1]} : vector<2x8x32xf32> to vector<2x1x32xf32>
    %331 = vector.shape_cast %330 : vector<2x1x32xf32> to vector<2x32xf32>
    %332 = arith.truncf %331 : vector<2x32xf32> to vector<2x32xbf16>
    %c0_139 = arith.constant 0 : index
    %c0_140 = arith.constant 0 : index
    %333 = vector.load %arg22[%c0_139, %c0_140] : memref<32x32xbf16, #tpu.memory_space<vmem>>, vector<32x32xbf16>
    %cst_141 = arith.constant dense<0.000000e+00> : vector<2x32xf32>
    %334 = tpu.matmul %332, %333, %cst_141 {dimension_numbers = #tpu.dot_dimension_numbers<[1], [0], [0], [1], [0, 0, 1, 1], [], []>} : vector<2x32xbf16>, vector<32x32xbf16>, vector<2x32xf32> -> vector<2x32xf32>
    %c0_142 = arith.constant 0 : index
    %c0_143 = arith.constant 0 : index
    %335 = vector.load %arg23[%c0_142, %c0_143] : memref<1x32xf32, #tpu.memory_space<vmem>>, vector<1x32xf32>
    %336 = vector.broadcast %335 : vector<1x32xf32> to vector<2x32xf32>
    %337 = arith.addf %334, %336 : vector<2x32xf32>
    %338 = math.tanh %337 : vector<2x32xf32>
    %339 = arith.truncf %338 : vector<2x32xf32> to vector<2x32xbf16>
    %c0_144 = arith.constant 0 : index
    %c0_145 = arith.constant 0 : index
    %340 = vector.load %arg24[%c0_144, %c0_145] : memref<32x128xbf16, #tpu.memory_space<vmem>>, vector<32x128xbf16>
    %cst_146 = arith.constant dense<0.000000e+00> : vector<2x128xf32>
    %341 = tpu.matmul %339, %340, %cst_146 {dimension_numbers = #tpu.dot_dimension_numbers<[1], [0], [0], [1], [0, 0, 1, 1], [], []>} : vector<2x32xbf16>, vector<32x128xbf16>, vector<2x128xf32> -> vector<2x128xf32>
    %c0_147 = arith.constant 0 : index
    %c0_148 = arith.constant 0 : index
    %342 = vector.load %arg25[%c0_147, %c0_148] : memref<1x128xf32, #tpu.memory_space<vmem>>, vector<1x128xf32>
    %343 = vector.broadcast %342 : vector<1x128xf32> to vector<2x128xf32>
    %344 = arith.addf %341, %343 : vector<2x128xf32>
    %345 = arith.truncf %328 : vector<16x32xf32> to vector<16x32xbf16>
    %c0_149 = arith.constant 0 : index
    %c0_150 = arith.constant 0 : index
    %346 = vector.load %arg26[%c0_149, %c0_150] : memref<32x128xbf16, #tpu.memory_space<vmem>>, vector<32x128xbf16>
    %cst_151 = arith.constant dense<0.000000e+00> : vector<16x128xf32>
    %347 = tpu.matmul %345, %346, %cst_151 {dimension_numbers = #tpu.dot_dimension_numbers<[1], [0], [0], [1], [0, 0, 1, 1], [], []>} : vector<16x32xbf16>, vector<32x128xbf16>, vector<16x128xf32> -> vector<16x128xf32>
    %c0_152 = arith.constant 0 : index
    %c0_153 = arith.constant 0 : index
    %348 = vector.load %arg27[%c0_152, %c0_153] : memref<1x128xf32, #tpu.memory_space<vmem>>, vector<1x128xf32>
    %349 = vector.broadcast %348 : vector<1x128xf32> to vector<16x128xf32>
    %350 = arith.addf %347, %349 : vector<16x128xf32>
    %cst_154 = arith.constant 0.000000e+00 : f32
    %351 = vector.broadcast %cst_154 : f32 to vector<6x128xf32>
    %352 = tpu.concatenate %344, %351 in 0 : vector<2x128xf32>, vector<6x128xf32> -> vector<8x128xf32>
    %c0_155 = arith.constant 0 : index
    %c0_156 = arith.constant 0 : index
    %353 = vector.load %arg28[%c0_155, %c0_156] : memref<8x128xf32, #tpu.memory_space<vmem>>, vector<8x128xf32>
    tpu.vector_store %arg28[%c0_155, %c0_156], %352 {strides = array<i32>} : memref<8x128xf32, #tpu.memory_space<vmem>>, vector<8x128xf32>,
    %c0_157 = arith.constant 0 : index
    %c0_158 = arith.constant 0 : index
    %354 = vector.load %arg29[%c0_157, %c0_158] : memref<16x128xf32, #tpu.memory_space<vmem>>, vector<16x128xf32>
    tpu.vector_store %arg29[%c0_157, %c0_158], %350 {strides = array<i32>} : memref<16x128xf32, #tpu.memory_space<vmem>>, vector<16x128xf32>,
    %355 = tpu.iota {dimensions = array<i32: 1>} : vector<16x128xi32>
    %356 = vector.extract_strided_slice %355 {offsets = [0, 0], sizes = [2, 128], strides = [1, 1]} : vector<16x128xi32> to vector<2x128xi32>
    %c5_i32 = arith.constant 5 : i32
    %357 = vector.broadcast %c5_i32 : i32 to vector<2x128xi32>
    %358 = arith.cmpi slt, %356, %357 : vector<2x128xi32>
    %cst_159 = arith.constant -1.000000e+09 : f32
    %359 = vector.broadcast %cst_159 : f32 to vector<2x128xf32>
    %360 = arith.select %358, %344, %359 : vector<2x128xi1>, vector<2x128xf32>
    %cst_160 = arith.constant dense<0xFF800000> : vector<2xf32>
    %361 = vector.multi_reduction <maximumf>, %360, %cst_160 [1] : vector<2x128xf32> to vector<2xf32>
    %362 = vector.shape_cast %361 : vector<2xf32> to vector<2x1xf32>
    %363 = vector.broadcast %362 : vector<2x1xf32> to vector<2x128xf32>
    %364 = arith.subf %360, %363 : vector<2x128xf32>
    %365 = math.exp %364 : vector<2x128xf32>
    %cst_161 = arith.constant dense<0.000000e+00> : vector<2xf32>
    %366 = vector.multi_reduction <add>, %365, %cst_161 [1] : vector<2x128xf32> to vector<2xf32>
    %367 = vector.shape_cast %366 : vector<2xf32> to vector<2x1xf32>
    %368 = math.log %367 : vector<2x1xf32>
    %369 = arith.addf %368, %362 : vector<2x1xf32>
    %c0_162 = arith.constant 0 : index
    %c0_163 = arith.constant 0 : index
    %370 = vector.load %arg4[%c0_162, %c0_163] : memref<2x1xi32, #tpu.memory_space<vmem>>, vector<2x1xi32>
    %371 = vector.broadcast %370 : vector<2x1xi32> to vector<2x128xi32>
    %372 = arith.cmpi eq, %356, %371 : vector<2x128xi32>
    %cst_164 = arith.constant 0.000000e+00 : f32
    %373 = vector.broadcast %cst_164 : f32 to vector<2x128xf32>
    %374 = arith.select %372, %344, %373 : vector<2x128xi1>, vector<2x128xf32>
    %cst_165 = arith.constant dense<0.000000e+00> : vector<2xf32>
    %375 = vector.multi_reduction <add>, %374, %cst_165 [1] : vector<2x128xf32> to vector<2xf32>
    %376 = vector.shape_cast %375 : vector<2xf32> to vector<2x1xf32>
    %377 = arith.subf %369, %376 : vector<2x1xf32>
    %378 = vector.shape_cast %377 : vector<2x1xf32> to vector<1x2x1xf32>
    %cst_166 = arith.constant dense<0.000000e+00> : vector<1xf32>
    %379 = vector.multi_reduction <add>, %378, %cst_166 [1, 2] : vector<1x2x1xf32> to vector<1xf32>
    %380 = vector.shape_cast %379 : vector<1xf32> to vector<1x1x1xf32>
    %381 = vector.extract %380[0, 0, 0] : f32 from vector<1x1x1xf32>
    %cst_167 = arith.constant 5.000000e-01 : f32
    %382 = arith.mulf %381, %cst_167 : f32
    %c0_168 = arith.constant 0 : index
    %383 = memref.load %arg30[%c0_168] : memref<1xf32, #tpu.memory_space<smem>>
    memref.store %382, %arg30[%c0_168] : memref<1xf32, #tpu.memory_space<smem>>
    %c7_i32 = arith.constant 7 : i32
    %384 = vector.broadcast %c7_i32 : i32 to vector<16x128xi32>
    %385 = arith.cmpi slt, %355, %384 : vector<16x128xi32>
    %cst_169 = arith.constant -1.000000e+09 : f32
    %386 = vector.broadcast %cst_169 : f32 to vector<16x128xf32>
    %387 = arith.select %385, %350, %386 : vector<16x128xi1>, vector<16x128xf32>
    %cst_170 = arith.constant dense<0xFF800000> : vector<16xf32>
    %388 = vector.multi_reduction <maximumf>, %387, %cst_170 [1] : vector<16x128xf32> to vector<16xf32>
    %389 = vector.shape_cast %388 : vector<16xf32> to vector<16x1xf32>
    %390 = vector.broadcast %389 : vector<16x1xf32> to vector<16x128xf32>
    %391 = arith.subf %387, %390 : vector<16x128xf32>
    %392 = math.exp %391 : vector<16x128xf32>
    %cst_171 = arith.constant dense<0.000000e+00> : vector<16xf32>
    %393 = vector.multi_reduction <add>, %392, %cst_171 [1] : vector<16x128xf32> to vector<16xf32>
    %394 = vector.shape_cast %393 : vector<16xf32> to vector<16x1xf32>
    %395 = math.log %394 : vector<16x1xf32>
    %396 = arith.addf %395, %389 : vector<16x1xf32>
    %c0_172 = arith.constant 0 : index
    %c0_173 = arith.constant 0 : index
    %397 = vector.load %arg5[%c0_172, %c0_173] : memref<16x1xi32, #tpu.memory_space<vmem>>, vector<16x1xi32>
    %398 = vector.broadcast %397 : vector<16x1xi32> to vector<16x128xi32>
    %399 = arith.cmpi eq, %355, %398 : vector<16x128xi32>
    %cst_174 = arith.constant 0.000000e+00 : f32
    %400 = vector.broadcast %cst_174 : f32 to vector<16x128xf32>
    %401 = arith.select %399, %350, %400 : vector<16x128xi1>, vector<16x128xf32>
    %cst_175 = arith.constant dense<0.000000e+00> : vector<16xf32>
    %402 = vector.multi_reduction <add>, %401, %cst_175 [1] : vector<16x128xf32> to vector<16xf32>
    %403 = vector.shape_cast %402 : vector<16xf32> to vector<16x1xf32>
    %c0_176 = arith.constant 0 : index
    %c0_177 = arith.constant 0 : index
    %404 = vector.load %arg3[%c0_176, %c0_177] : memref<16x1xf32, #tpu.memory_space<vmem>>, vector<16x1xf32>
    %405 = arith.subf %396, %403 : vector<16x1xf32>
    %406 = arith.mulf %405, %404 : vector<16x1xf32>
    %407 = vector.shape_cast %406 : vector<16x1xf32> to vector<1x16x1xf32>
    %cst_178 = arith.constant dense<0.000000e+00> : vector<1xf32>
    %408 = vector.multi_reduction <add>, %407, %cst_178 [1, 2] : vector<1x16x1xf32> to vector<1xf32>
    %409 = vector.shape_cast %408 : vector<1xf32> to vector<1x1x1xf32>
    %410 = vector.extract %409[0, 0, 0] : f32 from vector<1x1x1xf32>
    %411 = vector.shape_cast %404 : vector<16x1xf32> to vector<1x16x1xf32>
    %cst_179 = arith.constant dense<0.000000e+00> : vector<1xf32>
    %412 = vector.multi_reduction <add>, %411, %cst_179 [1, 2] : vector<1x16x1xf32> to vector<1xf32>
    %413 = vector.shape_cast %412 : vector<1xf32> to vector<1x1x1xf32>
    %414 = vector.extract %413[0, 0, 0] : f32 from vector<1x1x1xf32>
    %415 = arith.divf %410, %414 : f32
    %c0_180 = arith.constant 0 : index
    %416 = memref.load %arg31[%c0_180] : memref<1xf32, #tpu.memory_space<smem>>
    memref.store %415, %arg31[%c0_180] : memref<1xf32, #tpu.memory_space<smem>>
    return
  }
}

</mosaic_0001>

<llo_original>
// kernel: parser_model_forward.1
$region0: #{parser_model_forward.1}
  #allocation0 [shape = 'u32[]', space=smem, size = 0x4, offset = 0x4, fixed_abs, tag = 'smem constant byte address 0x4 - core index']
  #allocation1 [shape = 'u32[144,128]{1,0:T(1,128)}', space=vmem, size = 0x12000, scoped, tag = 'internal scratch']
  %s0 = inlined_call_operand.smem [shape: u32[32], index: -1, kind: input, shape index: {}]
  %s1 = sld [smem:[%s0]]
  %s2 = scalar_lea.smem %s0, 1
  %s3 = sld [smem:[%s2]]
  %s4 = scalar_lea.smem %s0, 2
  %s5 = sld [smem:[%s4]]
  %s6 = scalar_lea.smem %s0, 3
  %s7 = sld [smem:[%s6]]
  %s8 = scalar_lea.smem %s0, 4
  %s9 = sld [smem:[%s8]]
  %s10 = scalar_lea.smem %s0, 5
  %s11 = sld [smem:[%s10]]
  %s12 = scalar_lea.smem %s0, 6
  %s13 = sld [smem:[%s12]]
  %s14 = scalar_lea.smem %s0, 7
  %s15 = sld [smem:[%s14]]
  %s16 = scalar_lea.smem %s0, 8
  %s17 = sld [smem:[%s16]]
  %s18 = scalar_lea.smem %s0, 9
  %s19 = sld [smem:[%s18]]
  %s20 = scalar_lea.smem %s0, 10
  %s21 = sld [smem:[%s20]]
  %s22 = scalar_lea.smem %s0, 11
  %s23 = sld [smem:[%s22]]
  %s24 = scalar_lea.smem %s0, 12
  %s25 = sld [smem:[%s24]]
  %s26 = scalar_lea.smem %s0, 13
  %s27 = sld [smem:[%s26]]
  %s28 = scalar_lea.smem %s0, 14
  %s29 = sld [smem:[%s28]]
  %s30 = scalar_lea.smem %s0, 15
  %s31 = sld [smem:[%s30]]
  %s32 = scalar_lea.smem %s0, 16
  %s33 = sld [smem:[%s32]]
  %s34 = scalar_lea.smem %s0, 17
  %s35 = sld [smem:[%s34]]
  %s36 = scalar_lea.smem %s0, 18
  %s37 = sld [smem:[%s36]]
  %s38 = scalar_lea.smem %s0, 19
  %s39 = sld [smem:[%s38]]
  %s40 = scalar_lea.smem %s0, 20
  %s41 = sld [smem:[%s40]]
  %s42 = scalar_lea.smem %s0, 21
  %s43 = sld [smem:[%s42]]
  %s44 = scalar_lea.smem %s0, 22
  %s45 = sld [smem:[%s44]]
  %s46 = scalar_lea.smem %s0, 23
  %s47 = sld [smem:[%s46]]
  %s48 = scalar_lea.smem %s0, 24
  %s49 = sld [smem:[%s48]]
  %s50 = scalar_lea.smem %s0, 25
  %s51 = sld [smem:[%s50]]
  %s52 = scalar_lea.smem %s0, 26
  %s53 = sld [smem:[%s52]]
  %s54 = scalar_lea.smem %s0, 27
  %s55 = sld [smem:[%s54]]
  %s56 = scalar_lea.smem %s0, 28
  %s57 = sld [smem:[%s56]]
  %s58 = scalar_lea.smem %s0, 29
  %s59 = sld [smem:[%s58]]
  %s60 = scalar_lea.smem %s0, 30
  %s61 = sld [smem:[%s60]]
  %s62 = scalar_lea.smem %s0, 31
  %s63 = sld [smem:[%s62]]
  %64 = xla_tuple %s57, %s59, %s61, %s63
  %s65 = sld [smem:[#allocation0]]
  $region146: #{parser_model_forward.1} parent=0
    _
  %s67 = ssub.s32 1, %s65
  %s68 = scalar_select 0, %s67, %s65
  $region1: #{parser_model_forward.1} parent=0
    #allocation2 [shape = 'u8[512]{0}', space=smem, size = 0x200, scoped, tag = 'output window, operand 2, single buffered']
    #allocation3 [shape = 's32[1]{0}', space=sflag, size = 0x4, scoped, tag = 'scoped memory for parser_model_forward.1']
    #allocation4 [shape = 'u8[512]{0}', space=smem, size = 0x200, scoped, tag = 'output window, operand 3, single buffered']
    #allocation5 [shape = 's32[1]{0}', space=sflag, size = 0x4, scoped, tag = 'scoped memory for parser_model_forward.1']
    %69 = vsyncpa [#allocation3], 0
    %70 = vsyncpa [#allocation5], 0
    // Predicated region
    $region2: #{parser_model_forward.1} parent=1 // pred_check
      _
    $region3: #{parser_model_forward.1} parent=1 // pred_check_branch
      %72 = sbr.rel (0) target = $region5
    $region4: #{parser_model_forward.1} parent=1 // pred_region
      _
    $region5: #{parser_model_forward.1} parent=1 // pred_fallthru
      _
    // Predicated region
    $region6: #{parser_model_forward.1} parent=1 // pred_check
      _
    $region7: #{parser_model_forward.1} parent=1 // pred_check_branch
      %74 = sbr.rel (0) target = $region9
    $region8: #{parser_model_forward.1} parent=1 // pred_region
      _
    $region9: #{parser_model_forward.1} parent=1 // pred_fallthru
      _
    // Predicated region
    $region10: #{parser_model_forward.1} parent=1 // pred_check
      _
    $region11: #{parser_model_forward.1} parent=1 // pred_check_branch
      %76 = sbr.rel (0) target = $region13
    $region12: #{parser_model_forward.1} parent=1 // pred_region
      _
    $region13: #{parser_model_forward.1} parent=1 // pred_fallthru
      _
    // Predicated region
    $region14: #{parser_model_forward.1} parent=1 // pred_check
      _
    $region15: #{parser_model_forward.1} parent=1 // pred_check_branch
      %78 = sbr.rel (0) target = $region17
    $region16: #{parser_model_forward.1} parent=1 // pred_region
      _
    $region17: #{parser_model_forward.1} parent=1 // pred_fallthru
      _
    // Predicated region
    $region18: #{parser_model_forward.1} parent=1 // pred_check
      _
    $region19: #{parser_model_forward.1} parent=1 // pred_check_branch
      %80 = sbr.rel (0) target = $region21
    $region20: #{parser_model_forward.1} parent=1 // pred_region
      _
    $region21: #{parser_model_forward.1} parent=1 // pred_fallthru
      _
    // Predicated region
    $region22: #{parser_model_forward.1} parent=1 // pred_check
      _
    $region23: #{parser_model_forward.1} parent=1 // pred_check_branch
      %82 = sbr.rel (0) target = $region25
    $region24: #{parser_model_forward.1} parent=1 // pred_region
      _
    $region25: #{parser_model_forward.1} parent=1 // pred_fallthru
      _
    // Predicated region
    $region26: #{parser_model_forward.1} parent=1 // pred_check
      _
    $region27: #{parser_model_forward.1} parent=1 // pred_check_branch
      %84 = sbr.rel (0) target = $region29
    $region28: #{parser_model_forward.1} parent=1 // pred_region
      _
    $region29: #{parser_model_forward.1} parent=1 // pred_fallthru
      _
    // Predicated region
    $region30: #{parser_model_forward.1} parent=1 // pred_check
      _
    $region31: #{parser_model_forward.1} parent=1 // pred_check_branch
      %86 = sbr.rel (0) target = $region33
    $region32: #{parser_model_forward.1} parent=1 // pred_region
      _
    $region33: #{parser_model_forward.1} parent=1 // pred_fallthru
      _
    // Predicated region
    $region34: #{parser_model_forward.1} parent=1 // pred_check
      _
    $region35: #{parser_model_forward.1} parent=1 // pred_check_branch
      %88 = sbr.rel (0) target = $region37
    $region36: #{parser_model_forward.1} parent=1 // pred_region
      _
    $region37: #{parser_model_forward.1} parent=1 // pred_fallthru
      _
    // Predicated region
    $region38: #{parser_model_forward.1} parent=1 // pred_check
      _
    $region39: #{parser_model_forward.1} parent=1 // pred_check_branch
      %90 = sbr.rel (0) target = $region41
    $region40: #{parser_model_forward.1} parent=1 // pred_region
      _
    $region41: #{parser_model_forward.1} parent=1 // pred_fallthru
      _
    // Predicated region
    $region42: #{parser_model_forward.1} parent=1 // pred_check
      _
    $region43: #{parser_model_forward.1} parent=1 // pred_check_branch
      %92 = sbr.rel (0) target = $region45
    $region44: #{parser_model_forward.1} parent=1 // pred_region
      _
    $region45: #{parser_model_forward.1} parent=1 // pred_fallthru
      _
    // Predicated region
    $region46: #{parser_model_forward.1} parent=1 // pred_check
      _
    $region47: #{parser_model_forward.1} parent=1 // pred_check_branch
      %94 = sbr.rel (0) target = $region49
    $region48: #{parser_model_forward.1} parent=1 // pred_region
      _
    $region49: #{parser_model_forward.1} parent=1 // pred_fallthru
      _
    // Predicated region
    $region50: #{parser_model_forward.1} parent=1 // pred_check
      _
    $region51: #{parser_model_forward.1} parent=1 // pred_check_branch
      %96 = sbr.rel (0) target = $region53
    $region52: #{parser_model_forward.1} parent=1 // pred_region
      _
    $region53: #{parser_model_forward.1} parent=1 // pred_fallthru
      _
    // Predicated region
    $region54: #{parser_model_forward.1} parent=1 // pred_check
      _
    $region55: #{parser_model_forward.1} parent=1 // pred_check_branch
      %98 = sbr.rel (0) target = $region57
    $region56: #{parser_model_forward.1} parent=1 // pred_region
      _
    $region57: #{parser_model_forward.1} parent=1 // pred_fallthru
      _
    // Predicated region
    $region58: #{parser_model_forward.1} parent=1 // pred_check
      _
    $region59: #{parser_model_forward.1} parent=1 // pred_check_branch
      %100 = sbr.rel (0) target = $region61
    $region60: #{parser_model_forward.1} parent=1 // pred_region
      _
    $region61: #{parser_model_forward.1} parent=1 // pred_fallthru
      _
    // Predicated region
    $region62: #{parser_model_forward.1} parent=1 // pred_check
      _
    $region63: #{parser_model_forward.1} parent=1 // pred_check_branch
      %102 = sbr.rel (0) target = $region65
    $region64: #{parser_model_forward.1} parent=1 // pred_region
      _
    $region65: #{parser_model_forward.1} parent=1 // pred_fallthru
      _
    // Predicated region
    $region66: #{parser_model_forward.1} parent=1 // pred_check
      _
    $region67: #{parser_model_forward.1} parent=1 // pred_check_branch
      %104 = sbr.rel (0) target = $region69
    $region68: #{parser_model_forward.1} parent=1 // pred_region
      _
    $region69: #{parser_model_forward.1} parent=1 // pred_fallthru
      _
    // Predicated region
    $region70: #{parser_model_forward.1} parent=1 // pred_check
      _
    $region71: #{parser_model_forward.1} parent=1 // pred_check_branch
      %106 = sbr.rel (0) target = $region73
    $region72: #{parser_model_forward.1} parent=1 // pred_region
      _
    $region73: #{parser_model_forward.1} parent=1 // pred_fallthru
      _
    // Predicated region
    $region74: #{parser_model_forward.1} parent=1 // pred_check
      _
    $region75: #{parser_model_forward.1} parent=1 // pred_check_branch
      %108 = sbr.rel (0) target = $region77
    $region76: #{parser_model_forward.1} parent=1 // pred_region
      _
    $region77: #{parser_model_forward.1} parent=1 // pred_fallthru
      _
    // Predicated region
    $region78: #{parser_model_forward.1} parent=1 // pred_check
      _
    $region79: #{parser_model_forward.1} parent=1 // pred_check_branch
      %110 = sbr.rel (0) target = $region81
    $region80: #{parser_model_forward.1} parent=1 // pred_region
      _
    $region81: #{parser_model_forward.1} parent=1 // pred_fallthru
      _
    // Predicated region
    $region82: #{parser_model_forward.1} parent=1 // pred_check
      _
    $region83: #{parser_model_forward.1} parent=1 // pred_check_branch
      %112 = sbr.rel (0) target = $region85
    $region84: #{parser_model_forward.1} parent=1 // pred_region
      _
    $region85: #{parser_model_forward.1} parent=1 // pred_fallthru
      _
    // Predicated region
    $region86: #{parser_model_forward.1} parent=1 // pred_check
      _
    $region87: #{parser_model_forward.1} parent=1 // pred_check_branch
      %114 = sbr.rel (0) target = $region89
    $region88: #{parser_model_forward.1} parent=1 // pred_region
      _
    $region89: #{parser_model_forward.1} parent=1 // pred_fallthru
      _
    // Predicated region
    $region90: #{parser_model_forward.1} parent=1 // pred_check
      _
    $region91: #{parser_model_forward.1} parent=1 // pred_check_branch
      %116 = sbr.rel (0) target = $region93
    $region92: #{parser_model_forward.1} parent=1 // pred_region
      _
    $region93: #{parser_model_forward.1} parent=1 // pred_fallthru
      _
    // Predicated region
    $region94: #{parser_model_forward.1} parent=1 // pred_check
      _
    $region95: #{parser_model_forward.1} parent=1 // pred_check_branch
      %118 = sbr.rel (0) target = $region97
    $region96: #{parser_model_forward.1} parent=1 // pred_region
      _
    $region97: #{parser_model_forward.1} parent=1 // pred_fallthru
      _
    // Predicated region
    $region98: #{parser_model_forward.1} parent=1 // pred_check
      _
    $region99: #{parser_model_forward.1} parent=1 // pred_check_branch
      %120 = sbr.rel (0) target = $region101
    $region100: #{parser_model_forward.1} parent=1 // pred_region
      _
    $region101: #{parser_model_forward.1} parent=1 // pred_fallthru
      _
    // Predicated region
    $region102: #{parser_model_forward.1} parent=1 // pred_check
      _
    $region103: #{parser_model_forward.1} parent=1 // pred_check_branch
      %122 = sbr.rel (0) target = $region105
    $region104: #{parser_model_forward.1} parent=1 // pred_region
      _
    $region105: #{parser_model_forward.1} parent=1 // pred_fallthru
      _
    // Predicated region
    $region106: #{parser_model_forward.1} parent=1 // pred_check
      _
    $region107: #{parser_model_forward.1} parent=1 // pred_check_branch
      %124 = sbr.rel (0) target = $region109
    $region108: #{parser_model_forward.1} parent=1 // pred_region
      _
    $region109: #{parser_model_forward.1} parent=1 // pred_fallthru
      _
    // Predicated region
    $region110: #{parser_model_forward.1} parent=1 // pred_check
      _
    $region111: #{parser_model_forward.1} parent=1 // pred_check_branch
      %126 = sbr.rel (0) target = $region113
    $region112: #{parser_model_forward.1} parent=1 // pred_region
      _
    $region113: #{parser_model_forward.1} parent=1 // pred_fallthru
      _
    %v128 = vld [vmem:[%s1] sm:$0xff]
    %v129 = vld [vmem:[%s1 + $0x8] sm:$0xff]
    %v130 = vld [vmem:[%s3] sm:$0xff]
    %v131 = vld [vmem:[%s3 + $0x8] sm:$0xff]
    %v132 = vlaneseq
    %v133 = vand.u32 %v132, 127
    %134 = vset.pattern.permute.xlu0 0
    %135 = vperm.xlu0 %134, %v128
    %v136 = vpop.permute.xlu0 %135
    %137 = vset.pattern.permute.xlu0 0
    %138 = vperm.xlu0 %137, %v129
    %v139 = vpop.permute.xlu0 %138
    %vm140 = vcmp.eq.s32.totalorder %v133, %v136
    %vm141 = vcmp.eq.s32.totalorder %v133, %v139
    %v142 = vadd.s32 %v130, 64
    %v143 = vadd.s32 %v131, 64
    %144 = vset.pattern.permute.xlu0 0
    %145 = vperm.xlu0 %144, %v142
    %v146 = vpop.permute.xlu0 %145
    %147 = vset.pattern.permute.xlu0 0
    %148 = vperm.xlu0 %147, %v143
    %v149 = vpop.permute.xlu0 %148
    %vm150 = vcmp.eq.s32.totalorder %v133, %v146
    %vm151 = vcmp.eq.s32.totalorder %v133, %v149
    %vm152 = vmor %vm140, %vm150
    %vm153 = vmor %vm141, %vm151
    %v154 = vsel %vm152, 1.0, 0.0
    %v155 = vsel %vm153, 1.0, 0.0
    %v156 = vpack.c.bf16 %v155, %v154
    %v157 = vld [vmem:[%s13] sm:$0xf]
    %v158 = vld [vmem:[%s13 + $0x4] sm:$0xf]
    %v159 = vld [vmem:[%s13 + $0x8] sm:$0xf]
    %v160 = vld [vmem:[%s13 + $0xc] sm:$0xf]
    %v161 = vld [vmem:[%s13 + $0x10] sm:$0xf]
    %v162 = vld [vmem:[%s13 + $0x14] sm:$0xf]
    %v163 = vld [vmem:[%s13 + $0x18] sm:$0xf]
    %v164 = vld [vmem:[%s13 + $0x1c] sm:$0xf]
    %v165 = vld [vmem:[%s13 + $0x20] sm:$0xf]
    %v166 = vld [vmem:[%s13 + $0x24] sm:$0xf]
    %v167 = vld [vmem:[%s13 + $0x28] sm:$0xf]
    %v168 = vld [vmem:[%s13 + $0x2c] sm:$0xf]
    %v169 = vld [vmem:[%s13 + $0x30] sm:$0xf]
    %v170 = vld [vmem:[%s13 + $0x34] sm:$0xf]
    %v171 = vld [vmem:[%s13 + $0x38] sm:$0xf]
    %v172 = vld [vmem:[%s13 + $0x3c] sm:$0xf]
    %v189 = vunpack.c.l.b16 %v157
    %v190 = vunpack.c.l.b16 %v158
    %v191 = vunpack.c.l.b16 %v159
    %v192 = vunpack.c.l.b16 %v160
    %v193 = vunpack.c.l.b16 %v161
    %v194 = vunpack.c.l.b16 %v162
    %v195 = vunpack.c.l.b16 %v163
    %v196 = vunpack.c.l.b16 %v164
    %v197 = vunpack.c.l.b16 %v165
    %v198 = vunpack.c.l.b16 %v166
    %v199 = vunpack.c.l.b16 %v167
    %v200 = vunpack.c.l.b16 %v168
    %v201 = vunpack.c.l.b16 %v169
    %v202 = vunpack.c.l.b16 %v170
    %v203 = vunpack.c.l.b16 %v171
    %v204 = vunpack.c.l.b16 %v172
    %v205 = vpack.c.b16 %v190, %v189
    %v206 = vpack.c.b16 %v192, %v191
    %v207 = vpack.c.b16 %v194, %v193
    %v208 = vpack.c.b16 %v196, %v195
    %v209 = vpack.c.b16 %v198, %v197
    %v210 = vpack.c.b16 %v200, %v199
    %v211 = vpack.c.b16 %v202, %v201
    %v212 = vpack.c.b16 %v204, %v203
    %221 = vmatprep.subr.bf16.mxu0 0
    %222 = vmatpush1.bf16.msra.mxu0 %v205
    %223 = vmatprep.subr.bf16.mxu0 0
    %224 = vmatpush1.bf16.msra.mxu0 %v206
    %225 = vmatprep.subr.bf16.mxu0 0
    %226 = vmatpush1.bf16.msra.mxu0 %v207
    %227 = vmatprep.subr.bf16.mxu0 0
    %228 = vmatpush1.bf16.msra.mxu0 %v208
    %229 = vmatprep.subr.bf16.mxu0 0
    %230 = vmatpush1.bf16.msra.mxu0 %v209
    %231 = vmatprep.subr.bf16.mxu0 0
    %232 = vmatpush1.bf16.msra.mxu0 %v210
    %233 = vmatprep.subr.bf16.mxu0 0
    %234 = vmatpush1.bf16.msra.mxu0 %v211
    %235 = vmatprep.subr.bf16.mxu0 0
    %236 = vmatpush1.bf16.msra.mxu0 %v212
    %237 = vmatprep.subr.bf16.mxu0 0
    %238 = vmatpush1.bf16.msra.mxu0 0
    %239 = vmatprep.subr.bf16.mxu0 0
    %240 = vmatpush1.bf16.msra.mxu0 0
    %241 = vmatprep.subr.bf16.mxu0 0
    %242 = vmatpush1.bf16.msra.mxu0 0
    %243 = vmatprep.subr.bf16.mxu0 0
    %244 = vmatpush1.bf16.msra.mxu0 0
    %245 = vmatprep.subr.bf16.mxu0 0
    %246 = vmatpush1.bf16.msra.mxu0 0
    %247 = vmatprep.subr.bf16.mxu0 0
    %248 = vmatpush1.bf16.msra.mxu0 0
    %249 = vmatprep.subr.bf16.mxu0 0
    %250 = vmatpush1.bf16.msra.mxu0 0
    %251 = vmatprep.subr.bf16.mxu0 0
    %252 = vmatpush1.bf16.msra.mxu0 0
    %253 = vmatprep.mubr.bf16.mxu0 0
    %254 = vmatmul.mubr.bf16.gmra.mrb[0].mxu0 %v156
    %v255 = vpop.f32.mrb[0].mxu0
    %v256 = vadd.f32 0.0, %v255
    %v257 = vpop.f32.mrb[0].mxu0
    %v258 = vpop.f32.mrb[0].mxu0
    %v259 = vadd.f32 0.0, %v258
    %v260 = vpop.f32.mrb[0].mxu0
    %261 = vdwg.mxu0
    %v262 = vld [vmem:[%s15] sm:$0xff]
    %v263 = vadd.f32 %v256, %v262
    %v264 = vadd.f32 %v259, %v262
    %v265 = vld [vmem:[%s17] sm:$0x1]
    %v266 = vld [vmem:[%s19] sm:$0x1]
    %vm267 = vcmask 261120
    %v268 = vsel %vm267, %v263, 0.0
    %269 = vadd.xlane.f32.xlu0 %v268
    %v270 = vpop.xlane.xlu0 %269
    %v271 = vsel %vm267, %v264, 0.0
    %272 = vadd.xlane.f32.xlu0 %v271
    %v273 = vpop.xlane.xlu0 %272
    %v274 = vrcp.pop 32.0
    %v275 = vmul.f32 %v270, %v274
    %v276 = vmul.f32 %v273, %v274
    %v277 = vsub.f32 %v263, %v275
    %v278 = vsub.f32 %v264, %v276
    %v279 = vmul.f32 %v277, %v277
    %v280 = vmul.f32 %v278, %v278
    %v281 = vsel %vm267, %v279, 0.0
    %282 = vadd.xlane.f32.xlu0 %v281
    %v283 = vpop.xlane.xlu0 %282
    %v284 = vsel %vm267, %v280, 0.0
    %285 = vadd.xlane.f32.xlu0 %v284
    %v286 = vpop.xlane.xlu0 %285
    %v287 = vmul.f32 %v283, %v274
    %v288 = vmul.f32 %v286, %v274
    %v289 = vadd.f32 %v287, 1e-12
    %v290 = vadd.f32 %v288, 1e-12
    %v291 = vrsqrt.pop %v289
    %v292 = vrsqrt.pop %v290
    %v293 = vmul.f32 %v277, %v291
    %v294 = vmul.f32 %v278, %v292
    %v296 = vlaneseq
    %v297 = vshrl.u32 %v296, 7
    %v298 = vsub.s32 0, %v297
    %v299 = vrot.slane %v265, %v298
    %v301 = vmul.f32 %v293, %v299
    %v302 = vmul.f32 %v294, %v299
    %v304 = vlaneseq
    %v305 = vshrl.u32 %v304, 7
    %v306 = vsub.s32 0, %v305
    %v307 = vrot.slane %v266, %v306
    %v309 = vadd.f32 %v301, %v307
    %v310 = vadd.f32 %v302, %v307
    %v311 = vld [vmem:[%s5] sm:$0x3]
    %v312 = vsub.f32 1.0, %v311
    %v313 = vmul.f32 %v312, -1e+09
    %v316 = vunpack.c.l.s4 1966171168
    %v317 = vunpack.c.0.s8 %v316
    %v318 = vlaneseq
    %v319 = vshrl.u32 %v318, 7
    %v320 = vsub.s32 %v317, %v319
    %v321 = vrot.slane %v313, %v320
    %v322 = vcombine.high %v321, %v321
    %v324 = vunpack.c.l.s4 1966171168
    %v325 = vunpack.c.0.s8 %v324
    %v326 = vlaneseq
    %v327 = vshrl.u32 %v326, 7
    %v328 = vsub.s32 %v325, %v327
    %v329 = vrot.slane %v321, %v328
    %v331 = vunpack.c.l.s4 1966171168
    %v332 = vunpack.c.0.s8 %v331
    %v333 = vlaneseq
    %v334 = vshrl.u32 %v333, 7
    %v335 = vsub.s32 %v332, %v334
    %v336 = vrot.slane %v322, %v335
    %v337 = vlaneseq
    %v338 = vshrl.u32 %v337, 7
    %v339 = vsub.s32 0, %v338
    %v340 = vrot.slane %v329, %v339
    %v341 = vlaneseq
    %v342 = vshrl.u32 %v341, 7
    %v343 = vsub.s32 0, %v342
    %v344 = vrot.slane %v336, %v343
    %v347 = vpack.c.bf16 %v310, %v309
    %v348 = vld [vmem:[%s21] sm:$0xf]
    %v349 = vld [vmem:[%s21 + $0x4] sm:$0xf]
    %v350 = vld [vmem:[%s21 + $0x8] sm:$0xf]
    %v351 = vld [vmem:[%s21 + $0xc] sm:$0xf]
    %v352 = vld [vmem:[%s23] sm:$0x1]
    %v354 = vlaneseq
    %v355 = vshrl.u32 %v354, 7
    %v356 = vsub.s32 0, %v355
    %v357 = vrot.slane %v352, %v356
    %v363 = vunpack.c.l.b16 %v348
    %v364 = vunpack.c.l.b16 %v349
    %v365 = vunpack.c.l.b16 %v350
    %v366 = vunpack.c.l.b16 %v351
    %v367 = vpack.c.b16 %v364, %v363
    %v368 = vpack.c.b16 %v366, %v365
    %v372 = vsel %vm267, %v347, 0
    %374 = vmatprep.subr.bf16.mxu0 0
    %375 = vmatpush1.bf16.msra.mxu0 %v367
    %376 = vmatprep.subr.bf16.mxu0 0
    %377 = vmatpush1.bf16.msra.mxu0 %v368
    %378 = vmatprep.subr.bf16.mxu0 0
    %379 = vmatpush1.bf16.msra.mxu0 0
    %380 = vmatprep.subr.bf16.mxu0 0
    %381 = vmatpush1.bf16.msra.mxu0 0
    %382 = vmatprep.subr.bf16.mxu0 0
    %383 = vmatpush1.bf16.msra.mxu0 0
    %384 = vmatprep.subr.bf16.mxu0 0
    %385 = vmatpush1.bf16.msra.mxu0 0
    %386 = vmatprep.subr.bf16.mxu0 0
    %387 = vmatpush1.bf16.msra.mxu0 0
    %388 = vmatprep.subr.bf16.mxu0 0
    %389 = vmatpush1.bf16.msra.mxu0 0
    %390 = vmatprep.subr.bf16.mxu0 0
    %391 = vmatpush1.bf16.msra.mxu0 0
    %392 = vmatprep.subr.bf16.mxu0 0
    %393 = vmatpush1.bf16.msra.mxu0 0
    %394 = vmatprep.subr.bf16.mxu0 0
    %395 = vmatpush1.bf16.msra.mxu0 0
    %396 = vmatprep.subr.bf16.mxu0 0
    %397 = vmatpush1.bf16.msra.mxu0 0
    %398 = vmatprep.subr.bf16.mxu0 0
    %399 = vmatpush1.bf16.msra.mxu0 0
    %400 = vmatprep.subr.bf16.mxu0 0
    %401 = vmatpush1.bf16.msra.mxu0 0
    %402 = vmatprep.subr.bf16.mxu0 0
    %403 = vmatpush1.bf16.msra.mxu0 0
    %404 = vmatprep.subr.bf16.mxu0 0
    %405 = vmatpush1.bf16.msra.mxu0 0
    %406 = vmatprep.mubr.bf16.mxu0 0
    %407 = vmatmul.mubr.bf16.gmra.mrb[0].mxu0 %v372
    %v408 = vpop.f32.mrb[0].mxu0
    %v409 = vadd.f32 %v357, %v408
    %v410 = vpop.f32.mrb[0].mxu0
    %v411 = vpop.f32.mrb[0].mxu0
    %v412 = vadd.f32 %v357, %v411
    %v413 = vpop.f32.mrb[0].mxu0
    %414 = vdwg.mxu0
    %417 = vrot.lane.b32.xlu0 %v409, 112
    %v418 = vpop.permute.xlu0 %417
    %419 = vrot.lane.b32.xlu0 %v412, 112
    %v420 = vpop.permute.xlu0 %419
    %v423 = vpack.c.bf16 %v409, %v409
    %v424 = vpack.c.bf16 %v412, %v412
    %v425 = vpack.c.bf16 %v418, %v418
    %v426 = vpack.c.bf16 %v420, %v420
    %428 = vrot.lane.b32.xlu0 %v423, 96
    %v429 = vpop.permute.xlu0 %428
    %vm430 = vcmask 130048
    %v432 = vsel %vm430, %v423, 0
    %v435 = vsel %vm430, %v429, 0
    %437 = vmatprep.subr.bf16.mxu0 0
    %438 = vmatpush1.bf16.xpose.msra.mxu0 %v435
    %439 = vmatprep.subr.bf16.mxu0 0
    %440 = vmatpush1.bf16.xpose.msra.mxu0 0
    %441 = vmatprep.subr.bf16.mxu0 0
    %442 = vmatpush1.bf16.xpose.msra.mxu0 0
    %443 = vmatprep.subr.bf16.mxu0 0
    %444 = vmatpush1.bf16.xpose.msra.mxu0 0
    %445 = vmatprep.subr.bf16.mxu0 0
    %446 = vmatpush1.bf16.xpose.msra.mxu0 0
    %447 = vmatprep.subr.bf16.mxu0 0
    %448 = vmatpush1.bf16.xpose.msra.mxu0 0
    %449 = vmatprep.subr.bf16.mxu0 0
    %450 = vmatpush1.bf16.xpose.msra.mxu0 0
    %451 = vmatprep.subr.bf16.mxu0 0
    %452 = vmatpush1.bf16.xpose.msra.mxu0 0
    %453 = vmatprep.subr.bf16.mxu0 0
    %454 = vmatpush1.bf16.xpose.msra.mxu0 0
    %455 = vmatprep.subr.bf16.mxu0 0
    %456 = vmatpush1.bf16.xpose.msra.mxu0 0
    %457 = vmatprep.subr.bf16.mxu0 0
    %458 = vmatpush1.bf16.xpose.msra.mxu0 0
    %459 = vmatprep.subr.bf16.mxu0 0
    %460 = vmatpush1.bf16.xpose.msra.mxu0 0
    %461 = vmatprep.subr.bf16.mxu0 0
    %462 = vmatpush1.bf16.xpose.msra.mxu0 0
    %463 = vmatprep.subr.bf16.mxu0 0
    %464 = vmatpush1.bf16.xpose.msra.mxu0 0
    %465 = vmatprep.subr.bf16.mxu0 0
    %466 = vmatpush1.bf16.xpose.msra.mxu0 0
    %467 = vmatprep.subr.bf16.mxu0 0
    %468 = vmatpush1.bf16.xpose.msra.mxu0 0
    %469 = vmatprep.mubr.bf16.mxu0 0
    %470 = vmatmul.mubr.bf16.gmra.mrb[0].mxu0 %v432
    %v471 = vpop.f32.mrb[0].mxu0
    %v472 = vadd.f32 0.0, %v471
    %v473 = vpop.f32.mrb[0].mxu0
    %v474 = vpop.f32.mrb[0].mxu0
    %v475 = vpop.f32.mrb[0].mxu0
    %476 = vdwg.mxu0
    %478 = vrot.lane.b32.xlu0 %v424, 96
    %v479 = vpop.permute.xlu0 %478
    %v481 = vsel %vm430, %v424, 0
    %v484 = vsel %vm430, %v479, 0
    %486 = vmatprep.subr.bf16.mxu0 0
    %487 = vmatpush1.bf16.xpose.msra.mxu0 %v484
    %488 = vmatprep.subr.bf16.mxu0 0
    %489 = vmatpush1.bf16.xpose.msra.mxu0 0
    %490 = vmatprep.subr.bf16.mxu0 0
    %491 = vmatpush1.bf16.xpose.msra.mxu0 0
    %492 = vmatprep.subr.bf16.mxu0 0
    %493 = vmatpush1.bf16.xpose.msra.mxu0 0
    %494 = vmatprep.subr.bf16.mxu0 0
    %495 = vmatpush1.bf16.xpose.msra.mxu0 0
    %496 = vmatprep.subr.bf16.mxu0 0
    %497 = vmatpush1.bf16.xpose.msra.mxu0 0
    %498 = vmatprep.subr.bf16.mxu0 0
    %499 = vmatpush1.bf16.xpose.msra.mxu0 0
    %500 = vmatprep.subr.bf16.mxu0 0
    %501 = vmatpush1.bf16.xpose.msra.mxu0 0
    %502 = vmatprep.subr.bf16.mxu0 0
    %503 = vmatpush1.bf16.xpose.msra.mxu0 0
    %504 = vmatprep.subr.bf16.mxu0 0
    %505 = vmatpush1.bf16.xpose.msra.mxu0 0
    %506 = vmatprep.subr.bf16.mxu0 0
    %507 = vmatpush1.bf16.xpose.msra.mxu0 0
    %508 = vmatprep.subr.bf16.mxu0 0
    %509 = vmatpush1.bf16.xpose.msra.mxu0 0
    %510 = vmatprep.subr.bf16.mxu0 0
    %511 = vmatpush1.bf16.xpose.msra.mxu0 0
    %512 = vmatprep.subr.bf16.mxu0 0
    %513 = vmatpush1.bf16.xpose.msra.mxu0 0
    %514 = vmatprep.subr.bf16.mxu0 0
    %515 = vmatpush1.bf16.xpose.msra.mxu0 0
    %516 = vmatprep.subr.bf16.mxu0 0
    %517 = vmatpush1.bf16.xpose.msra.mxu0 0
    %518 = vmatprep.mubr.bf16.mxu0 0
    %519 = vmatmul.mubr.bf16.gmra.mrb[0].mxu0 %v481
    %v520 = vpop.f32.mrb[0].mxu0
    %v521 = vadd.f32 0.0, %v520
    %v522 = vpop.f32.mrb[0].mxu0
    %v523 = vpop.f32.mrb[0].mxu0
    %v524 = vpop.f32.mrb[0].mxu0
    %525 = vdwg.mxu0
    %527 = vrot.lane.b32.xlu0 %v425, 96
    %v528 = vpop.permute.xlu0 %527
    %v530 = vsel %vm430, %v425, 0
    %v533 = vsel %vm430, %v528, 0
    %535 = vmatprep.subr.bf16.mxu0 0
    %536 = vmatpush1.bf16.xpose.msra.mxu0 %v533
    %537 = vmatprep.subr.bf16.mxu0 0
    %538 = vmatpush1.bf16.xpose.msra.mxu0 0
    %539 = vmatprep.subr.bf16.mxu0 0
    %540 = vmatpush1.bf16.xpose.msra.mxu0 0
    %541 = vmatprep.subr.bf16.mxu0 0
    %542 = vmatpush1.bf16.xpose.msra.mxu0 0
    %543 = vmatprep.subr.bf16.mxu0 0
    %544 = vmatpush1.bf16.xpose.msra.mxu0 0
    %545 = vmatprep.subr.bf16.mxu0 0
    %546 = vmatpush1.bf16.xpose.msra.mxu0 0
    %547 = vmatprep.subr.bf16.mxu0 0
    %548 = vmatpush1.bf16.xpose.msra.mxu0 0
    %549 = vmatprep.subr.bf16.mxu0 0
    %550 = vmatpush1.bf16.xpose.msra.mxu0 0
    %551 = vmatprep.subr.bf16.mxu0 0
    %552 = vmatpush1.bf16.xpose.msra.mxu0 0
    %553 = vmatprep.subr.bf16.mxu0 0
    %554 = vmatpush1.bf16.xpose.msra.mxu0 0
    %555 = vmatprep.subr.bf16.mxu0 0
    %556 = vmatpush1.bf16.xpose.msra.mxu0 0
    %557 = vmatprep.subr.bf16.mxu0 0
    %558 = vmatpush1.bf16.xpose.msra.mxu0 0
    %559 = vmatprep.subr.bf16.mxu0 0
    %560 = vmatpush1.bf16.xpose.msra.mxu0 0
    %561 = vmatprep.subr.bf16.mxu0 0
    %562 = vmatpush1.bf16.xpose.msra.mxu0 0
    %563 = vmatprep.subr.bf16.mxu0 0
    %564 = vmatpush1.bf16.xpose.msra.mxu0 0
    %565 = vmatprep.subr.bf16.mxu0 0
    %566 = vmatpush1.bf16.xpose.msra.mxu0 0
    %567 = vmatprep.mubr.bf16.mxu0 0
    %568 = vmatmul.mubr.bf16.gmra.mrb[0].mxu0 %v530
    %v569 = vpop.f32.mrb[0].mxu0
    %v570 = vadd.f32 0.0, %v569
    %v571 = vpop.f32.mrb[0].mxu0
    %v572 = vpop.f32.mrb[0].mxu0
    %v573 = vpop.f32.mrb[0].mxu0
    %574 = vdwg.mxu0
    %576 = vrot.lane.b32.xlu0 %v426, 96
    %v577 = vpop.permute.xlu0 %576
    %v579 = vsel %vm430, %v426, 0
    %v582 = vsel %vm430, %v577, 0
    %584 = vmatprep.subr.bf16.mxu0 0
    %585 = vmatpush1.bf16.xpose.msra.mxu0 %v582
    %586 = vmatprep.subr.bf16.mxu0 0
    %587 = vmatpush1.bf16.xpose.msra.mxu0 0
    %588 = vmatprep.subr.bf16.mxu0 0
    %589 = vmatpush1.bf16.xpose.msra.mxu0 0
    %590 = vmatprep.subr.bf16.mxu0 0
    %591 = vmatpush1.bf16.xpose.msra.mxu0 0
    %592 = vmatprep.subr.bf16.mxu0 0
    %593 = vmatpush1.bf16.xpose.msra.mxu0 0
    %594 = vmatprep.subr.bf16.mxu0 0
    %595 = vmatpush1.bf16.xpose.msra.mxu0 0
    %596 = vmatprep.subr.bf16.mxu0 0
    %597 = vmatpush1.bf16.xpose.msra.mxu0 0
    %598 = vmatprep.subr.bf16.mxu0 0
    %599 = vmatpush1.bf16.xpose.msra.mxu0 0
    %600 = vmatprep.subr.bf16.mxu0 0
    %601 = vmatpush1.bf16.xpose.msra.mxu0 0
    %602 = vmatprep.subr.bf16.mxu0 0
    %603 = vmatpush1.bf16.xpose.msra.mxu0 0
    %604 = vmatprep.subr.bf16.mxu0 0
    %605 = vmatpush1.bf16.xpose.msra.mxu0 0
    %606 = vmatprep.subr.bf16.mxu0 0
    %607 = vmatpush1.bf16.xpose.msra.mxu0 0
    %608 = vmatprep.subr.bf16.mxu0 0
    %609 = vmatpush1.bf16.xpose.msra.mxu0 0
    %610 = vmatprep.subr.bf16.mxu0 0
    %611 = vmatpush1.bf16.xpose.msra.mxu0 0
    %612 = vmatprep.subr.bf16.mxu0 0
    %613 = vmatpush1.bf16.xpose.msra.mxu0 0
    %614 = vmatprep.subr.bf16.mxu0 0
    %615 = vmatpush1.bf16.xpose.msra.mxu0 0
    %616 = vmatprep.mubr.bf16.mxu0 0
    %617 = vmatmul.mubr.bf16.gmra.mrb[0].mxu0 %v579
    %v618 = vpop.f32.mrb[0].mxu0
    %v619 = vadd.f32 0.0, %v618
    %v620 = vpop.f32.mrb[0].mxu0
    %v621 = vpop.f32.mrb[0].mxu0
    %v622 = vpop.f32.mrb[0].mxu0
    %623 = vdwg.mxu0
    %v624 = vmul.f32 %v472, 0.25
    %v625 = vmul.f32 %v521, 0.25
    %v626 = vmul.f32 %v570, 0.25
    %v627 = vmul.f32 %v619, 0.25
    %v628 = vadd.f32 %v624, %v340
    %v629 = vadd.f32 %v625, %v344
    %v630 = vadd.f32 %v626, %v340
    %v631 = vadd.f32 %v627, %v344
    %vm632 = vcmask 64512
    %v633 = vsel %vm632, %v628, -inf
    %634 = vmax.xlane.f32.xlu0 %v633
    %v635 = vpop.xlane.xlu0 %634
    %v636 = vsel %vm632, %v629, -inf
    %637 = vmax.xlane.f32.xlu0 %v636
    %v638 = vpop.xlane.xlu0 %637
    %v639 = vsel %vm632, %v630, -inf
    %640 = vmax.xlane.f32.xlu0 %v639
    %v641 = vpop.xlane.xlu0 %640
    %v642 = vsel %vm632, %v631, -inf
    %643 = vmax.xlane.f32.xlu0 %v642
    %v644 = vpop.xlane.xlu0 %643
    %v645 = vsub.f32 %v628, %v635
    %v646 = vsub.f32 %v629, %v638
    %v647 = vsub.f32 %v630, %v641
    %v648 = vsub.f32 %v631, %v644
    %v649 = vmul.f32 %v645, 1.442695
    %v650 = vpow.pop %v649
    %v651 = vmul.f32 %v646, 1.442695
    %v652 = vpow.pop %v651
    %v653 = vmul.f32 %v647, 1.442695
    %v654 = vpow.pop %v653
    %v655 = vmul.f32 %v648, 1.442695
    %v656 = vpow.pop %v655
    %v657 = vsel %vm632, %v650, 0.0
    %658 = vadd.xlane.f32.xlu0 %v657
    %v659 = vpop.xlane.xlu0 %658
    %v660 = vsel %vm632, %v652, 0.0
    %661 = vadd.xlane.f32.xlu0 %v660
    %v662 = vpop.xlane.xlu0 %661
    %v663 = vsel %vm632, %v654, 0.0
    %664 = vadd.xlane.f32.xlu0 %v663
    %v665 = vpop.xlane.xlu0 %664
    %v666 = vsel %vm632, %v656, 0.0
    %667 = vadd.xlane.f32.xlu0 %v666
    %v668 = vpop.xlane.xlu0 %667
    %v669 = vrcp.pop %v659
    %v670 = vrcp.pop %v662
    %v671 = vrcp.pop %v665
    %v672 = vrcp.pop %v668
    %v673 = vmul.f32 %v650, %v669
    %v674 = vmul.f32 %v652, %v670
    %v675 = vmul.f32 %v654, %v671
    %v676 = vmul.f32 %v656, %v672
    %v677 = vpack.c.bf16 %v673, %v673
    %v678 = vpack.c.bf16 %v674, %v674
    %v679 = vpack.c.bf16 %v675, %v675
    %v680 = vpack.c.bf16 %v676, %v676
    %681 = vrot.lane.b32.xlu0 %v423, 64
    %v682 = vpop.permute.xlu0 %681
    %v684 = vsel %vm632, %v677, 0
    %vm686 = vcmask 1043456
    %v688 = vsel %vm686, %v682, 0
    %690 = vmatprep.subr.bf16.mxu0 0
    %691 = vmatpush1.bf16.msra.mxu0 %v688
    %692 = vmatprep.subr.bf16.mxu0 0
    %693 = vmatpush1.bf16.msra.mxu0 0
    %694 = vmatprep.subr.bf16.mxu0 0
    %695 = vmatpush1.bf16.msra.mxu0 0
    %696 = vmatprep.subr.bf16.mxu0 0
    %697 = vmatpush1.bf16.msra.mxu0 0
    %698 = vmatprep.subr.bf16.mxu0 0
    %699 = vmatpush1.bf16.msra.mxu0 0
    %700 = vmatprep.subr.bf16.mxu0 0
    %701 = vmatpush1.bf16.msra.mxu0 0
    %702 = vmatprep.subr.bf16.mxu0 0
    %703 = vmatpush1.bf16.msra.mxu0 0
    %704 = vmatprep.subr.bf16.mxu0 0
    %705 = vmatpush1.bf16.msra.mxu0 0
    %706 = vmatprep.subr.bf16.mxu0 0
    %707 = vmatpush1.bf16.msra.mxu0 0
    %708 = vmatprep.subr.bf16.mxu0 0
    %709 = vmatpush1.bf16.msra.mxu0 0
    %710 = vmatprep.subr.bf16.mxu0 0
    %711 = vmatpush1.bf16.msra.mxu0 0
    %712 = vmatprep.subr.bf16.mxu0 0
    %713 = vmatpush1.bf16.msra.mxu0 0
    %714 = vmatprep.subr.bf16.mxu0 0
    %715 = vmatpush1.bf16.msra.mxu0 0
    %716 = vmatprep.subr.bf16.mxu0 0
    %717 = vmatpush1.bf16.msra.mxu0 0
    %718 = vmatprep.subr.bf16.mxu0 0
    %719 = vmatpush1.bf16.msra.mxu0 0
    %720 = vmatprep.subr.bf16.mxu0 0
    %721 = vmatpush1.bf16.msra.mxu0 0
    %722 = vmatprep.mubr.bf16.mxu0 0
    %723 = vmatmul.mubr.bf16.gmra.mrb[0].mxu0 %v684
    %v724 = vpop.f32.mrb[0].mxu0
    %v725 = vadd.f32 0.0, %v724
    %v726 = vpop.f32.mrb[0].mxu0
    %v727 = vpop.f32.mrb[0].mxu0
    %v728 = vpop.f32.mrb[0].mxu0
    %729 = vdwg.mxu0
    %730 = vrot.lane.b32.xlu0 %v424, 64
    %v731 = vpop.permute.xlu0 %730
    %v733 = vsel %vm632, %v678, 0
    %v736 = vsel %vm686, %v731, 0
    %738 = vmatprep.subr.bf16.mxu0 0
    %739 = vmatpush1.bf16.msra.mxu0 %v736
    %740 = vmatprep.subr.bf16.mxu0 0
    %741 = vmatpush1.bf16.msra.mxu0 0
    %742 = vmatprep.subr.bf16.mxu0 0
    %743 = vmatpush1.bf16.msra.mxu0 0
    %744 = vmatprep.subr.bf16.mxu0 0
    %745 = vmatpush1.bf16.msra.mxu0 0
    %746 = vmatprep.subr.bf16.mxu0 0
    %747 = vmatpush1.bf16.msra.mxu0 0
    %748 = vmatprep.subr.bf16.mxu0 0
    %749 = vmatpush1.bf16.msra.mxu0 0
    %750 = vmatprep.subr.bf16.mxu0 0
    %751 = vmatpush1.bf16.msra.mxu0 0
    %752 = vmatprep.subr.bf16.mxu0 0
    %753 = vmatpush1.bf16.msra.mxu0 0
    %754 = vmatprep.subr.bf16.mxu0 0
    %755 = vmatpush1.bf16.msra.mxu0 0
    %756 = vmatprep.subr.bf16.mxu0 0
    %757 = vmatpush1.bf16.msra.mxu0 0
    %758 = vmatprep.subr.bf16.mxu0 0
    %759 = vmatpush1.bf16.msra.mxu0 0
    %760 = vmatprep.subr.bf16.mxu0 0
    %761 = vmatpush1.bf16.msra.mxu0 0
    %762 = vmatprep.subr.bf16.mxu0 0
    %763 = vmatpush1.bf16.msra.mxu0 0
    %764 = vmatprep.subr.bf16.mxu0 0
    %765 = vmatpush1.bf16.msra.mxu0 0
    %766 = vmatprep.subr.bf16.mxu0 0
    %767 = vmatpush1.bf16.msra.mxu0 0
    %768 = vmatprep.subr.bf16.mxu0 0
    %769 = vmatpush1.bf16.msra.mxu0 0
    %770 = vmatprep.mubr.bf16.mxu0 0
    %771 = vmatmul.mubr.bf16.gmra.mrb[0].mxu0 %v733
    %v772 = vpop.f32.mrb[0].mxu0
    %v773 = vadd.f32 0.0, %v772
    %v774 = vpop.f32.mrb[0].mxu0
    %v775 = vpop.f32.mrb[0].mxu0
    %v776 = vpop.f32.mrb[0].mxu0
    %777 = vdwg.mxu0
    %778 = vrot.lane.b32.xlu0 %v425, 64
    %v779 = vpop.permute.xlu0 %778
    %v781 = vsel %vm632, %v679, 0
    %v784 = vsel %vm686, %v779, 0
    %786 = vmatprep.subr.bf16.mxu0 0
    %787 = vmatpush1.bf16.msra.mxu0 %v784
    %788 = vmatprep.subr.bf16.mxu0 0
    %789 = vmatpush1.bf16.msra.mxu0 0
    %790 = vmatprep.subr.bf16.mxu0 0
    %791 = vmatpush1.bf16.msra.mxu0 0
    %792 = vmatprep.subr.bf16.mxu0 0
    %793 = vmatpush1.bf16.msra.mxu0 0
    %794 = vmatprep.subr.bf16.mxu0 0
    %795 = vmatpush1.bf16.msra.mxu0 0
    %796 = vmatprep.subr.bf16.mxu0 0
    %797 = vmatpush1.bf16.msra.mxu0 0
    %798 = vmatprep.subr.bf16.mxu0 0
    %799 = vmatpush1.bf16.msra.mxu0 0
    %800 = vmatprep.subr.bf16.mxu0 0
    %801 = vmatpush1.bf16.msra.mxu0 0
    %802 = vmatprep.subr.bf16.mxu0 0
    %803 = vmatpush1.bf16.msra.mxu0 0
    %804 = vmatprep.subr.bf16.mxu0 0
    %805 = vmatpush1.bf16.msra.mxu0 0
    %806 = vmatprep.subr.bf16.mxu0 0
    %807 = vmatpush1.bf16.msra.mxu0 0
    %808 = vmatprep.subr.bf16.mxu0 0
    %809 = vmatpush1.bf16.msra.mxu0 0
    %810 = vmatprep.subr.bf16.mxu0 0
    %811 = vmatpush1.bf16.msra.mxu0 0
    %812 = vmatprep.subr.bf16.mxu0 0
    %813 = vmatpush1.bf16.msra.mxu0 0
    %814 = vmatprep.subr.bf16.mxu0 0
    %815 = vmatpush1.bf16.msra.mxu0 0
    %816 = vmatprep.subr.bf16.mxu0 0
    %817 = vmatpush1.bf16.msra.mxu0 0
    %818 = vmatprep.mubr.bf16.mxu0 0
    %819 = vmatmul.mubr.bf16.gmra.mrb[0].mxu0 %v781
    %v820 = vpop.f32.mrb[0].mxu0
    %v821 = vadd.f32 0.0, %v820
    %v822 = vpop.f32.mrb[0].mxu0
    %v823 = vpop.f32.mrb[0].mxu0
    %v824 = vpop.f32.mrb[0].mxu0
    %825 = vdwg.mxu0
    %826 = vrot.lane.b32.xlu0 %v426, 64
    %v827 = vpop.permute.xlu0 %826
    %v829 = vsel %vm632, %v680, 0
    %v832 = vsel %vm686, %v827, 0
    %834 = vmatprep.subr.bf16.mxu0 0
    %835 = vmatpush1.bf16.msra.mxu0 %v832
    %836 = vmatprep.subr.bf16.mxu0 0
    %837 = vmatpush1.bf16.msra.mxu0 0
    %838 = vmatprep.subr.bf16.mxu0 0
    %839 = vmatpush1.bf16.msra.mxu0 0
    %840 = vmatprep.subr.bf16.mxu0 0
    %841 = vmatpush1.bf16.msra.mxu0 0
    %842 = vmatprep.subr.bf16.mxu0 0
    %843 = vmatpush1.bf16.msra.mxu0 0
    %844 = vmatprep.subr.bf16.mxu0 0
    %845 = vmatpush1.bf16.msra.mxu0 0
    %846 = vmatprep.subr.bf16.mxu0 0
    %847 = vmatpush1.bf16.msra.mxu0 0
    %848 = vmatprep.subr.bf16.mxu0 0
    %849 = vmatpush1.bf16.msra.mxu0 0
    %850 = vmatprep.subr.bf16.mxu0 0
    %851 = vmatpush1.bf16.msra.mxu0 0
    %852 = vmatprep.subr.bf16.mxu0 0
    %853 = vmatpush1.bf16.msra.mxu0 0
    %854 = vmatprep.subr.bf16.mxu0 0
    %855 = vmatpush1.bf16.msra.mxu0 0
    %856 = vmatprep.subr.bf16.mxu0 0
    %857 = vmatpush1.bf16.msra.mxu0 0
    %858 = vmatprep.subr.bf16.mxu0 0
    %859 = vmatpush1.bf16.msra.mxu0 0
    %860 = vmatprep.subr.bf16.mxu0 0
    %861 = vmatpush1.bf16.msra.mxu0 0
    %862 = vmatprep.subr.bf16.mxu0 0
    %863 = vmatpush1.bf16.msra.mxu0 0
    %864 = vmatprep.subr.bf16.mxu0 0
    %865 = vmatpush1.bf16.msra.mxu0 0
    %866 = vmatprep.mubr.bf16.mxu0 0
    %867 = vmatmul.mubr.bf16.gmra.mrb[0].mxu0 %v829
    %v868 = vpop.f32.mrb[0].mxu0
    %v869 = vadd.f32 0.0, %v868
    %v870 = vpop.f32.mrb[0].mxu0
    %v871 = vpop.f32.mrb[0].mxu0
    %v872 = vpop.f32.mrb[0].mxu0
    %873 = vdwg.mxu0
    %876 = vrot.lane.b32.xlu0 %v821, 16
    %v877 = vpop.permute.xlu0 %876
    %878 = vrot.lane.b32.xlu0 %v869, 16
    %v879 = vpop.permute.xlu0 %878
    %v882 = vsel %vm430, %v725, %v877
    %v883 = vsel %vm430, %v773, %v879
    %v884 = vpack.c.bf16 %v883, %v882
    %v885 = vld [vmem:[%s25] sm:$0xf]
    %v886 = vld [vmem:[%s25 + $0x4] sm:$0xf]
    %v887 = vld [vmem:[%s25 + $0x8] sm:$0xf]
    %v888 = vld [vmem:[%s25 + $0xc] sm:$0xf]
    %v889 = vld [vmem:[%s27] sm:$0x1]
    %v891 = vlaneseq
    %v892 = vshrl.u32 %v891, 7
    %v893 = vsub.s32 0, %v892
    %v894 = vrot.slane %v889, %v893
    %v900 = vunpack.c.l.b16 %v885
    %v901 = vunpack.c.l.b16 %v886
    %v902 = vunpack.c.l.b16 %v887
    %v903 = vunpack.c.l.b16 %v888
    %v904 = vpack.c.b16 %v901, %v900
    %v905 = vpack.c.b16 %v903, %v902
    %v909 = vsel %vm267, %v884, 0
    %911 = vmatprep.subr.bf16.mxu0 0
    %912 = vmatpush1.bf16.msra.mxu0 %v904
    %913 = vmatprep.subr.bf16.mxu0 0
    %914 = vmatpush1.bf16.msra.mxu0 %v905
    %915 = vmatprep.subr.bf16.mxu0 0
    %916 = vmatpush1.bf16.msra.mxu0 0
    %917 = vmatprep.subr.bf16.mxu0 0
    %918 = vmatpush1.bf16.msra.mxu0 0
    %919 = vmatprep.subr.bf16.mxu0 0
    %920 = vmatpush1.bf16.msra.mxu0 0
    %921 = vmatprep.subr.bf16.mxu0 0
    %922 = vmatpush1.bf16.msra.mxu0 0
    %923 = vmatprep.subr.bf16.mxu0 0
    %924 = vmatpush1.bf16.msra.mxu0 0
    %925 = vmatprep.subr.bf16.mxu0 0
    %926 = vmatpush1.bf16.msra.mxu0 0
    %927 = vmatprep.subr.bf16.mxu0 0
    %928 = vmatpush1.bf16.msra.mxu0 0
    %929 = vmatprep.subr.bf16.mxu0 0
    %930 = vmatpush1.bf16.msra.mxu0 0
    %931 = vmatprep.subr.bf16.mxu0 0
    %932 = vmatpush1.bf16.msra.mxu0 0
    %933 = vmatprep.subr.bf16.mxu0 0
    %934 = vmatpush1.bf16.msra.mxu0 0
    %935 = vmatprep.subr.bf16.mxu0 0
    %936 = vmatpush1.bf16.msra.mxu0 0
    %937 = vmatprep.subr.bf16.mxu0 0
    %938 = vmatpush1.bf16.msra.mxu0 0
    %939 = vmatprep.subr.bf16.mxu0 0
    %940 = vmatpush1.bf16.msra.mxu0 0
    %941 = vmatprep.subr.bf16.mxu0 0
    %942 = vmatpush1.bf16.msra.mxu0 0
    %943 = vmatprep.mubr.bf16.mxu0 0
    %944 = vmatmul.mubr.bf16.gmra.mrb[0].mxu0 %v909
    %v945 = vpop.f32.mrb[0].mxu0
    %v946 = vadd.f32 %v894, %v945
    %v947 = vpop.f32.mrb[0].mxu0
    %v948 = vpop.f32.mrb[0].mxu0
    %v949 = vadd.f32 %v894, %v948
    %v950 = vpop.f32.mrb[0].mxu0
    %951 = vdwg.mxu0
    %v952 = vadd.f32 %v309, %v946
    %v953 = vadd.f32 %v310, %v949
    %v954 = vld [vmem:[%s29] sm:$0x1]
    %v955 = vld [vmem:[%s31] sm:$0x1]
    %v956 = vsel %vm267, %v952, 0.0
    %957 = vadd.xlane.f32.xlu0 %v956
    %v958 = vpop.xlane.xlu0 %957
    %v959 = vsel %vm267, %v953, 0.0
    %960 = vadd.xlane.f32.xlu0 %v959
    %v961 = vpop.xlane.xlu0 %960
    %v962 = vmul.f32 %v958, %v274
    %v963 = vmul.f32 %v961, %v274
    %v964 = vsub.f32 %v952, %v962
    %v965 = vsub.f32 %v953, %v963
    %v966 = vmul.f32 %v964, %v964
    %v967 = vmul.f32 %v965, %v965
    %v968 = vsel %vm267, %v966, 0.0
    %969 = vadd.xlane.f32.xlu0 %v968
    %v970 = vpop.xlane.xlu0 %969
    %v971 = vsel %vm267, %v967, 0.0
    %972 = vadd.xlane.f32.xlu0 %v971
    %v973 = vpop.xlane.xlu0 %972
    %v974 = vmul.f32 %v970, %v274
    %v975 = vmul.f32 %v973, %v274
    %v976 = vadd.f32 %v974, 1e-12
    %v977 = vadd.f32 %v975, 1e-12
    %v978 = vrsqrt.pop %v976
    %v979 = vrsqrt.pop %v977
    %v980 = vmul.f32 %v964, %v978
    %v981 = vmul.f32 %v965, %v979
    %v983 = vlaneseq
    %v984 = vshrl.u32 %v983, 7
    %v985 = vsub.s32 0, %v984
    %v986 = vrot.slane %v954, %v985
    %v988 = vmul.f32 %v980, %v986
    %v989 = vmul.f32 %v981, %v986
    %v991 = vlaneseq
    %v992 = vshrl.u32 %v991, 7
    %v993 = vsub.s32 0, %v992
    %v994 = vrot.slane %v955, %v993
    %v996 = vadd.f32 %v988, %v994
    %v997 = vadd.f32 %v989, %v994
    %v998 = vpack.c.bf16 %v997, %v996
    %v999 = vld [vmem:[%s33] sm:$0xf]
    %v1000 = vld [vmem:[%s33 + $0x4] sm:$0xf]
    %v1001 = vld [vmem:[%s33 + $0x8] sm:$0xf]
    %v1002 = vld [vmem:[%s33 + $0xc] sm:$0xf]
    %v1003 = vld [vmem:[%s35] sm:$0x1]
    %v1005 = vlaneseq
    %v1006 = vshrl.u32 %v1005, 7
    %v1007 = vsub.s32 0, %v1006
    %v1008 = vrot.slane %v1003, %v1007
    %v1014 = vunpack.c.l.b16 %v999
    %v1015 = vunpack.c.l.b16 %v1000
    %v1016 = vunpack.c.l.b16 %v1001
    %v1017 = vunpack.c.l.b16 %v1002
    %v1018 = vpack.c.b16 %v1015, %v1014
    %v1019 = vpack.c.b16 %v1017, %v1016
    %v1023 = vsel %vm267, %v998, 0
    %1025 = vmatprep.subr.bf16.mxu0 0
    %1026 = vmatpush1.bf16.msra.mxu0 %v1018
    %1027 = vmatprep.subr.bf16.mxu0 0
    %1028 = vmatpush1.bf16.msra.mxu0 %v1019
    %1029 = vmatprep.subr.bf16.mxu0 0
    %1030 = vmatpush1.bf16.msra.mxu0 0
    %1031 = vmatprep.subr.bf16.mxu0 0
    %1032 = vmatpush1.bf16.msra.mxu0 0
    %1033 = vmatprep.subr.bf16.mxu0 0
    %1034 = vmatpush1.bf16.msra.mxu0 0
    %1035 = vmatprep.subr.bf16.mxu0 0
    %1036 = vmatpush1.bf16.msra.mxu0 0
    %1037 = vmatprep.subr.bf16.mxu0 0
    %1038 = vmatpush1.bf16.msra.mxu0 0
    %1039 = vmatprep.subr.bf16.mxu0 0
    %1040 = vmatpush1.bf16.msra.mxu0 0
    %1041 = vmatprep.subr.bf16.mxu0 0
    %1042 = vmatpush1.bf16.msra.mxu0 0
    %1043 = vmatprep.subr.bf16.mxu0 0
    %1044 = vmatpush1.bf16.msra.mxu0 0
    %1045 = vmatprep.subr.bf16.mxu0 0
    %1046 = vmatpush1.bf16.msra.mxu0 0
    %1047 = vmatprep.subr.bf16.mxu0 0
    %1048 = vmatpush1.bf16.msra.mxu0 0
    %1049 = vmatprep.subr.bf16.mxu0 0
    %1050 = vmatpush1.bf16.msra.mxu0 0
    %1051 = vmatprep.subr.bf16.mxu0 0
    %1052 = vmatpush1.bf16.msra.mxu0 0
    %1053 = vmatprep.subr.bf16.mxu0 0
    %1054 = vmatpush1.bf16.msra.mxu0 0
    %1055 = vmatprep.subr.bf16.mxu0 0
    %1056 = vmatpush1.bf16.msra.mxu0 0
    %1057 = vmatprep.mubr.bf16.mxu0 0
    %1058 = vmatmul.mubr.bf16.gmra.mrb[0].mxu0 %v1023
    %v1059 = vpop.f32.mrb[0].mxu0
    %v1060 = vadd.f32 %v1008, %v1059
    %v1061 = vpop.f32.mrb[0].mxu0
    %v1062 = vpop.f32.mrb[0].mxu0
    %v1063 = vadd.f32 %v1008, %v1062
    %v1064 = vpop.f32.mrb[0].mxu0
    %1065 = vdwg.mxu0
    %v1066 = vmul.f32 %v1060, 0.5
    %v1067 = vmul.f32 %v1063, 0.5
    %v1068 = vmul.f32 %v1060, 0.044715
    %v1069 = vmul.f32 %v1063, 0.044715
    %v1070 = vmul.f32 %v1068, %v1060
    %v1071 = vmul.f32 %v1069, %v1063
    %v1072 = vmul.f32 %v1070, %v1060
    %v1073 = vmul.f32 %v1071, %v1063
    %v1074 = vadd.f32 %v1060, %v1072
    %v1075 = vadd.f32 %v1063, %v1073
    %v1076 = vmul.f32 %v1074, 0.7978846
    %v1077 = vmul.f32 %v1075, 0.7978846
    %v1078 = vtanh.pop %v1076
    %v1079 = vtanh.pop %v1077
    %v1080 = vadd.f32 %v1078, 1.0
    %v1081 = vadd.f32 %v1079, 1.0
    %v1082 = vmul.f32 %v1066, %v1080
    %v1083 = vmul.f32 %v1067, %v1081
    %v1084 = vpack.c.bf16 %v1083, %v1082
    %v1085 = vld [vmem:[%s37] sm:$0xf]
    %v1086 = vld [vmem:[%s37 + $0x4] sm:$0xf]
    %v1087 = vld [vmem:[%s37 + $0x8] sm:$0xf]
    %v1088 = vld [vmem:[%s37 + $0xc] sm:$0xf]
    %v1089 = vld [vmem:[%s37 + $0x10] sm:$0xf]
    %v1090 = vld [vmem:[%s37 + $0x14] sm:$0xf]
    %v1091 = vld [vmem:[%s37 + $0x18] sm:$0xf]
    %v1092 = vld [vmem:[%s37 + $0x1c] sm:$0xf]
    %v1093 = vld [vmem:[%s39] sm:$0x1]
    %v1095 = vlaneseq
    %v1096 = vshrl.u32 %v1095, 7
    %v1097 = vsub.s32 0, %v1096
    %v1098 = vrot.slane %v1093, %v1097
    %v1108 = vunpack.c.l.b16 %v1085
    %v1109 = vunpack.c.l.b16 %v1086
    %v1110 = vunpack.c.l.b16 %v1087
    %v1111 = vunpack.c.l.b16 %v1088
    %v1112 = vunpack.c.l.b16 %v1089
    %v1113 = vunpack.c.l.b16 %v1090
    %v1114 = vunpack.c.l.b16 %v1091
    %v1115 = vunpack.c.l.b16 %v1092
    %v1116 = vpack.c.b16 %v1109, %v1108
    %v1117 = vpack.c.b16 %v1111, %v1110
    %v1118 = vpack.c.b16 %v1113, %v1112
    %v1119 = vpack.c.b16 %v1115, %v1114
    %vm1124 = vcmask 523264
    %v1126 = vsel %vm1124, %v1084, 0
    %1128 = vmatprep.subr.bf16.mxu0 0
    %1129 = vmatpush1.bf16.msra.mxu0 %v1116
    %1130 = vmatprep.subr.bf16.mxu0 0
    %1131 = vmatpush1.bf16.msra.mxu0 %v1117
    %1132 = vmatprep.subr.bf16.mxu0 0
    %1133 = vmatpush1.bf16.msra.mxu0 %v1118
    %1134 = vmatprep.subr.bf16.mxu0 0
    %1135 = vmatpush1.bf16.msra.mxu0 %v1119
    %1136 = vmatprep.subr.bf16.mxu0 0
    %1137 = vmatpush1.bf16.msra.mxu0 0
    %1138 = vmatprep.subr.bf16.mxu0 0
    %1139 = vmatpush1.bf16.msra.mxu0 0
    %1140 = vmatprep.subr.bf16.mxu0 0
    %1141 = vmatpush1.bf16.msra.mxu0 0
    %1142 = vmatprep.subr.bf16.mxu0 0
    %1143 = vmatpush1.bf16.msra.mxu0 0
    %1144 = vmatprep.subr.bf16.mxu0 0
    %1145 = vmatpush1.bf16.msra.mxu0 0
    %1146 = vmatprep.subr.bf16.mxu0 0
    %1147 = vmatpush1.bf16.msra.mxu0 0
    %1148 = vmatprep.subr.bf16.mxu0 0
    %1149 = vmatpush1.bf16.msra.mxu0 0
    %1150 = vmatprep.subr.bf16.mxu0 0
    %1151 = vmatpush1.bf16.msra.mxu0 0
    %1152 = vmatprep.subr.bf16.mxu0 0
    %1153 = vmatpush1.bf16.msra.mxu0 0
    %1154 = vmatprep.subr.bf16.mxu0 0
    %1155 = vmatpush1.bf16.msra.mxu0 0
    %1156 = vmatprep.subr.bf16.mxu0 0
    %1157 = vmatpush1.bf16.msra.mxu0 0
    %1158 = vmatprep.subr.bf16.mxu0 0
    %1159 = vmatpush1.bf16.msra.mxu0 0
    %1160 = vmatprep.mubr.bf16.mxu0 0
    %1161 = vmatmul.mubr.bf16.gmra.mrb[0].mxu0 %v1126
    %v1162 = vpop.f32.mrb[0].mxu0
    %v1163 = vadd.f32 %v1098, %v1162
    %v1164 = vpop.f32.mrb[0].mxu0
    %v1165 = vpop.f32.mrb[0].mxu0
    %v1166 = vadd.f32 %v1098, %v1165
    %v1167 = vpop.f32.mrb[0].mxu0
    %1168 = vdwg.mxu0
    %v1169 = vadd.f32 %v996, %v1163
    %v1170 = vadd.f32 %v997, %v1166
    %v1171 = vld [vmem:[%s41] sm:$0x1]
    %v1172 = vld [vmem:[%s43] sm:$0x1]
    %v1173 = vsel %vm267, %v1169, 0.0
    %1174 = vadd.xlane.f32.xlu0 %v1173
    %v1175 = vpop.xlane.xlu0 %1174
    %v1176 = vsel %vm267, %v1170, 0.0
    %1177 = vadd.xlane.f32.xlu0 %v1176
    %v1178 = vpop.xlane.xlu0 %1177
    %v1179 = vmul.f32 %v1175, %v274
    %v1180 = vmul.f32 %v1178, %v274
    %v1181 = vsub.f32 %v1169, %v1179
    %v1182 = vsub.f32 %v1170, %v1180
    %v1183 = vmul.f32 %v1181, %v1181
    %v1184 = vmul.f32 %v1182, %v1182
    %v1185 = vsel %vm267, %v1183, 0.0
    %1186 = vadd.xlane.f32.xlu0 %v1185
    %v1187 = vpop.xlane.xlu0 %1186
    %v1188 = vsel %vm267, %v1184, 0.0
    %1189 = vadd.xlane.f32.xlu0 %v1188
    %v1190 = vpop.xlane.xlu0 %1189
    %v1191 = vmul.f32 %v1187, %v274
    %v1192 = vmul.f32 %v1190, %v274
    %v1193 = vadd.f32 %v1191, 1e-12
    %v1194 = vadd.f32 %v1192, 1e-12
    %v1195 = vrsqrt.pop %v1193
    %v1196 = vrsqrt.pop %v1194
    %v1197 = vmul.f32 %v1181, %v1195
    %v1198 = vmul.f32 %v1182, %v1196
    %v1200 = vlaneseq
    %v1201 = vshrl.u32 %v1200, 7
    %v1202 = vsub.s32 0, %v1201
    %v1203 = vrot.slane %v1171, %v1202
    %v1205 = vmul.f32 %v1197, %v1203
    %v1206 = vmul.f32 %v1198, %v1203
    %v1208 = vlaneseq
    %v1209 = vshrl.u32 %v1208, 7
    %v1210 = vsub.s32 0, %v1209
    %v1211 = vrot.slane %v1172, %v1210
    %v1213 = vadd.f32 %v1205, %v1211
    %v1214 = vadd.f32 %v1206, %v1211
    %v1215 = vpack.c.bf16 %v1214, %v1213
    %s1216 = scalar_lea.vmem %s21, 16
    %v1217 = vld [vmem:[%s1216] sm:$0xf]
    %v1218 = vld [vmem:[%s1216 + $0x4] sm:$0xf]
    %v1219 = vld [vmem:[%s1216 + $0x8] sm:$0xf]
    %v1220 = vld [vmem:[%s1216 + $0xc] sm:$0xf]
    %s1221 = scalar_lea.vmem %s23, 1
    %v1222 = vld [vmem:[%s1221] sm:$0x1]
    %v1224 = vlaneseq
    %v1225 = vshrl.u32 %v1224, 7
    %v1226 = vsub.s32 0, %v1225
    %v1227 = vrot.slane %v1222, %v1226
    %v1233 = vunpack.c.l.b16 %v1217
    %v1234 = vunpack.c.l.b16 %v1218
    %v1235 = vunpack.c.l.b16 %v1219
    %v1236 = vunpack.c.l.b16 %v1220
    %v1237 = vpack.c.b16 %v1234, %v1233
    %v1238 = vpack.c.b16 %v1236, %v1235
    %v1242 = vsel %vm267, %v1215, 0
    %1244 = vmatprep.subr.bf16.mxu0 0
    %1245 = vmatpush1.bf16.msra.mxu0 %v1237
    %1246 = vmatprep.subr.bf16.mxu0 0
    %1247 = vmatpush1.bf16.msra.mxu0 %v1238
    %1248 = vmatprep.subr.bf16.mxu0 0
    %1249 = vmatpush1.bf16.msra.mxu0 0
    %1250 = vmatprep.subr.bf16.mxu0 0
    %1251 = vmatpush1.bf16.msra.mxu0 0
    %1252 = vmatprep.subr.bf16.mxu0 0
    %1253 = vmatpush1.bf16.msra.mxu0 0
    %1254 = vmatprep.subr.bf16.mxu0 0
    %1255 = vmatpush1.bf16.msra.mxu0 0
    %1256 = vmatprep.subr.bf16.mxu0 0
    %1257 = vmatpush1.bf16.msra.mxu0 0
    %1258 = vmatprep.subr.bf16.mxu0 0
    %1259 = vmatpush1.bf16.msra.mxu0 0
    %1260 = vmatprep.subr.bf16.mxu0 0
    %1261 = vmatpush1.bf16.msra.mxu0 0
    %1262 = vmatprep.subr.bf16.mxu0 0
    %1263 = vmatpush1.bf16.msra.mxu0 0
    %1264 = vmatprep.subr.bf16.mxu0 0
    %1265 = vmatpush1.bf16.msra.mxu0 0
    %1266 = vmatprep.subr.bf16.mxu0 0
    %1267 = vmatpush1.bf16.msra.mxu0 0
    %1268 = vmatprep.subr.bf16.mxu0 0
    %1269 = vmatpush1.bf16.msra.mxu0 0
    %1270 = vmatprep.subr.bf16.mxu0 0
    %1271 = vmatpush1.bf16.msra.mxu0 0
    %1272 = vmatprep.subr.bf16.mxu0 0
    %1273 = vmatpush1.bf16.msra.mxu0 0
    %1274 = vmatprep.subr.bf16.mxu0 0
    %1275 = vmatpush1.bf16.msra.mxu0 0
    %1276 = vmatprep.mubr.bf16.mxu0 0
    %1277 = vmatmul.mubr.bf16.gmra.mrb[0].mxu0 %v1242
    %v1278 = vpop.f32.mrb[0].mxu0
    %v1279 = vadd.f32 %v1227, %v1278
    %v1280 = vpop.f32.mrb[0].mxu0
    %v1281 = vpop.f32.mrb[0].mxu0
    %v1282 = vadd.f32 %v1227, %v1281
    %v1283 = vpop.f32.mrb[0].mxu0
    %1284 = vdwg.mxu0
    %1287 = vrot.lane.b32.xlu0 %v1279, 112
    %v1288 = vpop.permute.xlu0 %1287
    %1289 = vrot.lane.b32.xlu0 %v1282, 112
    %v1290 = vpop.permute.xlu0 %1289
    %v1293 = vpack.c.bf16 %v1279, %v1279
    %v1294 = vpack.c.bf16 %v1282, %v1282
    %v1295 = vpack.c.bf16 %v1288, %v1288
    %v1296 = vpack.c.bf16 %v1290, %v1290
    %1298 = vrot.lane.b32.xlu0 %v1293, 96
    %v1299 = vpop.permute.xlu0 %1298
    %v1301 = vsel %vm430, %v1293, 0
    %v1304 = vsel %vm430, %v1299, 0
    %1306 = vmatprep.subr.bf16.mxu0 0
    %1307 = vmatpush1.bf16.xpose.msra.mxu0 %v1304
    %1308 = vmatprep.subr.bf16.mxu0 0
    %1309 = vmatpush1.bf16.xpose.msra.mxu0 0
    %1310 = vmatprep.subr.bf16.mxu0 0
    %1311 = vmatpush1.bf16.xpose.msra.mxu0 0
    %1312 = vmatprep.subr.bf16.mxu0 0
    %1313 = vmatpush1.bf16.xpose.msra.mxu0 0
    %1314 = vmatprep.subr.bf16.mxu0 0
    %1315 = vmatpush1.bf16.xpose.msra.mxu0 0
    %1316 = vmatprep.subr.bf16.mxu0 0
    %1317 = vmatpush1.bf16.xpose.msra.mxu0 0
    %1318 = vmatprep.subr.bf16.mxu0 0
    %1319 = vmatpush1.bf16.xpose.msra.mxu0 0
    %1320 = vmatprep.subr.bf16.mxu0 0
    %1321 = vmatpush1.bf16.xpose.msra.mxu0 0
    %1322 = vmatprep.subr.bf16.mxu0 0
    %1323 = vmatpush1.bf16.xpose.msra.mxu0 0
    %1324 = vmatprep.subr.bf16.mxu0 0
    %1325 = vmatpush1.bf16.xpose.msra.mxu0 0
    %1326 = vmatprep.subr.bf16.mxu0 0
    %1327 = vmatpush1.bf16.xpose.msra.mxu0 0
    %1328 = vmatprep.subr.bf16.mxu0 0
    %1329 = vmatpush1.bf16.xpose.msra.mxu0 0
    %1330 = vmatprep.subr.bf16.mxu0 0
    %1331 = vmatpush1.bf16.xpose.msra.mxu0 0
    %1332 = vmatprep.subr.bf16.mxu0 0
    %1333 = vmatpush1.bf16.xpose.msra.mxu0 0
    %1334 = vmatprep.subr.bf16.mxu0 0
    %1335 = vmatpush1.bf16.xpose.msra.mxu0 0
    %1336 = vmatprep.subr.bf16.mxu0 0
    %1337 = vmatpush1.bf16.xpose.msra.mxu0 0
    %1338 = vmatprep.mubr.bf16.mxu0 0
    %1339 = vmatmul.mubr.bf16.gmra.mrb[0].mxu0 %v1301
    %v1340 = vpop.f32.mrb[0].mxu0
    %v1341 = vadd.f32 0.0, %v1340
    %v1342 = vpop.f32.mrb[0].mxu0
    %v1343 = vpop.f32.mrb[0].mxu0
    %v1344 = vpop.f32.mrb[0].mxu0
    %1345 = vdwg.mxu0
    %1347 = vrot.lane.b32.xlu0 %v1294, 96
    %v1348 = vpop.permute.xlu0 %1347
    %v1350 = vsel %vm430, %v1294, 0
    %v1353 = vsel %vm430, %v1348, 0
    %1355 = vmatprep.subr.bf16.mxu0 0
    %1356 = vmatpush1.bf16.xpose.msra.mxu0 %v1353
    %1357 = vmatprep.subr.bf16.mxu0 0
    %1358 = vmatpush1.bf16.xpose.msra.mxu0 0
    %1359 = vmatprep.subr.bf16.mxu0 0
    %1360 = vmatpush1.bf16.xpose.msra.mxu0 0
    %1361 = vmatprep.subr.bf16.mxu0 0
    %1362 = vmatpush1.bf16.xpose.msra.mxu0 0
    %1363 = vmatprep.subr.bf16.mxu0 0
    %1364 = vmatpush1.bf16.xpose.msra.mxu0 0
    %1365 = vmatprep.subr.bf16.mxu0 0
    %1366 = vmatpush1.bf16.xpose.msra.mxu0 0
    %1367 = vmatprep.subr.bf16.mxu0 0
    %1368 = vmatpush1.bf16.xpose.msra.mxu0 0
    %1369 = vmatprep.subr.bf16.mxu0 0
    %1370 = vmatpush1.bf16.xpose.msra.mxu0 0
    %1371 = vmatprep.subr.bf16.mxu0 0
    %1372 = vmatpush1.bf16.xpose.msra.mxu0 0
    %1373 = vmatprep.subr.bf16.mxu0 0
    %1374 = vmatpush1.bf16.xpose.msra.mxu0 0
    %1375 = vmatprep.subr.bf16.mxu0 0
    %1376 = vmatpush1.bf16.xpose.msra.mxu0 0
    %1377 = vmatprep.subr.bf16.mxu0 0
    %1378 = vmatpush1.bf16.xpose.msra.mxu0 0
    %1379 = vmatprep.subr.bf16.mxu0 0
    %1380 = vmatpush1.bf16.xpose.msra.mxu0 0
    %1381 = vmatprep.subr.bf16.mxu0 0
    %1382 = vmatpush1.bf16.xpose.msra.mxu0 0
    %1383 = vmatprep.subr.bf16.mxu0 0
    %1384 = vmatpush1.bf16.xpose.msra.mxu0 0
    %1385 = vmatprep.subr.bf16.mxu0 0
    %1386 = vmatpush1.bf16.xpose.msra.mxu0 0
    %1387 = vmatprep.mubr.bf16.mxu0 0
    %1388 = vmatmul.mubr.bf16.gmra.mrb[0].mxu0 %v1350
    %v1389 = vpop.f32.mrb[0].mxu0
    %v1390 = vadd.f32 0.0, %v1389
    %v1391 = vpop.f32.mrb[0].mxu0
    %v1392 = vpop.f32.mrb[0].mxu0
    %v1393 = vpop.f32.mrb[0].mxu0
    %1394 = vdwg.mxu0
    %1396 = vrot.lane.b32.xlu0 %v1295, 96
    %v1397 = vpop.permute.xlu0 %1396
    %v1399 = vsel %vm430, %v1295, 0
    %v1402 = vsel %vm430, %v1397, 0
    %1404 = vmatprep.subr.bf16.mxu0 0
    %1405 = vmatpush1.bf16.xpose.msra.mxu0 %v1402
    %1406 = vmatprep.subr.bf16.mxu0 0
    %1407 = vmatpush1.bf16.xpose.msra.mxu0 0
    %1408 = vmatprep.subr.bf16.mxu0 0
    %1409 = vmatpush1.bf16.xpose.msra.mxu0 0
    %1410 = vmatprep.subr.bf16.mxu0 0
    %1411 = vmatpush1.bf16.xpose.msra.mxu0 0
    %1412 = vmatprep.subr.bf16.mxu0 0
    %1413 = vmatpush1.bf16.xpose.msra.mxu0 0
    %1414 = vmatprep.subr.bf16.mxu0 0
    %1415 = vmatpush1.bf16.xpose.msra.mxu0 0
    %1416 = vmatprep.subr.bf16.mxu0 0
    %1417 = vmatpush1.bf16.xpose.msra.mxu0 0
    %1418 = vmatprep.subr.bf16.mxu0 0
    %1419 = vmatpush1.bf16.xpose.msra.mxu0 0
    %1420 = vmatprep.subr.bf16.mxu0 0
    %1421 = vmatpush1.bf16.xpose.msra.mxu0 0
    %1422 = vmatprep.subr.bf16.mxu0 0
    %1423 = vmatpush1.bf16.xpose.msra.mxu0 0
    %1424 = vmatprep.subr.bf16.mxu0 0
    %1425 = vmatpush1.bf16.xpose.msra.mxu0 0
    %1426 = vmatprep.subr.bf16.mxu0 0
    %1427 = vmatpush1.bf16.xpose.msra.mxu0 0
    %1428 = vmatprep.subr.bf16.mxu0 0
    %1429 = vmatpush1.bf16.xpose.msra.mxu0 0
    %1430 = vmatprep.subr.bf16.mxu0 0
    %1431 = vmatpush1.bf16.xpose.msra.mxu0 0
    %1432 = vmatprep.subr.bf16.mxu0 0
    %1433 = vmatpush1.bf16.xpose.msra.mxu0 0
    %1434 = vmatprep.subr.bf16.mxu0 0
    %1435 = vmatpush1.bf16.xpose.msra.mxu0 0
    %1436 = vmatprep.mubr.bf16.mxu0 0
    %1437 = vmatmul.mubr.bf16.gmra.mrb[0].mxu0 %v1399
    %v1438 = vpop.f32.mrb[0].mxu0
    %v1439 = vadd.f32 0.0, %v1438
    %v1440 = vpop.f32.mrb[0].mxu0
    %v1441 = vpop.f32.mrb[0].mxu0
    %v1442 = vpop.f32.mrb[0].mxu0
    %1443 = vdwg.mxu0
    %1445 = vrot.lane.b32.xlu0 %v1296, 96
    %v1446 = vpop.permute.xlu0 %1445
    %v1448 = vsel %vm430, %v1296, 0
    %v1451 = vsel %vm430, %v1446, 0
    %1453 = vmatprep.subr.bf16.mxu0 0
    %1454 = vmatpush1.bf16.xpose.msra.mxu0 %v1451
    %1455 = vmatprep.subr.bf16.mxu0 0
    %1456 = vmatpush1.bf16.xpose.msra.mxu0 0
    %1457 = vmatprep.subr.bf16.mxu0 0
    %1458 = vmatpush1.bf16.xpose.msra.mxu0 0
    %1459 = vmatprep.subr.bf16.mxu0 0
    %1460 = vmatpush1.bf16.xpose.msra.mxu0 0
    %1461 = vmatprep.subr.bf16.mxu0 0
    %1462 = vmatpush1.bf16.xpose.msra.mxu0 0
    %1463 = vmatprep.subr.bf16.mxu0 0
    %1464 = vmatpush1.bf16.xpose.msra.mxu0 0
    %1465 = vmatprep.subr.bf16.mxu0 0
    %1466 = vmatpush1.bf16.xpose.msra.mxu0 0
    %1467 = vmatprep.subr.bf16.mxu0 0
    %1468 = vmatpush1.bf16.xpose.msra.mxu0 0
    %1469 = vmatprep.subr.bf16.mxu0 0
    %1470 = vmatpush1.bf16.xpose.msra.mxu0 0
    %1471 = vmatprep.subr.bf16.mxu0 0
    %1472 = vmatpush1.bf16.xpose.msra.mxu0 0
    %1473 = vmatprep.subr.bf16.mxu0 0
    %1474 = vmatpush1.bf16.xpose.msra.mxu0 0
    %1475 = vmatprep.subr.bf16.mxu0 0
    %1476 = vmatpush1.bf16.xpose.msra.mxu0 0
    %1477 = vmatprep.subr.bf16.mxu0 0
    %1478 = vmatpush1.bf16.xpose.msra.mxu0 0
    %1479 = vmatprep.subr.bf16.mxu0 0
    %1480 = vmatpush1.bf16.xpose.msra.mxu0 0
    %1481 = vmatprep.subr.bf16.mxu0 0
    %1482 = vmatpush1.bf16.xpose.msra.mxu0 0
    %1483 = vmatprep.subr.bf16.mxu0 0
    %1484 = vmatpush1.bf16.xpose.msra.mxu0 0
    %1485 = vmatprep.mubr.bf16.mxu0 0
    %1486 = vmatmul.mubr.bf16.gmra.mrb[0].mxu0 %v1448
    %v1487 = vpop.f32.mrb[0].mxu0
    %v1488 = vadd.f32 0.0, %v1487
    %v1489 = vpop.f32.mrb[0].mxu0
    %v1490 = vpop.f32.mrb[0].mxu0
    %v1491 = vpop.f32.mrb[0].mxu0
    %1492 = vdwg.mxu0
    %v1493 = vmul.f32 %v1341, 0.25
    %v1494 = vmul.f32 %v1390, 0.25
    %v1495 = vmul.f32 %v1439, 0.25
    %v1496 = vmul.f32 %v1488, 0.25
    %v1497 = vadd.f32 %v1493, %v340
    %v1498 = vadd.f32 %v1494, %v344
    %v1499 = vadd.f32 %v1495, %v340
    %v1500 = vadd.f32 %v1496, %v344
    %v1501 = vsel %vm632, %v1497, -inf
    %1502 = vmax.xlane.f32.xlu0 %v1501
    %v1503 = vpop.xlane.xlu0 %1502
    %v1504 = vsel %vm632, %v1498, -inf
    %1505 = vmax.xlane.f32.xlu0 %v1504
    %v1506 = vpop.xlane.xlu0 %1505
    %v1507 = vsel %vm632, %v1499, -inf
    %1508 = vmax.xlane.f32.xlu0 %v1507
    %v1509 = vpop.xlane.xlu0 %1508
    %v1510 = vsel %vm632, %v1500, -inf
    %1511 = vmax.xlane.f32.xlu0 %v1510
    %v1512 = vpop.xlane.xlu0 %1511
    %v1513 = vsub.f32 %v1497, %v1503
    %v1514 = vsub.f32 %v1498, %v1506
    %v1515 = vsub.f32 %v1499, %v1509
    %v1516 = vsub.f32 %v1500, %v1512
    %v1517 = vmul.f32 %v1513, 1.442695
    %v1518 = vpow.pop %v1517
    %v1519 = vmul.f32 %v1514, 1.442695
    %v1520 = vpow.pop %v1519
    %v1521 = vmul.f32 %v1515, 1.442695
    %v1522 = vpow.pop %v1521
    %v1523 = vmul.f32 %v1516, 1.442695
    %v1524 = vpow.pop %v1523
    %v1525 = vsel %vm632, %v1518, 0.0
    %1526 = vadd.xlane.f32.xlu0 %v1525
    %v1527 = vpop.xlane.xlu0 %1526
    %v1528 = vsel %vm632, %v1520, 0.0
    %1529 = vadd.xlane.f32.xlu0 %v1528
    %v1530 = vpop.xlane.xlu0 %1529
    %v1531 = vsel %vm632, %v1522, 0.0
    %1532 = vadd.xlane.f32.xlu0 %v1531
    %v1533 = vpop.xlane.xlu0 %1532
    %v1534 = vsel %vm632, %v1524, 0.0
    %1535 = vadd.xlane.f32.xlu0 %v1534
    %v1536 = vpop.xlane.xlu0 %1535
    %v1537 = vrcp.pop %v1527
    %v1538 = vrcp.pop %v1530
    %v1539 = vrcp.pop %v1533
    %v1540 = vrcp.pop %v1536
    %v1541 = vmul.f32 %v1518, %v1537
    %v1542 = vmul.f32 %v1520, %v1538
    %v1543 = vmul.f32 %v1522, %v1539
    %v1544 = vmul.f32 %v1524, %v1540
    %v1545 = vpack.c.bf16 %v1541, %v1541
    %v1546 = vpack.c.bf16 %v1542, %v1542
    %v1547 = vpack.c.bf16 %v1543, %v1543
    %v1548 = vpack.c.bf16 %v1544, %v1544
    %1549 = vrot.lane.b32.xlu0 %v1293, 64
    %v1550 = vpop.permute.xlu0 %1549
    %v1552 = vsel %vm632, %v1545, 0
    %v1555 = vsel %vm686, %v1550, 0
    %1557 = vmatprep.subr.bf16.mxu0 0
    %1558 = vmatpush1.bf16.msra.mxu0 %v1555
    %1559 = vmatprep.subr.bf16.mxu0 0
    %1560 = vmatpush1.bf16.msra.mxu0 0
    %1561 = vmatprep.subr.bf16.mxu0 0
    %1562 = vmatpush1.bf16.msra.mxu0 0
    %1563 = vmatprep.subr.bf16.mxu0 0
    %1564 = vmatpush1.bf16.msra.mxu0 0
    %1565 = vmatprep.subr.bf16.mxu0 0
    %1566 = vmatpush1.bf16.msra.mxu0 0
    %1567 = vmatprep.subr.bf16.mxu0 0
    %1568 = vmatpush1.bf16.msra.mxu0 0
    %1569 = vmatprep.subr.bf16.mxu0 0
    %1570 = vmatpush1.bf16.msra.mxu0 0
    %1571 = vmatprep.subr.bf16.mxu0 0
    %1572 = vmatpush1.bf16.msra.mxu0 0
    %1573 = vmatprep.subr.bf16.mxu0 0
    %1574 = vmatpush1.bf16.msra.mxu0 0
    %1575 = vmatprep.subr.bf16.mxu0 0
    %1576 = vmatpush1.bf16.msra.mxu0 0
    %1577 = vmatprep.subr.bf16.mxu0 0
    %1578 = vmatpush1.bf16.msra.mxu0 0
    %1579 = vmatprep.subr.bf16.mxu0 0
    %1580 = vmatpush1.bf16.msra.mxu0 0
    %1581 = vmatprep.subr.bf16.mxu0 0
    %1582 = vmatpush1.bf16.msra.mxu0 0
    %1583 = vmatprep.subr.bf16.mxu0 0
    %1584 = vmatpush1.bf16.msra.mxu0 0
    %1585 = vmatprep.subr.bf16.mxu0 0
    %1586 = vmatpush1.bf16.msra.mxu0 0
    %1587 = vmatprep.subr.bf16.mxu0 0
    %1588 = vmatpush1.bf16.msra.mxu0 0
    %1589 = vmatprep.mubr.bf16.mxu0 0
    %1590 = vmatmul.mubr.bf16.gmra.mrb[0].mxu0 %v1552
    %v1591 = vpop.f32.mrb[0].mxu0
    %v1592 = vadd.f32 0.0, %v1591
    %v1593 = vpop.f32.mrb[0].mxu0
    %v1594 = vpop.f32.mrb[0].mxu0
    %v1595 = vpop.f32.mrb[0].mxu0
    %1596 = vdwg.mxu0
    %1597 = vrot.lane.b32.xlu0 %v1294, 64
    %v1598 = vpop.permute.xlu0 %1597
    %v1600 = vsel %vm632, %v1546, 0
    %v1603 = vsel %vm686, %v1598, 0
    %1605 = vmatprep.subr.bf16.mxu0 0
    %1606 = vmatpush1.bf16.msra.mxu0 %v1603
    %1607 = vmatprep.subr.bf16.mxu0 0
    %1608 = vmatpush1.bf16.msra.mxu0 0
    %1609 = vmatprep.subr.bf16.mxu0 0
    %1610 = vmatpush1.bf16.msra.mxu0 0
    %1611 = vmatprep.subr.bf16.mxu0 0
    %1612 = vmatpush1.bf16.msra.mxu0 0
    %1613 = vmatprep.subr.bf16.mxu0 0
    %1614 = vmatpush1.bf16.msra.mxu0 0
    %1615 = vmatprep.subr.bf16.mxu0 0
    %1616 = vmatpush1.bf16.msra.mxu0 0
    %1617 = vmatprep.subr.bf16.mxu0 0
    %1618 = vmatpush1.bf16.msra.mxu0 0
    %1619 = vmatprep.subr.bf16.mxu0 0
    %1620 = vmatpush1.bf16.msra.mxu0 0
    %1621 = vmatprep.subr.bf16.mxu0 0
    %1622 = vmatpush1.bf16.msra.mxu0 0
    %1623 = vmatprep.subr.bf16.mxu0 0
    %1624 = vmatpush1.bf16.msra.mxu0 0
    %1625 = vmatprep.subr.bf16.mxu0 0
    %1626 = vmatpush1.bf16.msra.mxu0 0
    %1627 = vmatprep.subr.bf16.mxu0 0
    %1628 = vmatpush1.bf16.msra.mxu0 0
    %1629 = vmatprep.subr.bf16.mxu0 0
    %1630 = vmatpush1.bf16.msra.mxu0 0
    %1631 = vmatprep.subr.bf16.mxu0 0
    %1632 = vmatpush1.bf16.msra.mxu0 0
    %1633 = vmatprep.subr.bf16.mxu0 0
    %1634 = vmatpush1.bf16.msra.mxu0 0
    %1635 = vmatprep.subr.bf16.mxu0 0
    %1636 = vmatpush1.bf16.msra.mxu0 0
    %1637 = vmatprep.mubr.bf16.mxu0 0
    %1638 = vmatmul.mubr.bf16.gmra.mrb[0].mxu0 %v1600
    %v1639 = vpop.f32.mrb[0].mxu0
    %v1640 = vadd.f32 0.0, %v1639
    %v1641 = vpop.f32.mrb[0].mxu0
    %v1642 = vpop.f32.mrb[0].mxu0
    %v1643 = vpop.f32.mrb[0].mxu0
    %1644 = vdwg.mxu0
    %1645 = vrot.lane.b32.xlu0 %v1295, 64
    %v1646 = vpop.permute.xlu0 %1645
    %v1648 = vsel %vm632, %v1547, 0
    %v1651 = vsel %vm686, %v1646, 0
    %1653 = vmatprep.subr.bf16.mxu0 0
    %1654 = vmatpush1.bf16.msra.mxu0 %v1651
    %1655 = vmatprep.subr.bf16.mxu0 0
    %1656 = vmatpush1.bf16.msra.mxu0 0
    %1657 = vmatprep.subr.bf16.mxu0 0
    %1658 = vmatpush1.bf16.msra.mxu0 0
    %1659 = vmatprep.subr.bf16.mxu0 0
    %1660 = vmatpush1.bf16.msra.mxu0 0
    %1661 = vmatprep.subr.bf16.mxu0 0
    %1662 = vmatpush1.bf16.msra.mxu0 0
    %1663 = vmatprep.subr.bf16.mxu0 0
    %1664 = vmatpush1.bf16.msra.mxu0 0
    %1665 = vmatprep.subr.bf16.mxu0 0
    %1666 = vmatpush1.bf16.msra.mxu0 0
    %1667 = vmatprep.subr.bf16.mxu0 0
    %1668 = vmatpush1.bf16.msra.mxu0 0
    %1669 = vmatprep.subr.bf16.mxu0 0
    %1670 = vmatpush1.bf16.msra.mxu0 0
    %1671 = vmatprep.subr.bf16.mxu0 0
    %1672 = vmatpush1.bf16.msra.mxu0 0
    %1673 = vmatprep.subr.bf16.mxu0 0
    %1674 = vmatpush1.bf16.msra.mxu0 0
    %1675 = vmatprep.subr.bf16.mxu0 0
    %1676 = vmatpush1.bf16.msra.mxu0 0
    %1677 = vmatprep.subr.bf16.mxu0 0
    %1678 = vmatpush1.bf16.msra.mxu0 0
    %1679 = vmatprep.subr.bf16.mxu0 0
    %1680 = vmatpush1.bf16.msra.mxu0 0
    %1681 = vmatprep.subr.bf16.mxu0 0
    %1682 = vmatpush1.bf16.msra.mxu0 0
    %1683 = vmatprep.subr.bf16.mxu0 0
    %1684 = vmatpush1.bf16.msra.mxu0 0
    %1685 = vmatprep.mubr.bf16.mxu0 0
    %1686 = vmatmul.mubr.bf16.gmra.mrb[0].mxu0 %v1648
    %v1687 = vpop.f32.mrb[0].mxu0
    %v1688 = vadd.f32 0.0, %v1687
    %v1689 = vpop.f32.mrb[0].mxu0
    %v1690 = vpop.f32.mrb[0].mxu0
    %v1691 = vpop.f32.mrb[0].mxu0
    %1692 = vdwg.mxu0
    %1693 = vrot.lane.b32.xlu0 %v1296, 64
    %v1694 = vpop.permute.xlu0 %1693
    %v1696 = vsel %vm632, %v1548, 0
    %v1699 = vsel %vm686, %v1694, 0
    %1701 = vmatprep.subr.bf16.mxu0 0
    %1702 = vmatpush1.bf16.msra.mxu0 %v1699
    %1703 = vmatprep.subr.bf16.mxu0 0
    %1704 = vmatpush1.bf16.msra.mxu0 0
    %1705 = vmatprep.subr.bf16.mxu0 0
    %1706 = vmatpush1.bf16.msra.mxu0 0
    %1707 = vmatprep.subr.bf16.mxu0 0
    %1708 = vmatpush1.bf16.msra.mxu0 0
    %1709 = vmatprep.subr.bf16.mxu0 0
    %1710 = vmatpush1.bf16.msra.mxu0 0
    %1711 = vmatprep.subr.bf16.mxu0 0
    %1712 = vmatpush1.bf16.msra.mxu0 0
    %1713 = vmatprep.subr.bf16.mxu0 0
    %1714 = vmatpush1.bf16.msra.mxu0 0
    %1715 = vmatprep.subr.bf16.mxu0 0
    %1716 = vmatpush1.bf16.msra.mxu0 0
    %1717 = vmatprep.subr.bf16.mxu0 0
    %1718 = vmatpush1.bf16.msra.mxu0 0
    %1719 = vmatprep.subr.bf16.mxu0 0
    %1720 = vmatpush1.bf16.msra.mxu0 0
    %1721 = vmatprep.subr.bf16.mxu0 0
    %1722 = vmatpush1.bf16.msra.mxu0 0
    %1723 = vmatprep.subr.bf16.mxu0 0
    %1724 = vmatpush1.bf16.msra.mxu0 0
    %1725 = vmatprep.subr.bf16.mxu0 0
    %1726 = vmatpush1.bf16.msra.mxu0 0
    %1727 = vmatprep.subr.bf16.mxu0 0
    %1728 = vmatpush1.bf16.msra.mxu0 0
    %1729 = vmatprep.subr.bf16.mxu0 0
    %1730 = vmatpush1.bf16.msra.mxu0 0
    %1731 = vmatprep.subr.bf16.mxu0 0
    %1732 = vmatpush1.bf16.msra.mxu0 0
    %1733 = vmatprep.mubr.bf16.mxu0 0
    %1734 = vmatmul.mubr.bf16.gmra.mrb[0].mxu0 %v1696
    %v1735 = vpop.f32.mrb[0].mxu0
    %v1736 = vadd.f32 0.0, %v1735
    %v1737 = vpop.f32.mrb[0].mxu0
    %v1738 = vpop.f32.mrb[0].mxu0
    %v1739 = vpop.f32.mrb[0].mxu0
    %1740 = vdwg.mxu0
    %1743 = vrot.lane.b32.xlu0 %v1688, 16
    %v1744 = vpop.permute.xlu0 %1743
    %1745 = vrot.lane.b32.xlu0 %v1736, 16
    %v1746 = vpop.permute.xlu0 %1745
    %v1749 = vsel %vm430, %v1592, %v1744
    %v1750 = vsel %vm430, %v1640, %v1746
    %v1751 = vpack.c.bf16 %v1750, %v1749
    %s1752 = scalar_lea.vmem %s25, 16
    %v1753 = vld [vmem:[%s1752] sm:$0xf]
    %v1754 = vld [vmem:[%s1752 + $0x4] sm:$0xf]
    %v1755 = vld [vmem:[%s1752 + $0x8] sm:$0xf]
    %v1756 = vld [vmem:[%s1752 + $0xc] sm:$0xf]
    %s1757 = scalar_lea.vmem %s27, 1
    %v1758 = vld [vmem:[%s1757] sm:$0x1]
    %v1760 = vlaneseq
    %v1761 = vshrl.u32 %v1760, 7
    %v1762 = vsub.s32 0, %v1761
    %v1763 = vrot.slane %v1758, %v1762
    %v1769 = vunpack.c.l.b16 %v1753
    %v1770 = vunpack.c.l.b16 %v1754
    %v1771 = vunpack.c.l.b16 %v1755
    %v1772 = vunpack.c.l.b16 %v1756
    %v1773 = vpack.c.b16 %v1770, %v1769
    %v1774 = vpack.c.b16 %v1772, %v1771
    %v1778 = vsel %vm267, %v1751, 0
    %1780 = vmatprep.subr.bf16.mxu0 0
    %1781 = vmatpush1.bf16.msra.mxu0 %v1773
    %1782 = vmatprep.subr.bf16.mxu0 0
    %1783 = vmatpush1.bf16.msra.mxu0 %v1774
    %1784 = vmatprep.subr.bf16.mxu0 0
    %1785 = vmatpush1.bf16.msra.mxu0 0
    %1786 = vmatprep.subr.bf16.mxu0 0
    %1787 = vmatpush1.bf16.msra.mxu0 0
    %1788 = vmatprep.subr.bf16.mxu0 0
    %1789 = vmatpush1.bf16.msra.mxu0 0
    %1790 = vmatprep.subr.bf16.mxu0 0
    %1791 = vmatpush1.bf16.msra.mxu0 0
    %1792 = vmatprep.subr.bf16.mxu0 0
    %1793 = vmatpush1.bf16.msra.mxu0 0
    %1794 = vmatprep.subr.bf16.mxu0 0
    %1795 = vmatpush1.bf16.msra.mxu0 0
    %1796 = vmatprep.subr.bf16.mxu0 0
    %1797 = vmatpush1.bf16.msra.mxu0 0
    %1798 = vmatprep.subr.bf16.mxu0 0
    %1799 = vmatpush1.bf16.msra.mxu0 0
    %1800 = vmatprep.subr.bf16.mxu0 0
    %1801 = vmatpush1.bf16.msra.mxu0 0
    %1802 = vmatprep.subr.bf16.mxu0 0
    %1803 = vmatpush1.bf16.msra.mxu0 0
    %1804 = vmatprep.subr.bf16.mxu0 0
    %1805 = vmatpush1.bf16.msra.mxu0 0
    %1806 = vmatprep.subr.bf16.mxu0 0
    %1807 = vmatpush1.bf16.msra.mxu0 0
    %1808 = vmatprep.subr.bf16.mxu0 0
    %1809 = vmatpush1.bf16.msra.mxu0 0
    %1810 = vmatprep.subr.bf16.mxu0 0
    %1811 = vmatpush1.bf16.msra.mxu0 0
    %1812 = vmatprep.mubr.bf16.mxu0 0
    %1813 = vmatmul.mubr.bf16.gmra.mrb[0].mxu0 %v1778
    %v1814 = vpop.f32.mrb[0].mxu0
    %v1815 = vadd.f32 %v1763, %v1814
    %v1816 = vpop.f32.mrb[0].mxu0
    %v1817 = vpop.f32.mrb[0].mxu0
    %v1818 = vadd.f32 %v1763, %v1817
    %v1819 = vpop.f32.mrb[0].mxu0
    %1820 = vdwg.mxu0
    %v1821 = vadd.f32 %v1213, %v1815
    %v1822 = vadd.f32 %v1214, %v1818
    %s1823 = scalar_lea.vmem %s29, 1
    %v1824 = vld [vmem:[%s1823] sm:$0x1]
    %s1825 = scalar_lea.vmem %s31, 1
    %v1826 = vld [vmem:[%s1825] sm:$0x1]
    %v1827 = vsel %vm267, %v1821, 0.0
    %1828 = vadd.xlane.f32.xlu0 %v1827
    %v1829 = vpop.xlane.xlu0 %1828
    %v1830 = vsel %vm267, %v1822, 0.0
    %1831 = vadd.xlane.f32.xlu0 %v1830
    %v1832 = vpop.xlane.xlu0 %1831
    %v1833 = vmul.f32 %v1829, %v274
    %v1834 = vmul.f32 %v1832, %v274
    %v1835 = vsub.f32 %v1821, %v1833
    %v1836 = vsub.f32 %v1822, %v1834
    %v1837 = vmul.f32 %v1835, %v1835
    %v1838 = vmul.f32 %v1836, %v1836
    %v1839 = vsel %vm267, %v1837, 0.0
    %1840 = vadd.xlane.f32.xlu0 %v1839
    %v1841 = vpop.xlane.xlu0 %1840
    %v1842 = vsel %vm267, %v1838, 0.0
    %1843 = vadd.xlane.f32.xlu0 %v1842
    %v1844 = vpop.xlane.xlu0 %1843
    %v1845 = vmul.f32 %v1841, %v274
    %v1846 = vmul.f32 %v1844, %v274
    %v1847 = vadd.f32 %v1845, 1e-12
    %v1848 = vadd.f32 %v1846, 1e-12
    %v1849 = vrsqrt.pop %v1847
    %v1850 = vrsqrt.pop %v1848
    %v1851 = vmul.f32 %v1835, %v1849
    %v1852 = vmul.f32 %v1836, %v1850
    %v1854 = vlaneseq
    %v1855 = vshrl.u32 %v1854, 7
    %v1856 = vsub.s32 0, %v1855
    %v1857 = vrot.slane %v1824, %v1856
    %v1859 = vmul.f32 %v1851, %v1857
    %v1860 = vmul.f32 %v1852, %v1857
    %v1862 = vlaneseq
    %v1863 = vshrl.u32 %v1862, 7
    %v1864 = vsub.s32 0, %v1863
    %v1865 = vrot.slane %v1826, %v1864
    %v1867 = vadd.f32 %v1859, %v1865
    %v1868 = vadd.f32 %v1860, %v1865
    %v1869 = vpack.c.bf16 %v1868, %v1867
    %s1870 = scalar_lea.vmem %s33, 16
    %v1871 = vld [vmem:[%s1870] sm:$0xf]
    %v1872 = vld [vmem:[%s1870 + $0x4] sm:$0xf]
    %v1873 = vld [vmem:[%s1870 + $0x8] sm:$0xf]
    %v1874 = vld [vmem:[%s1870 + $0xc] sm:$0xf]
    %s1875 = scalar_lea.vmem %s35, 1
    %v1876 = vld [vmem:[%s1875] sm:$0x1]
    %v1878 = vlaneseq
    %v1879 = vshrl.u32 %v1878, 7
    %v1880 = vsub.s32 0, %v1879
    %v1881 = vrot.slane %v1876, %v1880
    %v1887 = vunpack.c.l.b16 %v1871
    %v1888 = vunpack.c.l.b16 %v1872
    %v1889 = vunpack.c.l.b16 %v1873
    %v1890 = vunpack.c.l.b16 %v1874
    %v1891 = vpack.c.b16 %v1888, %v1887
    %v1892 = vpack.c.b16 %v1890, %v1889
    %v1896 = vsel %vm267, %v1869, 0
    %1898 = vmatprep.subr.bf16.mxu0 0
    %1899 = vmatpush1.bf16.msra.mxu0 %v1891
    %1900 = vmatprep.subr.bf16.mxu0 0
    %1901 = vmatpush1.bf16.msra.mxu0 %v1892
    %1902 = vmatprep.subr.bf16.mxu0 0
    %1903 = vmatpush1.bf16.msra.mxu0 0
    %1904 = vmatprep.subr.bf16.mxu0 0
    %1905 = vmatpush1.bf16.msra.mxu0 0
    %1906 = vmatprep.subr.bf16.mxu0 0
    %1907 = vmatpush1.bf16.msra.mxu0 0
    %1908 = vmatprep.subr.bf16.mxu0 0
    %1909 = vmatpush1.bf16.msra.mxu0 0
    %1910 = vmatprep.subr.bf16.mxu0 0
    %1911 = vmatpush1.bf16.msra.mxu0 0
    %1912 = vmatprep.subr.bf16.mxu0 0
    %1913 = vmatpush1.bf16.msra.mxu0 0
    %1914 = vmatprep.subr.bf16.mxu0 0
    %1915 = vmatpush1.bf16.msra.mxu0 0
    %1916 = vmatprep.subr.bf16.mxu0 0
    %1917 = vmatpush1.bf16.msra.mxu0 0
    %1918 = vmatprep.subr.bf16.mxu0 0
    %1919 = vmatpush1.bf16.msra.mxu0 0
    %1920 = vmatprep.subr.bf16.mxu0 0
    %1921 = vmatpush1.bf16.msra.mxu0 0
    %1922 = vmatprep.subr.bf16.mxu0 0
    %1923 = vmatpush1.bf16.msra.mxu0 0
    %1924 = vmatprep.subr.bf16.mxu0 0
    %1925 = vmatpush1.bf16.msra.mxu0 0
    %1926 = vmatprep.subr.bf16.mxu0 0
    %1927 = vmatpush1.bf16.msra.mxu0 0
    %1928 = vmatprep.subr.bf16.mxu0 0
    %1929 = vmatpush1.bf16.msra.mxu0 0
    %1930 = vmatprep.mubr.bf16.mxu0 0
    %1931 = vmatmul.mubr.bf16.gmra.mrb[0].mxu0 %v1896
    %v1932 = vpop.f32.mrb[0].mxu0
    %v1933 = vadd.f32 %v1881, %v1932
    %v1934 = vpop.f32.mrb[0].mxu0
    %v1935 = vpop.f32.mrb[0].mxu0
    %v1936 = vadd.f32 %v1881, %v1935
    %v1937 = vpop.f32.mrb[0].mxu0
    %1938 = vdwg.mxu0
    %v1939 = vmul.f32 %v1933, 0.5
    %v1940 = vmul.f32 %v1936, 0.5
    %v1941 = vmul.f32 %v1933, 0.044715
    %v1942 = vmul.f32 %v1936, 0.044715
    %v1943 = vmul.f32 %v1941, %v1933
    %v1944 = vmul.f32 %v1942, %v1936
    %v1945 = vmul.f32 %v1943, %v1933
    %v1946 = vmul.f32 %v1944, %v1936
    %v1947 = vadd.f32 %v1933, %v1945
    %v1948 = vadd.f32 %v1936, %v1946
    %v1949 = vmul.f32 %v1947, 0.7978846
    %v1950 = vmul.f32 %v1948, 0.7978846
    %v1951 = vtanh.pop %v1949
    %v1952 = vtanh.pop %v1950
    %v1953 = vadd.f32 %v1951, 1.0
    %v1954 = vadd.f32 %v1952, 1.0
    %v1955 = vmul.f32 %v1939, %v1953
    %v1956 = vmul.f32 %v1940, %v1954
    %v1957 = vpack.c.bf16 %v1956, %v1955
    %s1958 = scalar_lea.vmem %s37, 32
    %v1959 = vld [vmem:[%s1958] sm:$0xf]
    %v1960 = vld [vmem:[%s1958 + $0x4] sm:$0xf]
    %v1961 = vld [vmem:[%s1958 + $0x8] sm:$0xf]
    %v1962 = vld [vmem:[%s1958 + $0xc] sm:$0xf]
    %v1963 = vld [vmem:[%s1958 + $0x10] sm:$0xf]
    %v1964 = vld [vmem:[%s1958 + $0x14] sm:$0xf]
    %v1965 = vld [vmem:[%s1958 + $0x18] sm:$0xf]
    %v1966 = vld [vmem:[%s1958 + $0x1c] sm:$0xf]
    %s1967 = scalar_lea.vmem %s39, 1
    %v1968 = vld [vmem:[%s1967] sm:$0x1]
    %v1970 = vlaneseq
    %v1971 = vshrl.u32 %v1970, 7
    %v1972 = vsub.s32 0, %v1971
    %v1973 = vrot.slane %v1968, %v1972
    %v1983 = vunpack.c.l.b16 %v1959
    %v1984 = vunpack.c.l.b16 %v1960
    %v1985 = vunpack.c.l.b16 %v1961
    %v1986 = vunpack.c.l.b16 %v1962
    %v1987 = vunpack.c.l.b16 %v1963
    %v1988 = vunpack.c.l.b16 %v1964
    %v1989 = vunpack.c.l.b16 %v1965
    %v1990 = vunpack.c.l.b16 %v1966
    %v1991 = vpack.c.b16 %v1984, %v1983
    %v1992 = vpack.c.b16 %v1986, %v1985
    %v1993 = vpack.c.b16 %v1988, %v1987
    %v1994 = vpack.c.b16 %v1990, %v1989
    %v2000 = vsel %vm1124, %v1957, 0
    %2002 = vmatprep.subr.bf16.mxu0 0
    %2003 = vmatpush1.bf16.msra.mxu0 %v1991
    %2004 = vmatprep.subr.bf16.mxu0 0
    %2005 = vmatpush1.bf16.msra.mxu0 %v1992
    %2006 = vmatprep.subr.bf16.mxu0 0
    %2007 = vmatpush1.bf16.msra.mxu0 %v1993
    %2008 = vmatprep.subr.bf16.mxu0 0
    %2009 = vmatpush1.bf16.msra.mxu0 %v1994
    %2010 = vmatprep.subr.bf16.mxu0 0
    %2011 = vmatpush1.bf16.msra.mxu0 0
    %2012 = vmatprep.subr.bf16.mxu0 0
    %2013 = vmatpush1.bf16.msra.mxu0 0
    %2014 = vmatprep.subr.bf16.mxu0 0
    %2015 = vmatpush1.bf16.msra.mxu0 0
    %2016 = vmatprep.subr.bf16.mxu0 0
    %2017 = vmatpush1.bf16.msra.mxu0 0
    %2018 = vmatprep.subr.bf16.mxu0 0
    %2019 = vmatpush1.bf16.msra.mxu0 0
    %2020 = vmatprep.subr.bf16.mxu0 0
    %2021 = vmatpush1.bf16.msra.mxu0 0
    %2022 = vmatprep.subr.bf16.mxu0 0
    %2023 = vmatpush1.bf16.msra.mxu0 0
    %2024 = vmatprep.subr.bf16.mxu0 0
    %2025 = vmatpush1.bf16.msra.mxu0 0
    %2026 = vmatprep.subr.bf16.mxu0 0
    %2027 = vmatpush1.bf16.msra.mxu0 0
    %2028 = vmatprep.subr.bf16.mxu0 0
    %2029 = vmatpush1.bf16.msra.mxu0 0
    %2030 = vmatprep.subr.bf16.mxu0 0
    %2031 = vmatpush1.bf16.msra.mxu0 0
    %2032 = vmatprep.subr.bf16.mxu0 0
    %2033 = vmatpush1.bf16.msra.mxu0 0
    %2034 = vmatprep.mubr.bf16.mxu0 0
    %2035 = vmatmul.mubr.bf16.gmra.mrb[0].mxu0 %v2000
    %v2036 = vpop.f32.mrb[0].mxu0
    %v2037 = vadd.f32 %v1973, %v2036
    %v2038 = vpop.f32.mrb[0].mxu0
    %v2039 = vpop.f32.mrb[0].mxu0
    %v2040 = vadd.f32 %v1973, %v2039
    %v2041 = vpop.f32.mrb[0].mxu0
    %2042 = vdwg.mxu0
    %v2043 = vadd.f32 %v1867, %v2037
    %v2044 = vadd.f32 %v1868, %v2040
    %s2045 = scalar_lea.vmem %s41, 1
    %v2046 = vld [vmem:[%s2045] sm:$0x1]
    %s2047 = scalar_lea.vmem %s43, 1
    %v2048 = vld [vmem:[%s2047] sm:$0x1]
    %v2049 = vsel %vm267, %v2043, 0.0
    %2050 = vadd.xlane.f32.xlu0 %v2049
    %v2051 = vpop.xlane.xlu0 %2050
    %v2052 = vsel %vm267, %v2044, 0.0
    %2053 = vadd.xlane.f32.xlu0 %v2052
    %v2054 = vpop.xlane.xlu0 %2053
    %v2055 = vmul.f32 %v2051, %v274
    %v2056 = vmul.f32 %v2054, %v274
    %v2057 = vsub.f32 %v2043, %v2055
    %v2058 = vsub.f32 %v2044, %v2056
    %v2059 = vmul.f32 %v2057, %v2057
    %v2060 = vmul.f32 %v2058, %v2058
    %v2061 = vsel %vm267, %v2059, 0.0
    %2062 = vadd.xlane.f32.xlu0 %v2061
    %v2063 = vpop.xlane.xlu0 %2062
    %v2064 = vsel %vm267, %v2060, 0.0
    %2065 = vadd.xlane.f32.xlu0 %v2064
    %v2066 = vpop.xlane.xlu0 %2065
    %v2067 = vmul.f32 %v2063, %v274
    %v2068 = vmul.f32 %v2066, %v274
    %v2069 = vadd.f32 %v2067, 1e-12
    %v2070 = vadd.f32 %v2068, 1e-12
    %v2071 = vrsqrt.pop %v2069
    %v2072 = vrsqrt.pop %v2070
    %v2073 = vmul.f32 %v2057, %v2071
    %v2074 = vmul.f32 %v2058, %v2072
    %v2076 = vlaneseq
    %v2077 = vshrl.u32 %v2076, 7
    %v2078 = vsub.s32 0, %v2077
    %v2079 = vrot.slane %v2046, %v2078
    %v2081 = vmul.f32 %v2073, %v2079
    %v2082 = vmul.f32 %v2074, %v2079
    %v2084 = vlaneseq
    %v2085 = vshrl.u32 %v2084, 7
    %v2086 = vsub.s32 0, %v2085
    %v2087 = vrot.slane %v2048, %v2086
    %v2089 = vadd.f32 %v2081, %v2087
    %v2090 = vadd.f32 %v2082, %v2087
    %v2091 = vpack.c.bf16 %v2089, %v2089
    %v2092 = vpack.c.bf16 %v2090, %v2090
    %v2093 = vld [vmem:[%s45] sm:$0xf]
    %v2094 = vld [vmem:[%s45 + $0x4] sm:$0xf]
    %v2095 = vld [vmem:[%s45 + $0x8] sm:$0xf]
    %v2096 = vld [vmem:[%s45 + $0xc] sm:$0xf]
    %v2097 = vld [vmem:[%s47] sm:$0x1]
    %v2099 = vlaneseq
    %v2100 = vshrl.u32 %v2099, 7
    %v2101 = vsub.s32 0, %v2100
    %v2102 = vrot.slane %v2097, %v2101
    %v2106 = vunpack.c.l.b16 %v2091
    %v2107 = vunpack.c.l.b16 %v2092
    %v2108 = vrot.slane %v2107, 7
    %vm2109 = vcmask 1041409
    %v2110 = vsel %vm2109, %v2108, %v2106
    %v2111 = vpack.c.b16 %v2110, %v2110
    %v2116 = vunpack.c.l.b16 %v2093
    %v2117 = vunpack.c.l.b16 %v2094
    %v2118 = vunpack.c.l.b16 %v2095
    %v2119 = vunpack.c.l.b16 %v2096
    %v2120 = vpack.c.b16 %v2117, %v2116
    %v2121 = vpack.c.b16 %v2119, %v2118
    %v2125 = vsel %vm267, %v2111, 0
    %2127 = vmatprep.subr.bf16.mxu0 0
    %2128 = vmatpush1.bf16.msra.mxu0 %v2120
    %2129 = vmatprep.subr.bf16.mxu0 0
    %2130 = vmatpush1.bf16.msra.mxu0 %v2121
    %2131 = vmatprep.subr.bf16.mxu0 0
    %2132 = vmatpush1.bf16.msra.mxu0 0
    %2133 = vmatprep.subr.bf16.mxu0 0
    %2134 = vmatpush1.bf16.msra.mxu0 0
    %2135 = vmatprep.subr.bf16.mxu0 0
    %2136 = vmatpush1.bf16.msra.mxu0 0
    %2137 = vmatprep.subr.bf16.mxu0 0
    %2138 = vmatpush1.bf16.msra.mxu0 0
    %2139 = vmatprep.subr.bf16.mxu0 0
    %2140 = vmatpush1.bf16.msra.mxu0 0
    %2141 = vmatprep.subr.bf16.mxu0 0
    %2142 = vmatpush1.bf16.msra.mxu0 0
    %2143 = vmatprep.subr.bf16.mxu0 0
    %2144 = vmatpush1.bf16.msra.mxu0 0
    %2145 = vmatprep.subr.bf16.mxu0 0
    %2146 = vmatpush1.bf16.msra.mxu0 0
    %2147 = vmatprep.subr.bf16.mxu0 0
    %2148 = vmatpush1.bf16.msra.mxu0 0
    %2149 = vmatprep.subr.bf16.mxu0 0
    %2150 = vmatpush1.bf16.msra.mxu0 0
    %2151 = vmatprep.subr.bf16.mxu0 0
    %2152 = vmatpush1.bf16.msra.mxu0 0
    %2153 = vmatprep.subr.bf16.mxu0 0
    %2154 = vmatpush1.bf16.msra.mxu0 0
    %2155 = vmatprep.subr.bf16.mxu0 0
    %2156 = vmatpush1.bf16.msra.mxu0 0
    %2157 = vmatprep.subr.bf16.mxu0 0
    %2158 = vmatpush1.bf16.msra.mxu0 0
    %2159 = vmatprep.mubr.bf16.mxu0 0
    %2160 = vmatmul.mubr.bf16.gmra.mrb[0].mxu0 %v2125
    %v2161 = vpop.f32.mrb[0].mxu0
    %v2162 = vadd.f32 %v2102, %v2161
    %v2163 = vpop.f32.mrb[0].mxu0
    %v2164 = vpop.f32.mrb[0].mxu0
    %v2165 = vpop.f32.mrb[0].mxu0
    %2166 = vdwg.mxu0
    %v2167 = vtanh.pop %v2162
    %v2168 = vpack.c.bf16 %v2167, %v2167
    %v2169 = vld [vmem:[%s49] sm:$0xf]
    %v2170 = vld [vmem:[%s49 + $0x4] sm:$0xf]
    %v2171 = vld [vmem:[%s49 + $0x8] sm:$0xf]
    %v2172 = vld [vmem:[%s49 + $0xc] sm:$0xf]
    %v2173 = vld [vmem:[%s51] sm:$0x1]
    %v2175 = vlaneseq
    %v2176 = vshrl.u32 %v2175, 7
    %v2177 = vsub.s32 0, %v2176
    %v2178 = vrot.slane %v2173, %v2177
    %v2184 = vunpack.c.l.b16 %v2169
    %v2185 = vunpack.c.l.b16 %v2170
    %v2186 = vunpack.c.l.b16 %v2171
    %v2187 = vunpack.c.l.b16 %v2172
    %v2188 = vpack.c.b16 %v2185, %v2184
    %v2189 = vpack.c.b16 %v2187, %v2186
    %v2193 = vsel %vm267, %v2168, 0
    %2195 = vmatprep.subr.bf16.mxu0 0
    %2196 = vmatpush1.bf16.msra.mxu0 %v2188
    %2197 = vmatprep.subr.bf16.mxu0 0
    %2198 = vmatpush1.bf16.msra.mxu0 %v2189
    %2199 = vmatprep.subr.bf16.mxu0 0
    %2200 = vmatpush1.bf16.msra.mxu0 0
    %2201 = vmatprep.subr.bf16.mxu0 0
    %2202 = vmatpush1.bf16.msra.mxu0 0
    %2203 = vmatprep.subr.bf16.mxu0 0
    %2204 = vmatpush1.bf16.msra.mxu0 0
    %2205 = vmatprep.subr.bf16.mxu0 0
    %2206 = vmatpush1.bf16.msra.mxu0 0
    %2207 = vmatprep.subr.bf16.mxu0 0
    %2208 = vmatpush1.bf16.msra.mxu0 0
    %2209 = vmatprep.subr.bf16.mxu0 0
    %2210 = vmatpush1.bf16.msra.mxu0 0
    %2211 = vmatprep.subr.bf16.mxu0 0
    %2212 = vmatpush1.bf16.msra.mxu0 0
    %2213 = vmatprep.subr.bf16.mxu0 0
    %2214 = vmatpush1.bf16.msra.mxu0 0
    %2215 = vmatprep.subr.bf16.mxu0 0
    %2216 = vmatpush1.bf16.msra.mxu0 0
    %2217 = vmatprep.subr.bf16.mxu0 0
    %2218 = vmatpush1.bf16.msra.mxu0 0
    %2219 = vmatprep.subr.bf16.mxu0 0
    %2220 = vmatpush1.bf16.msra.mxu0 0
    %2221 = vmatprep.subr.bf16.mxu0 0
    %2222 = vmatpush1.bf16.msra.mxu0 0
    %2223 = vmatprep.subr.bf16.mxu0 0
    %2224 = vmatpush1.bf16.msra.mxu0 0
    %2225 = vmatprep.subr.bf16.mxu0 0
    %2226 = vmatpush1.bf16.msra.mxu0 0
    %2227 = vmatprep.mubr.bf16.mxu0 0
    %2228 = vmatmul.mubr.bf16.gmra.mrb[0].mxu0 %v2193
    %v2229 = vpop.f32.mrb[0].mxu0
    %v2230 = vadd.f32 %v2178, %v2229
    %v2231 = vpop.f32.mrb[0].mxu0
    %v2232 = vpop.f32.mrb[0].mxu0
    %v2233 = vpop.f32.mrb[0].mxu0
    %2234 = vdwg.mxu0
    %v2235 = vpack.c.bf16 %v2090, %v2089
    %v2236 = vld [vmem:[%s53] sm:$0xf]
    %v2237 = vld [vmem:[%s53 + $0x4] sm:$0xf]
    %v2238 = vld [vmem:[%s53 + $0x8] sm:$0xf]
    %v2239 = vld [vmem:[%s53 + $0xc] sm:$0xf]
    %v2240 = vld [vmem:[%s55] sm:$0x1]
    %v2242 = vlaneseq
    %v2243 = vshrl.u32 %v2242, 7
    %v2244 = vsub.s32 0, %v2243
    %v2245 = vrot.slane %v2240, %v2244
    %v2251 = vunpack.c.l.b16 %v2236
    %v2252 = vunpack.c.l.b16 %v2237
    %v2253 = vunpack.c.l.b16 %v2238
    %v2254 = vunpack.c.l.b16 %v2239
    %v2255 = vpack.c.b16 %v2252, %v2251
    %v2256 = vpack.c.b16 %v2254, %v2253
    %v2260 = vsel %vm267, %v2235, 0
    %2262 = vmatprep.subr.bf16.mxu0 0
    %2263 = vmatpush1.bf16.msra.mxu0 %v2255
    %2264 = vmatprep.subr.bf16.mxu0 0
    %2265 = vmatpush1.bf16.msra.mxu0 %v2256
    %2266 = vmatprep.subr.bf16.mxu0 0
    %2267 = vmatpush1.bf16.msra.mxu0 0
    %2268 = vmatprep.subr.bf16.mxu0 0
    %2269 = vmatpush1.bf16.msra.mxu0 0
    %2270 = vmatprep.subr.bf16.mxu0 0
    %2271 = vmatpush1.bf16.msra.mxu0 0
    %2272 = vmatprep.subr.bf16.mxu0 0
    %2273 = vmatpush1.bf16.msra.mxu0 0
    %2274 = vmatprep.subr.bf16.mxu0 0
    %2275 = vmatpush1.bf16.msra.mxu0 0
    %2276 = vmatprep.subr.bf16.mxu0 0
    %2277 = vmatpush1.bf16.msra.mxu0 0
    %2278 = vmatprep.subr.bf16.mxu0 0
    %2279 = vmatpush1.bf16.msra.mxu0 0
    %2280 = vmatprep.subr.bf16.mxu0 0
    %2281 = vmatpush1.bf16.msra.mxu0 0
    %2282 = vmatprep.subr.bf16.mxu0 0
    %2283 = vmatpush1.bf16.msra.mxu0 0
    %2284 = vmatprep.subr.bf16.mxu0 0
    %2285 = vmatpush1.bf16.msra.mxu0 0
    %2286 = vmatprep.subr.bf16.mxu0 0
    %2287 = vmatpush1.bf16.msra.mxu0 0
    %2288 = vmatprep.subr.bf16.mxu0 0
    %2289 = vmatpush1.bf16.msra.mxu0 0
    %2290 = vmatprep.subr.bf16.mxu0 0
    %2291 = vmatpush1.bf16.msra.mxu0 0
    %2292 = vmatprep.subr.bf16.mxu0 0
    %2293 = vmatpush1.bf16.msra.mxu0 0
    %2294 = vmatprep.mubr.bf16.mxu0 0
    %2295 = vmatmul.mubr.bf16.gmra.mrb[0].mxu0 %v2260
    %v2296 = vpop.f32.mrb[0].mxu0
    %v2297 = vadd.f32 %v2245, %v2296
    %v2298 = vpop.f32.mrb[0].mxu0
    %v2299 = vpop.f32.mrb[0].mxu0
    %v2300 = vadd.f32 %v2245, %v2299
    %v2301 = vpop.f32.mrb[0].mxu0
    %2302 = vdwg.mxu0
    %vm2303 = vcmask 1041408
    %v2304 = vsel %vm2303, %v2230, 0.0
    %2305 = vst [vmem:[%s57] sm:$0xff] %v2304
    %2306 = vst [vmem:[%s59] sm:$0xff] %v2297
    %2307 = vst [vmem:[%s59 + $0x8] sm:$0xff] %v2300
    %vm2308 = vcmp.lt.s32.totalorder %v133, 5
    %v2309 = vsel %vm2308, %v2230, -1e+09
    %v2310 = vsel %vm2303, %v2309, -inf
    %2311 = vmax.xlane.f32.xlu0 %v2310
    %v2312 = vpop.xlane.xlu0 %2311
    %v2313 = vsub.f32 %v2309, %v2312
    %v2314 = vmul.f32 %v2313, 1.442695
    %v2315 = vpow.pop %v2314
    %v2316 = vsel %vm2303, %v2315, 0.0
    %2317 = vadd.xlane.f32.xlu0 %v2316
    %v2318 = vpop.xlane.xlu0 %2317
    %v2319 = vlog2.pop %v2318
    %v2320 = vmul.f32 %v2319, 0.6931472
    %v2321 = vadd.f32 %v2320, %v2312
    %v2322 = vld [vmem:[%s9] sm:$0x3]
    %2323 = vset.pattern.permute.xlu0 0
    %2324 = vperm.xlu0 %2323, %v2322
    %v2325 = vpop.permute.xlu0 %2324
    %vm2326 = vcmp.eq.s32.totalorder %v133, %v2325
    %v2327 = vsel %vm2326, %v2230, 0.0
    %v2328 = vsel %vm2303, %v2327, 0.0
    %2329 = vadd.xlane.f32.xlu0 %v2328
    %v2330 = vpop.xlane.xlu0 %2329
    %v2331 = vsub.f32 %v2321, %v2330
    %vm2332 = vcmask 1024
    %v2333 = vsel %vm2332, %v2331, 0.0
    %2334 = vadd.xlane.f32.xlu0 %v2333
    %v2335 = vpop.xlane.xlu0 %2334
    %v2336 = vrot.slane %v2335, 4
    %v2337 = vadd.f32 %v2335, %v2336
    %v2338 = vrot.slane %v2337, 2
    %v2339 = vadd.f32 %v2337, %v2338
    %v2340 = vrot.slane %v2339, 1
    %v2341 = vadd.f32 %v2339, %v2340
    %s2342 = vtos %v2341
    %s2343 = smul.f32 %s2342, 0.5
    %s2344 = scalar_lea.smem [#allocation2], 0
    %2345 = sst [smem:[%s2344]] %s2343
    %vm2346 = vcmp.lt.s32.totalorder %v133, 7
    %v2347 = vsel %vm2346, %v2297, -1e+09
    %v2348 = vsel %vm2346, %v2300, -1e+09
    %2349 = vmax.xlane.f32.xlu0 %v2347
    %v2350 = vpop.xlane.xlu0 %2349
    %2351 = vmax.xlane.f32.xlu0 %v2348
    %v2352 = vpop.xlane.xlu0 %2351
    %v2353 = vsub.f32 %v2347, %v2350
    %v2354 = vsub.f32 %v2348, %v2352
    %v2355 = vmul.f32 %v2353, 1.442695
    %v2356 = vpow.pop %v2355
    %v2357 = vmul.f32 %v2354, 1.442695
    %v2358 = vpow.pop %v2357
    %2359 = vadd.xlane.f32.xlu0 %v2356
    %v2360 = vpop.xlane.xlu0 %2359
    %2361 = vadd.xlane.f32.xlu0 %v2358
    %v2362 = vpop.xlane.xlu0 %2361
    %v2363 = vlog2.pop %v2360
    %v2364 = vmul.f32 %v2363, 0.6931472
    %v2365 = vlog2.pop %v2362
    %v2366 = vmul.f32 %v2365, 0.6931472
    %v2367 = vadd.f32 %v2364, %v2350
    %v2368 = vadd.f32 %v2366, %v2352
    %v2369 = vld [vmem:[%s11] sm:$0xff]
    %v2370 = vld [vmem:[%s11 + $0x8] sm:$0xff]
    %2371 = vset.pattern.permute.xlu0 0
    %2372 = vperm.xlu0 %2371, %v2369
    %v2373 = vpop.permute.xlu0 %2372
    %2374 = vset.pattern.permute.xlu0 0
    %2375 = vperm.xlu0 %2374, %v2370
    %v2376 = vpop.permute.xlu0 %2375
    %vm2377 = vcmp.eq.s32.totalorder %v133, %v2373
    %vm2378 = vcmp.eq.s32.totalorder %v133, %v2376
    %v2379 = vsel %vm2377, %v2297, 0.0
    %v2380 = vsel %vm2378, %v2300, 0.0
    %2381 = vadd.xlane.f32.xlu0 %v2379
    %v2382 = vpop.xlane.xlu0 %2381
    %2383 = vadd.xlane.f32.xlu0 %v2380
    %v2384 = vpop.xlane.xlu0 %2383
    %v2385 = vld [vmem:[%s7] sm:$0xff]
    %v2386 = vld [vmem:[%s7 + $0x8] sm:$0xff]
    %v2387 = vsub.f32 %v2367, %v2382
    %v2388 = vsub.f32 %v2368, %v2384
    %v2389 = vmul.f32 %v2387, %v2385
    %v2390 = vmul.f32 %v2388, %v2386
    %vm2391 = vcmask 7168
    %v2392 = vsel %vm2391, %v2389, 0.0
    %v2393 = vsel %vm2391, %v2390, 0.0
    %v2394 = vadd.f32 %v2392, %v2393
    %2395 = vadd.xlane.f32.xlu0 %v2394
    %v2396 = vpop.xlane.xlu0 %2395
    %v2397 = vrot.slane %v2396, 4
    %v2398 = vadd.f32 %v2396, %v2397
    %v2399 = vrot.slane %v2398, 2
    %v2400 = vadd.f32 %v2398, %v2399
    %v2401 = vrot.slane %v2400, 1
    %v2402 = vadd.f32 %v2400, %v2401
    %s2403 = vtos %v2402
    %v2404 = vsel %vm2391, %v2385, 0.0
    %v2405 = vsel %vm2391, %v2386, 0.0
    %v2406 = vadd.f32 %v2404, %v2405
    %2407 = vadd.xlane.f32.xlu0 %v2406
    %v2408 = vpop.xlane.xlu0 %2407
    %v2409 = vrot.slane %v2408, 4
    %v2410 = vadd.f32 %v2408, %v2409
    %v2411 = vrot.slane %v2410, 2
    %v2412 = vadd.f32 %v2410, %v2411
    %v2413 = vrot.slane %v2412, 1
    %v2414 = vadd.f32 %v2412, %v2413
    %s2415 = vtos %v2414
    %v2416 = vstv %s2415
    %v2417 = vrcp.pop %v2416
    %s2418 = vtos %v2417
    %s2419 = smul.f32 %s2403, %s2418
    %s2420 = scalar_lea.smem [#allocation4], 0
    %2421 = sst [smem:[%s2420]] %s2419
    // Predicated region
    $region114: #{parser_model_forward.1} parent=1 // pred_check
      _
    $region115: #{parser_model_forward.1} parent=1 // pred_check_branch
      %2423 = sbr.rel (0) target = $region117
    $region116: #{parser_model_forward.1} parent=1 // pred_region
      _
    $region117: #{parser_model_forward.1} parent=1 // pred_fallthru
      _
    // Predicated region
    $region118: #{parser_model_forward.1} parent=1 // pred_check
      _
    $region119: #{parser_model_forward.1} parent=1 // pred_check_branch
      %2425 = sbr.rel (0) target = $region121
    $region120: #{parser_model_forward.1} parent=1 // pred_region
      _
    $region121: #{parser_model_forward.1} parent=1 // pred_fallthru
      _
    // Predicated region
    $region122: #{parser_model_forward.1} parent=1 // pred_check
      _
    $region123: #{parser_model_forward.1} parent=1 // pred_check_branch
      %2427 = sbr.rel (0) target = $region125
    $region124: #{parser_model_forward.1} parent=1 // pred_region
      %s2429 = ssub.s32 16, 16
      %2430 = vsyncadd [#allocation3], %s2429
      %2433 = dma.smem_to_hbm [#allocation2], 16, %s61, [#allocation3]
    $region125: #{parser_model_forward.1} parent=1 // pred_fallthru
      _
    // Predicated region
    $region126: #{parser_model_forward.1} parent=1 // pred_check
      _
    $region127: #{parser_model_forward.1} parent=1 // pred_check_branch
      %2435 = sbr.rel (0) target = $region129
    $region128: #{parser_model_forward.1} parent=1 // pred_region
      %s2437 = ssub.s32 16, 16
      %2438 = vsyncadd [#allocation5], %s2437
      %2441 = dma.smem_to_hbm [#allocation4], 16, %s63, [#allocation5]
    $region129: #{parser_model_forward.1} parent=1 // pred_fallthru
      _
    // Predicated region
    $region130: #{parser_model_forward.1} parent=1 // pred_check
      _
    $region131: #{parser_model_forward.1} parent=1 // pred_check_branch
      %2443 = sbr.rel (0) target = $region133
    $region132: #{parser_model_forward.1} parent=1 // pred_region
      _
    $region133: #{parser_model_forward.1} parent=1 // pred_fallthru
      _
    // Predicated region
    $region134: #{parser_model_forward.1} parent=1 // pred_check
      _
    $region135: #{parser_model_forward.1} parent=1 // pred_check_branch
      %2445 = sbr.rel (0) target = $region137
    $region136: #{parser_model_forward.1} parent=1 // pred_region
      _
    $region137: #{parser_model_forward.1} parent=1 // pred_fallthru
      _
    // Predicated region
    $region138: #{parser_model_forward.1} parent=1 // pred_check
      _
    $region139: #{parser_model_forward.1} parent=1 // pred_check_branch
      %2447 = sbr.rel (0) target = $region141
    $region140: #{parser_model_forward.1} parent=1 // pred_region
      %2448 = dma.done [#allocation3], 16
    $region141: #{parser_model_forward.1} parent=1 // pred_fallthru
      _
    // Predicated region
    $region142: #{parser_model_forward.1} parent=1 // pred_check
      _
    $region143: #{parser_model_forward.1} parent=1 // pred_check_branch
      %2450 = sbr.rel (0) target = $region145
    $region144: #{parser_model_forward.1} parent=1 // pred_region
      %2451 = dma.done [#allocation5], 16
    $region145: #{parser_model_forward.1} parent=1 // pred_fallthru
      _
    %2452 = sfence
    %2453 = vsyncpa [#allocation3], 1
    %2454 = vsyncpa [#allocation5], 1

</llo_original>
